<compile_context>
chip_gen: v7x
topology: tpu7x:2x2x1
jax: 0.10.0
libtpu: 0.0.40
codegen_flags: <defaults>
</compile_context>

<pallas_src>
import math

import jax
import jax.numpy as jnp
from jax import lax
from jax.experimental import pallas as pl
from jax.experimental.pallas import tpu as pltpu

# ----------------------------- small synthetic config -----------------------
B, S, D, H, L = 2, 8, 128, 4, 2   # batch, seq, width, heads, layers
DP = 128                          # text_projection output dim
HD = D // H                       # head dim
FF = 4 * D                        # MLP hidden
LN_EPS = 1e-5
NEG_INF = -1e30                   # finite sentinel (keeps exp/softmax NaN-free)
assert D % H == 0

# Batch rows handled per grid block.  At serving batch sizes pick BB so each
# v7x TensorCore gets half the rows while BB*S >= 128 keeps the MXU M-filled;
# at this toy size one block covers the whole batch.
BB = B
NB = B // BB


# ----------------------------- in-kernel helpers ----------------------------
def _layernorm(v, w, b):
    mu = jnp.mean(v, axis=-1, keepdims=True)
    var = jnp.mean(jnp.square(v - mu), axis=-1, keepdims=True)
    return (v - mu) * lax.rsqrt(var + LN_EPS) * w + b


def _linear(v, w_bf16, b_f32):
    # v: (BB, S, Din) f32, w: (Din, Dout) bf16, b: (1, Dout) f32
    bb, ss, din = v.shape
    out = jnp.dot(v.reshape(bb * ss, din).astype(jnp.bfloat16), w_bf16,
                  preferred_element_type=jnp.float32) + b_f32
    return out.reshape(bb, ss, -1)


# ----------------------------- fused kernel ---------------------------------
def text_encoder_kernel(x0_hbm,                                   # HBM (B,S,D)
                        oh_ref, mask_ref,
                        ln1w_ref, ln1b_ref, wqkv_ref, bqkv_ref, wo_ref, bo_ref,
                        ln2w_ref, ln2b_ref, wfc_ref, bfc_ref, wpr_ref, bpr_ref,
                        lnfw_ref, lnfb_ref, proj_ref,
                        out_ref,                                  # (BB, DP)
                        x_scr, copy_sem):                         # VMEM carry
    i = pl.program_id(0)          # batch-row block ("parallel")
    layer = pl.program_id(1)      # transformer layer ("arbitrary" carry)

    @pl.when(layer == 0)
    def _():
        # Seed the residual carry straight from HBM once per batch block
        # (no double-buffered l-invariant input slot kept alive all kernel).
        start = pl.multiple_of(i * BB, BB)
        cp = pltpu.make_async_copy(x0_hbm.at[pl.ds(start, BB)], x_scr, copy_sem)
        cp.start()
        cp.wait()

    x = x_scr[...]                                            # (BB, S, D) f32

    # ---- x = x + out_proj(MHA(ln_1(x))), causal mask ----
    x1 = _layernorm(x, ln1w_ref[0], ln1b_ref[0])
    qkv = _linear(x1, wqkv_ref[0], bqkv_ref[0])               # (BB, S, 3D) f32
    # 1/sqrt(HD) was folded into the q columns of wqkv/bqkv offline.
    q = qkv[:, :, :D]                                         # 128-lane slices
    k = qkv[:, :, D:2 * D].astype(jnp.bfloat16)
    v = qkv[:, :, 2 * D:].astype(jnp.bfloat16)

    mask = mask_ref[...][None]                                # (1, S, S) f32
    lane = lax.broadcasted_iota(jnp.int32, (1, 1, D), 2)

    # Per-head attention with lane-masked, full-width (lane-dense) matmuls:
    # head h owns lanes [h*HD, (h+1)*HD).  Zeroing the other q lanes makes the
    # full-D contraction equal the per-head score; the context matmul runs at
    # full width and only head-h lanes are accumulated.  No head slice/concat
    # relayouts anywhere.
    attn = jnp.zeros((BB, S, D), jnp.float32)
    for h in range(H):                                        # static unroll
        hm = ((lane >= h * HD) & (lane < (h + 1) * HD)).astype(jnp.float32)
        qh = (q * hm).astype(jnp.bfloat16)
        s = jnp.einsum('bqd,bkd->bqk', qh, k,
                       preferred_element_type=jnp.float32) + mask
        s = s - jnp.max(s, axis=-1, keepdims=True)
        p = jnp.exp(s)
        p = p * pl.reciprocal(jnp.sum(p, axis=-1, keepdims=True), approx=True)
        ctx = jnp.einsum('bqk,bkd->bqd', p.astype(jnp.bfloat16), v,
                         preferred_element_type=jnp.float32)  # (BB, S, D)
        attn = attn + ctx * hm

    x = x + _linear(attn, wo_ref[0], bo_ref[0])

    # ---- x = x + c_proj(QuickGELU(c_fc(ln_2(x)))) ----
    x2 = _layernorm(x, ln2w_ref[0], ln2b_ref[0])
    hmid = _linear(x2, wfc_ref[0], bfc_ref[0])                # (BB, S, 4D) f32
    hmid = hmid * jax.nn.sigmoid(1.702 * hmid)                # QuickGELU (f32)
    x = x + _linear(hmid, wpr_ref[0], bpr_ref[0])

    x_scr[...] = x

    # ---- fused head on the last layer: EOT gather + ln_final + projection --
    @pl.when(layer == pl.num_programs(1) - 1)
    def _():
        eot_tok = jnp.sum(oh_ref[...] * x, axis=1)            # (BB, D) gather
        eot_tok = _layernorm(eot_tok, lnfw_ref[...], lnfb_ref[...])
        out_ref[...] = jnp.dot(eot_tok.astype(jnp.bfloat16), proj_ref[...],
                               preferred_element_type=jnp.float32)


# ----------------------------- one-time weight preparation ------------------
def prepare_params(params):
    """Offline: fold 1/sqrt(HD) into the q in-projection columns and cast the
    matmul weights to bf16 (MXU-native, halves weight DMA).  Done ONCE, not
    per forward call."""
    qscale = 1.0 / math.sqrt(HD)
    prep = dict(params)
    prep['wqkv'] = params['wqkv'].at[:, :, :D].multiply(qscale).astype(jnp.bfloat16)
    prep['bqkv'] = params['bqkv'].at[:, :, :D].multiply(qscale)
    prep['wo'] = params['wo'].astype(jnp.bfloat16)
    prep['wfc'] = params['wfc'].astype(jnp.bfloat16)
    prep['wproj'] = params['wproj'].astype(jnp.bfloat16)
    prep['proj'] = params['proj'].astype(jnp.bfloat16)
    return prep


# ----------------------------- wrapper ---------------------------------------
@jax.jit
def text_encoder_pallas(prompts, tokenized_prompts, prep):
    # Glue (indexing / trivial elementwise) stays in XLA.
    x0 = prompts + prep['pos'][None]
    eot = jnp.argmax(tokenized_prompts, axis=-1)
    onehot = jax.nn.one_hot(eot, S, dtype=jnp.float32)[..., None]   # (B, S, 1)
    causal = jnp.where(jnp.tril(jnp.ones((S, S), dtype=bool)),
                       0.0, NEG_INF).astype(jnp.float32)

    grid_spec = pltpu.PrefetchScalarGridSpec(
        num_scalar_prefetch=0,
        grid=(NB, L),
        in_specs=[
            pl.BlockSpec(memory_space=pl.ANY),                     # x0 (HBM)
            pl.BlockSpec((BB, S, 1), lambda i, l: (i, 0, 0)),      # EOT one-hot
            pl.BlockSpec((S, S), lambda i, l: (0, 0)),             # causal mask
            pl.BlockSpec((1, 1, D), lambda i, l: (l, 0, 0)),       # ln1_w
            pl.BlockSpec((1, 1, D), lambda i, l: (l, 0, 0)),       # ln1_b
            pl.BlockSpec((1, D, 3 * D), lambda i, l: (l, 0, 0)),   # wqkv
            pl.BlockSpec((1, 1, 3 * D), lambda i, l: (l, 0, 0)),   # bqkv
            pl.BlockSpec((1, D, D), lambda i, l: (l, 0, 0)),       # wo
            pl.BlockSpec((1, 1, D), lambda i, l: (l, 0, 0)),       # bo
            pl.BlockSpec((1, 1, D), lambda i, l: (l, 0, 0)),       # ln2_w
            pl.BlockSpec((1, 1, D), lambda i, l: (l, 0, 0)),       # ln2_b
            pl.BlockSpec((1, D, FF), lambda i, l: (l, 0, 0)),      # wfc
            pl.BlockSpec((1, 1, FF), lambda i, l: (l, 0, 0)),      # bfc
            pl.BlockSpec((1, FF, D), lambda i, l: (l, 0, 0)),      # wproj
            pl.BlockSpec((1, 1, D), lambda i, l: (l, 0, 0)),       # bproj
            pl.BlockSpec((1, D), lambda i, l: (0, 0)),             # lnf_w
            pl.BlockSpec((1, D), lambda i, l: (0, 0)),             # lnf_b
            pl.BlockSpec((D, DP), lambda i, l: (0, 0)),            # text_projection
        ],
        out_specs=pl.BlockSpec((BB, DP), lambda i, l: (i, 0)),
        scratch_shapes=[pltpu.VMEM((BB, S, D), jnp.float32),
                        pltpu.SemaphoreType.DMA(())],
    )

    return pl.pallas_call(
        text_encoder_kernel,
        out_shape=jax.ShapeDtypeStruct((B, DP), jnp.float32),
        grid_spec=grid_spec,
        compiler_params=pltpu.CompilerParams(
            dimension_semantics=("parallel", "arbitrary"),
            vmem_limit_bytes=64 * 1024 * 1024),
    )(x0, onehot, causal,
      prep['ln1_w'], prep['ln1_b'], prep['wqkv'], prep['bqkv'],
      prep['wo'], prep['bo'], prep['ln2_w'], prep['ln2_b'],
      prep['wfc'], prep['bfc'], prep['wproj'], prep['bproj'],
      prep['lnf_w'], prep['lnf_b'], prep['proj'])


# ----------------------------- pure-JAX reference ----------------------------
def _ln_ref(v, w, b):
    mu = v.mean(-1, keepdims=True)
    var = ((v - mu) ** 2).mean(-1, keepdims=True)
    return (v - mu) / jnp.sqrt(var + LN_EPS) * w + b


def text_encoder_reference(prompts, tokenized_prompts, params):
    x = prompts + params['pos'][None]
    mask = jnp.where(jnp.tril(jnp.ones((S, S), dtype=bool)), 0.0, NEG_INF)
    for l in range(L):
        x1 = _ln_ref(x, params['ln1_w'][l], params['ln1_b'][l])
        qkv = x1 @ params['wqkv'][l] + params['bqkv'][l]
        q, k, v = jnp.split(qkv, 3, axis=-1)
        q = q.reshape(B, S, H, HD).transpose(0, 2, 1, 3) / math.sqrt(HD)
        k = k.reshape(B, S, H, HD).transpose(0, 2, 1, 3)
        v = v.reshape(B, S, H, HD).transpose(0, 2, 1, 3)
        s = q @ k.transpose(0, 1, 3, 2) + mask
        p = jax.nn.softmax(s, axis=-1)
        o = (p @ v).transpose(0, 2, 1, 3).reshape(B, S, D)
        x = x + o @ params['wo'][l] + params['bo'][l]

        x2 = _ln_ref(x, params['ln2_w'][l], params['ln2_b'][l])
        hmid = x2 @ params['wfc'][l] + params['bfc'][l]
        hmid = hmid * jax.nn.sigmoid(1.702 * hmid)
        x = x + hmid @ params['wproj'][l] + params['bproj'][l]

    x = _ln_ref(x, params['lnf_w'], params['lnf_b'])
    eot = jnp.argmax(tokenized_prompts, axis=-1)
    return x[jnp.arange(B), eot] @ params['proj']


# ----------------------------- deterministic params --------------------------
def init_params(key):
    ks = jax.random.split(key, 16)

    def n(k, shape, scale=0.02):
        return scale * jax.random.normal(k, shape, jnp.float32)

    return dict(
        pos=n(ks[0], (S, D), 0.01),
        ln1_w=1.0 + n(ks[1], (L, 1, D), 0.1),
        ln1_b=n(ks[2], (L, 1, D), 0.05),
        wqkv=n(ks[3], (L, D, 3 * D)),
        bqkv=n(ks[4], (L, 1, 3 * D), 0.01),
        wo=n(ks[5], (L, D, D)),
        bo=n(ks[6], (L, 1, D), 0.01),
        ln2_w=1.0 + n(ks[7], (L, 1, D), 0.1),
        ln2_b=n(ks[8], (L, 1, D), 0.05),
        wfc=n(ks[9], (L, D, FF)),
        bfc=n(ks[10], (L, 1, FF), 0.01),
        wproj=n(ks[11], (L, FF, D)),
        bproj=n(ks[12], (L, 1, D), 0.01),
        lnf_w=1.0 + n(ks[13], (1, D), 0.1),
        lnf_b=n(ks[14], (1, D), 0.05),
        proj=n(ks[15], (D, DP), D ** -0.5),
    )


if __name__ == "__main__":
    key = jax.random.PRNGKey(0)
    kp, kprompt, ktok = jax.random.split(key, 3)
    params = init_params(kp)
    prep = prepare_params(params)          # one-time weight prep (not per call)

    prompts = 0.02 * jax.random.normal(kprompt, (B, S, D), jnp.float32)
    tokenized = jax.random.randint(ktok, (B, S), 1, 400).astype(jnp.int32)
    eot_pos = jnp.array([S - 2, S - 1], dtype=jnp.int32)
    tokenized = tokenized.at[jnp.arange(B), eot_pos].set(49407)  # EOT token id

    out = text_encoder_pallas(prompts, tokenized, prep)
    jax.block_until_ready(out)

    ref = text_encoder_reference(prompts, tokenized, params)
    assert out.shape == (B, DP), out.shape
    if not bool(jnp.allclose(out, ref, atol=5e-2, rtol=5e-2)):
        raise AssertionError(
            f"mismatch: max abs diff = {float(jnp.max(jnp.abs(out - ref)))}")
    print("KERNEL_OK")
</pallas_src>

<mosaic_0001>
module attributes {stable_mosaic.version = 11 : i64} {
  func.func @text_encoder_kernel(%arg0: i32, %arg1: i32, %arg2: memref<2x8x128xf32, #tpu.memory_space<any>>, %arg3: memref<2x8x1xf32, #tpu.memory_space<vmem>>, %arg4: memref<8x8xf32, #tpu.memory_space<vmem>>, %arg5: memref<1x1x128xf32, #tpu.memory_space<vmem>>, %arg6: memref<1x1x128xf32, #tpu.memory_space<vmem>>, %arg7: memref<1x128x384xbf16, #tpu.memory_space<vmem>>, %arg8: memref<1x1x384xf32, #tpu.memory_space<vmem>>, %arg9: memref<1x128x128xbf16, #tpu.memory_space<vmem>>, %arg10: memref<1x1x128xf32, #tpu.memory_space<vmem>>, %arg11: memref<1x1x128xf32, #tpu.memory_space<vmem>>, %arg12: memref<1x1x128xf32, #tpu.memory_space<vmem>>, %arg13: memref<1x128x512xbf16, #tpu.memory_space<vmem>>, %arg14: memref<1x1x512xf32, #tpu.memory_space<vmem>>, %arg15: memref<1x512x128xbf16, #tpu.memory_space<vmem>>, %arg16: memref<1x1x128xf32, #tpu.memory_space<vmem>>, %arg17: memref<1x128xf32, #tpu.memory_space<vmem>>, %arg18: memref<1x128xf32, #tpu.memory_space<vmem>>, %arg19: memref<128x128xbf16, #tpu.memory_space<vmem>>, %arg20: memref<2x128xf32, #tpu.memory_space<vmem>>, %arg21: memref<2x8x128xf32, #tpu.memory_space<vmem>>, %arg22: memref<!tpu.dma_semaphore, #tpu.memory_space<semaphore_mem>>) attributes {dimension_semantics = [#tpu.dimension_semantics<parallel>, #tpu.dimension_semantics<arbitrary>], iteration_bounds = array<i64: 1, 2>, scalar_prefetch = 0 : i64, scratch_operands = 2 : i64, tpu.core_type = #tpu.core_type<tc>, window_params = [{}, {transform_indices = @transform_1, window_bounds = array<i64: 2, 8, 1>}, {pipeline_mode = #tpu.pipeline_mode<synchronous>, transform_indices = @transform_2, window_bounds = array<i64: 8, 8>}, {transform_indices = @transform_3, window_bounds = array<i64: 1, 1, 128>}, {transform_indices = @transform_4, window_bounds = array<i64: 1, 1, 128>}, {transform_indices = @transform_5, window_bounds = array<i64: 1, 128, 384>}, {transform_indices = @transform_6, window_bounds = array<i64: 1, 1, 384>}, {transform_indices = @transform_7, window_bounds = array<i64: 1, 128, 128>}, {transform_indices = @transform_8, window_bounds = array<i64: 1, 1, 128>}, {transform_indices = @transform_9, window_bounds = array<i64: 1, 1, 128>}, {transform_indices = @transform_10, window_bounds = array<i64: 1, 1, 128>}, {transform_indices = @transform_11, window_bounds = array<i64: 1, 128, 512>}, {transform_indices = @transform_12, window_bounds = array<i64: 1, 1, 512>}, {transform_indices = @transform_13, window_bounds = array<i64: 1, 512, 128>}, {transform_indices = @transform_14, window_bounds = array<i64: 1, 1, 128>}, {pipeline_mode = #tpu.pipeline_mode<synchronous>, transform_indices = @transform_15, window_bounds = array<i64: 1, 128>}, {pipeline_mode = #tpu.pipeline_mode<synchronous>, transform_indices = @transform_16, window_bounds = array<i64: 1, 128>}, {pipeline_mode = #tpu.pipeline_mode<synchronous>, transform_indices = @transform_17, window_bounds = array<i64: 128, 128>}, {transform_indices = @transform_18, window_bounds = array<i64: 2, 128>}]} {
    %c0_i32 = arith.constant 0 : i32
    %0 = arith.cmpi eq, %arg1, %c0_i32 : i32
    %1 = arith.extui %0 : i1 to i32
    %c0_i32_0 = arith.constant 0 : i32
    %2 = arith.cmpi ne, %1, %c0_i32_0 : i32
    scf.if %2 {
      %c2_i32 = arith.constant 2 : i32
      %235 = arith.muli %arg0, %c2_i32 : i32
      %236 = tpu.assume_multiple %235, 2 : i32
      %c0_i32_81 = arith.constant 0 : i32
      %c0_i32_82 = arith.constant 0 : i32
      %237 = tpu.memref_slice %arg2[%236, %c0_i32_81, %c0_i32_82] : memref<2x8x128xf32, #tpu.memory_space<any>> -> memref<2x8x128xf32, #tpu.memory_space<any>>
      tpu.enqueue_dma source(%237 : memref<2x8x128xf32, #tpu.memory_space<any>>) target(%arg21 : memref<2x8x128xf32, #tpu.memory_space<vmem>>) target_semaphore(%arg22 : memref<!tpu.dma_semaphore, #tpu.memory_space<semaphore_mem>>)
      %c0_i32_83 = arith.constant 0 : i32
      %c0_i32_84 = arith.constant 0 : i32
      %238 = tpu.memref_slice %arg2[%236, %c0_i32_83, %c0_i32_84] : memref<2x8x128xf32, #tpu.memory_space<any>> -> memref<2x8x128xf32, #tpu.memory_space<any>>
      tpu.wait_dma2 semaphore(%arg22 : memref<!tpu.dma_semaphore, #tpu.memory_space<semaphore_mem>>) src(%238 : memref<2x8x128xf32, #tpu.memory_space<any>>) dst(%arg21 : memref<2x8x128xf32, #tpu.memory_space<vmem>>)
    } else {
    }
    %c0 = arith.constant 0 : index
    %c0_1 = arith.constant 0 : index
    %c0_2 = arith.constant 0 : index
    %3 = vector.load %arg21[%c0, %c0_1, %c0_2] : memref<2x8x128xf32, #tpu.memory_space<vmem>>, vector<2x8x128xf32>
    %c0_3 = arith.constant 0 : index
    %c0_4 = arith.constant 0 : index
    %c0_5 = arith.constant 0 : index
    %4 = vector.load %arg5[%c0_3, %c0_4, %c0_5] : memref<1x1x128xf32, #tpu.memory_space<vmem>>, vector<1x1x128xf32>
    %5 = vector.shape_cast %4 : vector<1x1x128xf32> to vector<1x128xf32>
    %c0_6 = arith.constant 0 : index
    %c0_7 = arith.constant 0 : index
    %c0_8 = arith.constant 0 : index
    %6 = vector.load %arg6[%c0_6, %c0_7, %c0_8] : memref<1x1x128xf32, #tpu.memory_space<vmem>>, vector<1x1x128xf32>
    %7 = vector.shape_cast %6 : vector<1x1x128xf32> to vector<1x128xf32>
    %cst = arith.constant dense<0.000000e+00> : vector<2x8xf32>
    %8 = vector.multi_reduction <add>, %3, %cst [2] : vector<2x8x128xf32> to vector<2x8xf32>
    %9 = vector.shape_cast %8 : vector<2x8xf32> to vector<2x8x1xf32>
    %cst_9 = arith.constant 1.280000e+02 : f32
    %10 = vector.broadcast %cst_9 : f32 to vector<2x8x1xf32>
    %11 = arith.divf %9, %10 : vector<2x8x1xf32>
    %12 = vector.broadcast %11 : vector<2x8x1xf32> to vector<2x8x128xf32>
    %13 = arith.subf %3, %12 : vector<2x8x128xf32>
    %14 = arith.mulf %13, %13 : vector<2x8x128xf32>
    %cst_10 = arith.constant dense<0.000000e+00> : vector<2x8xf32>
    %15 = vector.multi_reduction <add>, %14, %cst_10 [2] : vector<2x8x128xf32> to vector<2x8xf32>
    %16 = vector.shape_cast %15 : vector<2x8xf32> to vector<2x8x1xf32>
    %cst_11 = arith.constant 1.280000e+02 : f32
    %17 = vector.broadcast %cst_11 : f32 to vector<2x8x1xf32>
    %18 = arith.divf %16, %17 : vector<2x8x1xf32>
    %19 = vector.broadcast %11 : vector<2x8x1xf32> to vector<2x8x128xf32>
    %20 = arith.subf %3, %19 : vector<2x8x128xf32>
    %cst_12 = arith.constant 9.99999974E-6 : f32
    %21 = vector.broadcast %cst_12 : f32 to vector<2x8x1xf32>
    %22 = arith.addf %18, %21 : vector<2x8x1xf32>
    %23 = math.rsqrt %22 : vector<2x8x1xf32>
    %24 = vector.broadcast %23 : vector<2x8x1xf32> to vector<2x8x128xf32>
    %25 = arith.mulf %20, %24 : vector<2x8x128xf32>
    %26 = vector.shape_cast %5 : vector<1x128xf32> to vector<1x1x128xf32>
    %27 = vector.broadcast %26 : vector<1x1x128xf32> to vector<2x8x128xf32>
    %28 = arith.mulf %25, %27 : vector<2x8x128xf32>
    %29 = vector.shape_cast %7 : vector<1x128xf32> to vector<1x1x128xf32>
    %30 = vector.broadcast %29 : vector<1x1x128xf32> to vector<2x8x128xf32>
    %31 = arith.addf %28, %30 : vector<2x8x128xf32>
    %c0_13 = arith.constant 0 : index
    %c0_14 = arith.constant 0 : index
    %c0_15 = arith.constant 0 : index
    %32 = vector.load %arg7[%c0_13, %c0_14, %c0_15] : memref<1x128x384xbf16, #tpu.memory_space<vmem>>, vector<1x128x384xbf16>
    %33 = vector.shape_cast %32 : vector<1x128x384xbf16> to vector<128x384xbf16>
    %c0_16 = arith.constant 0 : index
    %c0_17 = arith.constant 0 : index
    %c0_18 = arith.constant 0 : index
    %34 = vector.load %arg8[%c0_16, %c0_17, %c0_18] : memref<1x1x384xf32, #tpu.memory_space<vmem>>, vector<1x1x384xf32>
    %35 = vector.shape_cast %34 : vector<1x1x384xf32> to vector<1x384xf32>
    %36 = vector.shape_cast %31 : vector<2x8x128xf32> to vector<16x128xf32>
    %37 = arith.truncf %36 : vector<16x128xf32> to vector<16x128xbf16>
    %cst_19 = arith.constant dense<0.000000e+00> : vector<16x384xf32>
    %38 = tpu.matmul %37, %33, %cst_19 {dimension_numbers = #tpu.dot_dimension_numbers<[1], [0], [0], [1], [0, 0, 1, 1], [], []>} : vector<16x128xbf16>, vector<128x384xbf16>, vector<16x384xf32> -> vector<16x384xf32>
    %39 = vector.broadcast %35 : vector<1x384xf32> to vector<16x384xf32>
    %40 = arith.addf %38, %39 : vector<16x384xf32>
    %41 = vector.shape_cast %40 : vector<16x384xf32> to vector<2x8x384xf32>
    %42 = vector.extract_strided_slice %41 {offsets = [0, 0, 0], sizes = [2, 8, 128], strides = [1, 1, 1]} : vector<2x8x384xf32> to vector<2x8x128xf32>
    %43 = vector.extract_strided_slice %41 {offsets = [0, 0, 128], sizes = [2, 8, 128], strides = [1, 1, 1]} : vector<2x8x384xf32> to vector<2x8x128xf32>
    %44 = arith.truncf %43 : vector<2x8x128xf32> to vector<2x8x128xbf16>
    %45 = vector.extract_strided_slice %41 {offsets = [0, 0, 256], sizes = [2, 8, 128], strides = [1, 1, 1]} : vector<2x8x384xf32> to vector<2x8x128xf32>
    %46 = arith.truncf %45 : vector<2x8x128xf32> to vector<2x8x128xbf16>
    %c0_20 = arith.constant 0 : index
    %c0_21 = arith.constant 0 : index
    %47 = vector.load %arg4[%c0_20, %c0_21] : memref<8x8xf32, #tpu.memory_space<vmem>>, vector<8x8xf32>
    %48 = vector.shape_cast %47 : vector<8x8xf32> to vector<1x8x8xf32>
    %49 = tpu.iota {dimensions = array<i32: 2>} : vector<1x1x128xi32>
    %cst_22 = arith.constant 0.000000e+00 : f32
    %50 = vector.broadcast %cst_22 : f32 to vector<2x8x128xf32>
    %c0_i32_23 = arith.constant 0 : i32
    %51 = vector.broadcast %c0_i32_23 : i32 to vector<1x1x128xi32>
    %52 = arith.cmpi sge, %49, %51 : vector<1x1x128xi32>
    %c32_i32 = arith.constant 32 : i32
    %53 = vector.broadcast %c32_i32 : i32 to vector<1x1x128xi32>
    %54 = arith.cmpi slt, %49, %53 : vector<1x1x128xi32>
    %55 = arith.andi %52, %54 : vector<1x1x128xi1>
    %56 = arith.extui %55 : vector<1x1x128xi1> to vector<1x1x128xi32>
    %57 = arith.sitofp %56 : vector<1x1x128xi32> to vector<1x1x128xf32>
    %58 = vector.broadcast %57 : vector<1x1x128xf32> to vector<2x8x128xf32>
    %59 = arith.mulf %42, %58 : vector<2x8x128xf32>
    %60 = arith.truncf %59 : vector<2x8x128xf32> to vector<2x8x128xbf16>
    "tpu.trace_start"() <{level = 10 : i32, message = "bqd,bkd->bqk"}> : () -> ()
    %cst_24 = arith.constant dense<0.000000e+00> : vector<2x8x8xf32>
    %61 = tpu.matmul %60, %44, %cst_24 {dimension_numbers = #tpu.dot_dimension_numbers<[2], [2], [1], [1], [0, 0, 0, 1, 1, 1], [0], [0]>} : vector<2x8x128xbf16>, vector<2x8x128xbf16>, vector<2x8x8xf32> -> vector<2x8x8xf32>
    "tpu.trace_stop"() : () -> ()
    %62 = vector.broadcast %48 : vector<1x8x8xf32> to vector<2x8x8xf32>
    %63 = arith.addf %61, %62 : vector<2x8x8xf32>
    %cst_25 = arith.constant dense<0xFF800000> : vector<2x8xf32>
    %64 = vector.multi_reduction <maximumf>, %63, %cst_25 [2] : vector<2x8x8xf32> to vector<2x8xf32>
    %65 = vector.shape_cast %64 : vector<2x8xf32> to vector<2x8x1xf32>
    %66 = vector.broadcast %65 : vector<2x8x1xf32> to vector<2x8x8xf32>
    %67 = arith.subf %63, %66 : vector<2x8x8xf32>
    %68 = math.exp %67 : vector<2x8x8xf32>
    %cst_26 = arith.constant dense<0.000000e+00> : vector<2x8xf32>
    %69 = vector.multi_reduction <add>, %68, %cst_26 [2] : vector<2x8x8xf32> to vector<2x8xf32>
    %70 = vector.shape_cast %69 : vector<2x8xf32> to vector<2x8x1xf32>
    %71 = tpu.reciprocal %70 {approx = true} : vector<2x8x1xf32> -> vector<2x8x1xf32>
    %72 = vector.broadcast %71 : vector<2x8x1xf32> to vector<2x8x8xf32>
    %73 = arith.mulf %68, %72 : vector<2x8x8xf32>
    %74 = arith.truncf %73 : vector<2x8x8xf32> to vector<2x8x8xbf16>
    "tpu.trace_start"() <{level = 10 : i32, message = "bqk,bkd->bqd"}> : () -> ()
    %cst_27 = arith.constant dense<0.000000e+00> : vector<2x8x128xf32>
    %75 = tpu.matmul %74, %46, %cst_27 {dimension_numbers = #tpu.dot_dimension_numbers<[2], [1], [1], [2], [0, 0, 0, 1, 1, 2], [0], [0]>} : vector<2x8x8xbf16>, vector<2x8x128xbf16>, vector<2x8x128xf32> -> vector<2x8x128xf32>
    "tpu.trace_stop"() : () -> ()
    %76 = vector.broadcast %57 : vector<1x1x128xf32> to vector<2x8x128xf32>
    %77 = arith.mulf %75, %76 : vector<2x8x128xf32>
    %78 = arith.addf %50, %77 : vector<2x8x128xf32>
    %c32_i32_28 = arith.constant 32 : i32
    %79 = vector.broadcast %c32_i32_28 : i32 to vector<1x1x128xi32>
    %80 = arith.cmpi sge, %49, %79 : vector<1x1x128xi32>
    %c64_i32 = arith.constant 64 : i32
    %81 = vector.broadcast %c64_i32 : i32 to vector<1x1x128xi32>
    %82 = arith.cmpi slt, %49, %81 : vector<1x1x128xi32>
    %83 = arith.andi %80, %82 : vector<1x1x128xi1>
    %84 = arith.extui %83 : vector<1x1x128xi1> to vector<1x1x128xi32>
    %85 = arith.sitofp %84 : vector<1x1x128xi32> to vector<1x1x128xf32>
    %86 = vector.broadcast %85 : vector<1x1x128xf32> to vector<2x8x128xf32>
    %87 = arith.mulf %42, %86 : vector<2x8x128xf32>
    %88 = arith.truncf %87 : vector<2x8x128xf32> to vector<2x8x128xbf16>
    "tpu.trace_start"() <{level = 10 : i32, message = "bqd,bkd->bqk"}> : () -> ()
    %cst_29 = arith.constant dense<0.000000e+00> : vector<2x8x8xf32>
    %89 = tpu.matmul %88, %44, %cst_29 {dimension_numbers = #tpu.dot_dimension_numbers<[2], [2], [1], [1], [0, 0, 0, 1, 1, 1], [0], [0]>} : vector<2x8x128xbf16>, vector<2x8x128xbf16>, vector<2x8x8xf32> -> vector<2x8x8xf32>
    "tpu.trace_stop"() : () -> ()
    %90 = vector.broadcast %48 : vector<1x8x8xf32> to vector<2x8x8xf32>
    %91 = arith.addf %89, %90 : vector<2x8x8xf32>
    %cst_30 = arith.constant dense<0xFF800000> : vector<2x8xf32>
    %92 = vector.multi_reduction <maximumf>, %91, %cst_30 [2] : vector<2x8x8xf32> to vector<2x8xf32>
    %93 = vector.shape_cast %92 : vector<2x8xf32> to vector<2x8x1xf32>
    %94 = vector.broadcast %93 : vector<2x8x1xf32> to vector<2x8x8xf32>
    %95 = arith.subf %91, %94 : vector<2x8x8xf32>
    %96 = math.exp %95 : vector<2x8x8xf32>
    %cst_31 = arith.constant dense<0.000000e+00> : vector<2x8xf32>
    %97 = vector.multi_reduction <add>, %96, %cst_31 [2] : vector<2x8x8xf32> to vector<2x8xf32>
    %98 = vector.shape_cast %97 : vector<2x8xf32> to vector<2x8x1xf32>
    %99 = tpu.reciprocal %98 {approx = true} : vector<2x8x1xf32> -> vector<2x8x1xf32>
    %100 = vector.broadcast %99 : vector<2x8x1xf32> to vector<2x8x8xf32>
    %101 = arith.mulf %96, %100 : vector<2x8x8xf32>
    %102 = arith.truncf %101 : vector<2x8x8xf32> to vector<2x8x8xbf16>
    "tpu.trace_start"() <{level = 10 : i32, message = "bqk,bkd->bqd"}> : () -> ()
    %cst_32 = arith.constant dense<0.000000e+00> : vector<2x8x128xf32>
    %103 = tpu.matmul %102, %46, %cst_32 {dimension_numbers = #tpu.dot_dimension_numbers<[2], [1], [1], [2], [0, 0, 0, 1, 1, 2], [0], [0]>} : vector<2x8x8xbf16>, vector<2x8x128xbf16>, vector<2x8x128xf32> -> vector<2x8x128xf32>
    "tpu.trace_stop"() : () -> ()
    %104 = vector.broadcast %85 : vector<1x1x128xf32> to vector<2x8x128xf32>
    %105 = arith.mulf %103, %104 : vector<2x8x128xf32>
    %106 = arith.addf %78, %105 : vector<2x8x128xf32>
    %c64_i32_33 = arith.constant 64 : i32
    %107 = vector.broadcast %c64_i32_33 : i32 to vector<1x1x128xi32>
    %108 = arith.cmpi sge, %49, %107 : vector<1x1x128xi32>
    %c96_i32 = arith.constant 96 : i32
    %109 = vector.broadcast %c96_i32 : i32 to vector<1x1x128xi32>
    %110 = arith.cmpi slt, %49, %109 : vector<1x1x128xi32>
    %111 = arith.andi %108, %110 : vector<1x1x128xi1>
    %112 = arith.extui %111 : vector<1x1x128xi1> to vector<1x1x128xi32>
    %113 = arith.sitofp %112 : vector<1x1x128xi32> to vector<1x1x128xf32>
    %114 = vector.broadcast %113 : vector<1x1x128xf32> to vector<2x8x128xf32>
    %115 = arith.mulf %42, %114 : vector<2x8x128xf32>
    %116 = arith.truncf %115 : vector<2x8x128xf32> to vector<2x8x128xbf16>
    "tpu.trace_start"() <{level = 10 : i32, message = "bqd,bkd->bqk"}> : () -> ()
    %cst_34 = arith.constant dense<0.000000e+00> : vector<2x8x8xf32>
    %117 = tpu.matmul %116, %44, %cst_34 {dimension_numbers = #tpu.dot_dimension_numbers<[2], [2], [1], [1], [0, 0, 0, 1, 1, 1], [0], [0]>} : vector<2x8x128xbf16>, vector<2x8x128xbf16>, vector<2x8x8xf32> -> vector<2x8x8xf32>
    "tpu.trace_stop"() : () -> ()
    %118 = vector.broadcast %48 : vector<1x8x8xf32> to vector<2x8x8xf32>
    %119 = arith.addf %117, %118 : vector<2x8x8xf32>
    %cst_35 = arith.constant dense<0xFF800000> : vector<2x8xf32>
    %120 = vector.multi_reduction <maximumf>, %119, %cst_35 [2] : vector<2x8x8xf32> to vector<2x8xf32>
    %121 = vector.shape_cast %120 : vector<2x8xf32> to vector<2x8x1xf32>
    %122 = vector.broadcast %121 : vector<2x8x1xf32> to vector<2x8x8xf32>
    %123 = arith.subf %119, %122 : vector<2x8x8xf32>
    %124 = math.exp %123 : vector<2x8x8xf32>
    %cst_36 = arith.constant dense<0.000000e+00> : vector<2x8xf32>
    %125 = vector.multi_reduction <add>, %124, %cst_36 [2] : vector<2x8x8xf32> to vector<2x8xf32>
    %126 = vector.shape_cast %125 : vector<2x8xf32> to vector<2x8x1xf32>
    %127 = tpu.reciprocal %126 {approx = true} : vector<2x8x1xf32> -> vector<2x8x1xf32>
    %128 = vector.broadcast %127 : vector<2x8x1xf32> to vector<2x8x8xf32>
    %129 = arith.mulf %124, %128 : vector<2x8x8xf32>
    %130 = arith.truncf %129 : vector<2x8x8xf32> to vector<2x8x8xbf16>
    "tpu.trace_start"() <{level = 10 : i32, message = "bqk,bkd->bqd"}> : () -> ()
    %cst_37 = arith.constant dense<0.000000e+00> : vector<2x8x128xf32>
    %131 = tpu.matmul %130, %46, %cst_37 {dimension_numbers = #tpu.dot_dimension_numbers<[2], [1], [1], [2], [0, 0, 0, 1, 1, 2], [0], [0]>} : vector<2x8x8xbf16>, vector<2x8x128xbf16>, vector<2x8x128xf32> -> vector<2x8x128xf32>
    "tpu.trace_stop"() : () -> ()
    %132 = vector.broadcast %113 : vector<1x1x128xf32> to vector<2x8x128xf32>
    %133 = arith.mulf %131, %132 : vector<2x8x128xf32>
    %134 = arith.addf %106, %133 : vector<2x8x128xf32>
    %c96_i32_38 = arith.constant 96 : i32
    %135 = vector.broadcast %c96_i32_38 : i32 to vector<1x1x128xi32>
    %136 = arith.cmpi sge, %49, %135 : vector<1x1x128xi32>
    %c128_i32 = arith.constant 128 : i32
    %137 = vector.broadcast %c128_i32 : i32 to vector<1x1x128xi32>
    %138 = arith.cmpi slt, %49, %137 : vector<1x1x128xi32>
    %139 = arith.andi %136, %138 : vector<1x1x128xi1>
    %140 = arith.extui %139 : vector<1x1x128xi1> to vector<1x1x128xi32>
    %141 = arith.sitofp %140 : vector<1x1x128xi32> to vector<1x1x128xf32>
    %142 = vector.broadcast %141 : vector<1x1x128xf32> to vector<2x8x128xf32>
    %143 = arith.mulf %42, %142 : vector<2x8x128xf32>
    %144 = arith.truncf %143 : vector<2x8x128xf32> to vector<2x8x128xbf16>
    "tpu.trace_start"() <{level = 10 : i32, message = "bqd,bkd->bqk"}> : () -> ()
    %cst_39 = arith.constant dense<0.000000e+00> : vector<2x8x8xf32>
    %145 = tpu.matmul %144, %44, %cst_39 {dimension_numbers = #tpu.dot_dimension_numbers<[2], [2], [1], [1], [0, 0, 0, 1, 1, 1], [0], [0]>} : vector<2x8x128xbf16>, vector<2x8x128xbf16>, vector<2x8x8xf32> -> vector<2x8x8xf32>
    "tpu.trace_stop"() : () -> ()
    %146 = vector.broadcast %48 : vector<1x8x8xf32> to vector<2x8x8xf32>
    %147 = arith.addf %145, %146 : vector<2x8x8xf32>
    %cst_40 = arith.constant dense<0xFF800000> : vector<2x8xf32>
    %148 = vector.multi_reduction <maximumf>, %147, %cst_40 [2] : vector<2x8x8xf32> to vector<2x8xf32>
    %149 = vector.shape_cast %148 : vector<2x8xf32> to vector<2x8x1xf32>
    %150 = vector.broadcast %149 : vector<2x8x1xf32> to vector<2x8x8xf32>
    %151 = arith.subf %147, %150 : vector<2x8x8xf32>
    %152 = math.exp %151 : vector<2x8x8xf32>
    %cst_41 = arith.constant dense<0.000000e+00> : vector<2x8xf32>
    %153 = vector.multi_reduction <add>, %152, %cst_41 [2] : vector<2x8x8xf32> to vector<2x8xf32>
    %154 = vector.shape_cast %153 : vector<2x8xf32> to vector<2x8x1xf32>
    %155 = tpu.reciprocal %154 {approx = true} : vector<2x8x1xf32> -> vector<2x8x1xf32>
    %156 = vector.broadcast %155 : vector<2x8x1xf32> to vector<2x8x8xf32>
    %157 = arith.mulf %152, %156 : vector<2x8x8xf32>
    %158 = arith.truncf %157 : vector<2x8x8xf32> to vector<2x8x8xbf16>
    "tpu.trace_start"() <{level = 10 : i32, message = "bqk,bkd->bqd"}> : () -> ()
    %cst_42 = arith.constant dense<0.000000e+00> : vector<2x8x128xf32>
    %159 = tpu.matmul %158, %46, %cst_42 {dimension_numbers = #tpu.dot_dimension_numbers<[2], [1], [1], [2], [0, 0, 0, 1, 1, 2], [0], [0]>} : vector<2x8x8xbf16>, vector<2x8x128xbf16>, vector<2x8x128xf32> -> vector<2x8x128xf32>
    "tpu.trace_stop"() : () -> ()
    %160 = vector.broadcast %141 : vector<1x1x128xf32> to vector<2x8x128xf32>
    %161 = arith.mulf %159, %160 : vector<2x8x128xf32>
    %162 = arith.addf %134, %161 : vector<2x8x128xf32>
    %c0_43 = arith.constant 0 : index
    %c0_44 = arith.constant 0 : index
    %c0_45 = arith.constant 0 : index
    %163 = vector.load %arg9[%c0_43, %c0_44, %c0_45] : memref<1x128x128xbf16, #tpu.memory_space<vmem>>, vector<1x128x128xbf16>
    %164 = vector.shape_cast %163 : vector<1x128x128xbf16> to vector<128x128xbf16>
    %c0_46 = arith.constant 0 : index
    %c0_47 = arith.constant 0 : index
    %c0_48 = arith.constant 0 : index
    %165 = vector.load %arg10[%c0_46, %c0_47, %c0_48] : memref<1x1x128xf32, #tpu.memory_space<vmem>>, vector<1x1x128xf32>
    %166 = vector.shape_cast %165 : vector<1x1x128xf32> to vector<1x128xf32>
    %167 = vector.shape_cast %162 : vector<2x8x128xf32> to vector<16x128xf32>
    %168 = arith.truncf %167 : vector<16x128xf32> to vector<16x128xbf16>
    %cst_49 = arith.constant dense<0.000000e+00> : vector<16x128xf32>
    %169 = tpu.matmul %168, %164, %cst_49 {dimension_numbers = #tpu.dot_dimension_numbers<[1], [0], [0], [1], [0, 0, 1, 1], [], []>} : vector<16x128xbf16>, vector<128x128xbf16>, vector<16x128xf32> -> vector<16x128xf32>
    %170 = vector.broadcast %166 : vector<1x128xf32> to vector<16x128xf32>
    %171 = arith.addf %169, %170 : vector<16x128xf32>
    %172 = vector.shape_cast %171 : vector<16x128xf32> to vector<2x8x128xf32>
    %173 = arith.addf %3, %172 : vector<2x8x128xf32>
    %c0_50 = arith.constant 0 : index
    %c0_51 = arith.constant 0 : index
    %c0_52 = arith.constant 0 : index
    %174 = vector.load %arg11[%c0_50, %c0_51, %c0_52] : memref<1x1x128xf32, #tpu.memory_space<vmem>>, vector<1x1x128xf32>
    %175 = vector.shape_cast %174 : vector<1x1x128xf32> to vector<1x128xf32>
    %c0_53 = arith.constant 0 : index
    %c0_54 = arith.constant 0 : index
    %c0_55 = arith.constant 0 : index
    %176 = vector.load %arg12[%c0_53, %c0_54, %c0_55] : memref<1x1x128xf32, #tpu.memory_space<vmem>>, vector<1x1x128xf32>
    %177 = vector.shape_cast %176 : vector<1x1x128xf32> to vector<1x128xf32>
    %cst_56 = arith.constant dense<0.000000e+00> : vector<2x8xf32>
    %178 = vector.multi_reduction <add>, %173, %cst_56 [2] : vector<2x8x128xf32> to vector<2x8xf32>
    %179 = vector.shape_cast %178 : vector<2x8xf32> to vector<2x8x1xf32>
    %cst_57 = arith.constant 1.280000e+02 : f32
    %180 = vector.broadcast %cst_57 : f32 to vector<2x8x1xf32>
    %181 = arith.divf %179, %180 : vector<2x8x1xf32>
    %182 = vector.broadcast %181 : vector<2x8x1xf32> to vector<2x8x128xf32>
    %183 = arith.subf %173, %182 : vector<2x8x128xf32>
    %184 = arith.mulf %183, %183 : vector<2x8x128xf32>
    %cst_58 = arith.constant dense<0.000000e+00> : vector<2x8xf32>
    %185 = vector.multi_reduction <add>, %184, %cst_58 [2] : vector<2x8x128xf32> to vector<2x8xf32>
    %186 = vector.shape_cast %185 : vector<2x8xf32> to vector<2x8x1xf32>
    %cst_59 = arith.constant 1.280000e+02 : f32
    %187 = vector.broadcast %cst_59 : f32 to vector<2x8x1xf32>
    %188 = arith.divf %186, %187 : vector<2x8x1xf32>
    %189 = vector.broadcast %181 : vector<2x8x1xf32> to vector<2x8x128xf32>
    %190 = arith.subf %173, %189 : vector<2x8x128xf32>
    %cst_60 = arith.constant 9.99999974E-6 : f32
    %191 = vector.broadcast %cst_60 : f32 to vector<2x8x1xf32>
    %192 = arith.addf %188, %191 : vector<2x8x1xf32>
    %193 = math.rsqrt %192 : vector<2x8x1xf32>
    %194 = vector.broadcast %193 : vector<2x8x1xf32> to vector<2x8x128xf32>
    %195 = arith.mulf %190, %194 : vector<2x8x128xf32>
    %196 = vector.shape_cast %175 : vector<1x128xf32> to vector<1x1x128xf32>
    %197 = vector.broadcast %196 : vector<1x1x128xf32> to vector<2x8x128xf32>
    %198 = arith.mulf %195, %197 : vector<2x8x128xf32>
    %199 = vector.shape_cast %177 : vector<1x128xf32> to vector<1x1x128xf32>
    %200 = vector.broadcast %199 : vector<1x1x128xf32> to vector<2x8x128xf32>
    %201 = arith.addf %198, %200 : vector<2x8x128xf32>
    %c0_61 = arith.constant 0 : index
    %c0_62 = arith.constant 0 : index
    %c0_63 = arith.constant 0 : index
    %202 = vector.load %arg13[%c0_61, %c0_62, %c0_63] : memref<1x128x512xbf16, #tpu.memory_space<vmem>>, vector<1x128x512xbf16>
    %203 = vector.shape_cast %202 : vector<1x128x512xbf16> to vector<128x512xbf16>
    %c0_64 = arith.constant 0 : index
    %c0_65 = arith.constant 0 : index
    %c0_66 = arith.constant 0 : index
    %204 = vector.load %arg14[%c0_64, %c0_65, %c0_66] : memref<1x1x512xf32, #tpu.memory_space<vmem>>, vector<1x1x512xf32>
    %205 = vector.shape_cast %204 : vector<1x1x512xf32> to vector<1x512xf32>
    %206 = vector.shape_cast %201 : vector<2x8x128xf32> to vector<16x128xf32>
    %207 = arith.truncf %206 : vector<16x128xf32> to vector<16x128xbf16>
    %cst_67 = arith.constant dense<0.000000e+00> : vector<16x512xf32>
    %208 = tpu.matmul %207, %203, %cst_67 {dimension_numbers = #tpu.dot_dimension_numbers<[1], [0], [0], [1], [0, 0, 1, 1], [], []>} : vector<16x128xbf16>, vector<128x512xbf16>, vector<16x512xf32> -> vector<16x512xf32>
    %209 = vector.broadcast %205 : vector<1x512xf32> to vector<16x512xf32>
    %210 = arith.addf %208, %209 : vector<16x512xf32>
    %211 = vector.shape_cast %210 : vector<16x512xf32> to vector<2x8x512xf32>
    %cst_68 = arith.constant 1.702000e+00 : f32
    %212 = vector.broadcast %cst_68 : f32 to vector<2x8x512xf32>
    %213 = arith.mulf %212, %211 : vector<2x8x512xf32>
    %214 = arith.negf %213 : vector<2x8x512xf32>
    %215 = math.exp %214 : vector<2x8x512xf32>
    %cst_69 = arith.constant 1.000000e+00 : f32
    %216 = vector.broadcast %cst_69 : f32 to vector<2x8x512xf32>
    %217 = arith.addf %216, %215 : vector<2x8x512xf32>
    %218 = arith.divf %216, %217 : vector<2x8x512xf32>
    %219 = arith.mulf %211, %218 : vector<2x8x512xf32>
    %c0_70 = arith.constant 0 : index
    %c0_71 = arith.constant 0 : index
    %c0_72 = arith.constant 0 : index
    %220 = vector.load %arg15[%c0_70, %c0_71, %c0_72] : memref<1x512x128xbf16, #tpu.memory_space<vmem>>, vector<1x512x128xbf16>
    %221 = vector.shape_cast %220 : vector<1x512x128xbf16> to vector<512x128xbf16>
    %c0_73 = arith.constant 0 : index
    %c0_74 = arith.constant 0 : index
    %c0_75 = arith.constant 0 : index
    %222 = vector.load %arg16[%c0_73, %c0_74, %c0_75] : memref<1x1x128xf32, #tpu.memory_space<vmem>>, vector<1x1x128xf32>
    %223 = vector.shape_cast %222 : vector<1x1x128xf32> to vector<1x128xf32>
    %224 = vector.shape_cast %219 : vector<2x8x512xf32> to vector<16x512xf32>
    %225 = arith.truncf %224 : vector<16x512xf32> to vector<16x512xbf16>
    %cst_76 = arith.constant dense<0.000000e+00> : vector<16x128xf32>
    %226 = tpu.matmul %225, %221, %cst_76 {dimension_numbers = #tpu.dot_dimension_numbers<[1], [0], [0], [1], [0, 0, 1, 1], [], []>} : vector<16x512xbf16>, vector<512x128xbf16>, vector<16x128xf32> -> vector<16x128xf32>
    %227 = vector.broadcast %223 : vector<1x128xf32> to vector<16x128xf32>
    %228 = arith.addf %226, %227 : vector<16x128xf32>
    %229 = vector.shape_cast %228 : vector<16x128xf32> to vector<2x8x128xf32>
    %230 = arith.addf %173, %229 : vector<2x8x128xf32>
    %c0_77 = arith.constant 0 : index
    %c0_78 = arith.constant 0 : index
    %c0_79 = arith.constant 0 : index
    %231 = vector.load %arg21[%c0_77, %c0_78, %c0_79] : memref<2x8x128xf32, #tpu.memory_space<vmem>>, vector<2x8x128xf32>
    tpu.vector_store %arg21[%c0_77, %c0_78, %c0_79], %230 {strides = array<i32>} : memref<2x8x128xf32, #tpu.memory_space<vmem>>, vector<2x8x128xf32>,
    %c1_i32 = arith.constant 1 : i32
    %232 = arith.cmpi eq, %arg1, %c1_i32 : i32
    %233 = arith.extui %232 : i1 to i32
    %c0_i32_80 = arith.constant 0 : i32
    %234 = arith.cmpi ne, %233, %c0_i32_80 : i32
    scf.if %234 {
      %c0_81 = arith.constant 0 : index
      %c0_82 = arith.constant 0 : index
      %c0_83 = arith.constant 0 : index
      %235 = vector.load %arg3[%c0_81, %c0_82, %c0_83] : memref<2x8x1xf32, #tpu.memory_space<vmem>>, vector<2x8x1xf32>
      %236 = vector.broadcast %235 : vector<2x8x1xf32> to vector<2x8x128xf32>
      %237 = arith.mulf %236, %230 : vector<2x8x128xf32>
      %cst_84 = arith.constant dense<0.000000e+00> : vector<2x128xf32>
      %238 = vector.multi_reduction <add>, %237, %cst_84 [1] : vector<2x8x128xf32> to vector<2x128xf32>
      %c0_85 = arith.constant 0 : index
      %c0_86 = arith.constant 0 : index
      %239 = vector.load %arg17[%c0_85, %c0_86] : memref<1x128xf32, #tpu.memory_space<vmem>>, vector<1x128xf32>
      %c0_87 = arith.constant 0 : index
      %c0_88 = arith.constant 0 : index
      %240 = vector.load %arg18[%c0_87, %c0_88] : memref<1x128xf32, #tpu.memory_space<vmem>>, vector<1x128xf32>
      %cst_89 = arith.constant dense<0.000000e+00> : vector<2xf32>
      %241 = vector.multi_reduction <add>, %238, %cst_89 [1] : vector<2x128xf32> to vector<2xf32>
      %242 = vector.shape_cast %241 : vector<2xf32> to vector<2x1xf32>
      %cst_90 = arith.constant 1.280000e+02 : f32
      %243 = vector.broadcast %cst_90 : f32 to vector<2x1xf32>
      %244 = arith.divf %242, %243 : vector<2x1xf32>
      %245 = vector.broadcast %244 : vector<2x1xf32> to vector<2x128xf32>
      %246 = arith.subf %238, %245 : vector<2x128xf32>
      %247 = arith.mulf %246, %246 : vector<2x128xf32>
      %cst_91 = arith.constant dense<0.000000e+00> : vector<2xf32>
      %248 = vector.multi_reduction <add>, %247, %cst_91 [1] : vector<2x128xf32> to vector<2xf32>
      %249 = vector.shape_cast %248 : vector<2xf32> to vector<2x1xf32>
      %cst_92 = arith.constant 1.280000e+02 : f32
      %250 = vector.broadcast %cst_92 : f32 to vector<2x1xf32>
      %251 = arith.divf %249, %250 : vector<2x1xf32>
      %252 = vector.broadcast %244 : vector<2x1xf32> to vector<2x128xf32>
      %253 = arith.subf %238, %252 : vector<2x128xf32>
      %cst_93 = arith.constant 9.99999974E-6 : f32
      %254 = vector.broadcast %cst_93 : f32 to vector<2x1xf32>
      %255 = arith.addf %251, %254 : vector<2x1xf32>
      %256 = math.rsqrt %255 : vector<2x1xf32>
      %257 = vector.broadcast %256 : vector<2x1xf32> to vector<2x128xf32>
      %258 = arith.mulf %253, %257 : vector<2x128xf32>
      %259 = vector.broadcast %239 : vector<1x128xf32> to vector<2x128xf32>
      %260 = arith.mulf %258, %259 : vector<2x128xf32>
      %261 = vector.broadcast %240 : vector<1x128xf32> to vector<2x128xf32>
      %262 = arith.addf %260, %261 : vector<2x128xf32>
      %263 = arith.truncf %262 : vector<2x128xf32> to vector<2x128xbf16>
      %c0_94 = arith.constant 0 : index
      %c0_95 = arith.constant 0 : index
      %264 = vector.load %arg19[%c0_94, %c0_95] : memref<128x128xbf16, #tpu.memory_space<vmem>>, vector<128x128xbf16>
      %cst_96 = arith.constant dense<0.000000e+00> : vector<2x128xf32>
      %265 = tpu.matmul %263, %264, %cst_96 {dimension_numbers = #tpu.dot_dimension_numbers<[1], [0], [0], [1], [0, 0, 1, 1], [], []>} : vector<2x128xbf16>, vector<128x128xbf16>, vector<2x128xf32> -> vector<2x128xf32>
      %c0_97 = arith.constant 0 : index
      %c0_98 = arith.constant 0 : index
      %266 = vector.load %arg20[%c0_97, %c0_98] : memref<2x128xf32, #tpu.memory_space<vmem>>, vector<2x128xf32>
      tpu.vector_store %arg20[%c0_97, %c0_98], %265 {strides = array<i32>} : memref<2x128xf32, #tpu.memory_space<vmem>>, vector<2x128xf32>,
    } else {
    }
    return
  }
  func.func @transform_1(%arg0: i32, %arg1: i32) -> (i32, i32, i32) {
    %c0_i32 = arith.constant 0 : i32
    %c0_i32_0 = arith.constant 0 : i32
    %c0_i32_1 = arith.constant 0 : i32
    return %arg0, %c0_i32, %c0_i32_0 : i32, i32, i32
  }
  func.func @transform_2(%arg0: i32, %arg1: i32) -> (i32, i32) {
    %c0_i32 = arith.constant 0 : i32
    %c0_i32_0 = arith.constant 0 : i32
    %c0_i32_1 = arith.constant 0 : i32
    return %c0_i32, %c0_i32_0 : i32, i32
  }
  func.func @transform_3(%arg0: i32, %arg1: i32) -> (i32, i32, i32) {
    %c0_i32 = arith.constant 0 : i32
    %c0_i32_0 = arith.constant 0 : i32
    %c0_i32_1 = arith.constant 0 : i32
    return %arg1, %c0_i32, %c0_i32_0 : i32, i32, i32
  }
  func.func @transform_4(%arg0: i32, %arg1: i32) -> (i32, i32, i32) {
    %c0_i32 = arith.constant 0 : i32
    %c0_i32_0 = arith.constant 0 : i32
    %c0_i32_1 = arith.constant 0 : i32
    return %arg1, %c0_i32, %c0_i32_0 : i32, i32, i32
  }
  func.func @transform_5(%arg0: i32, %arg1: i32) -> (i32, i32, i32) {
    %c0_i32 = arith.constant 0 : i32
    %c0_i32_0 = arith.constant 0 : i32
    %c0_i32_1 = arith.constant 0 : i32
    return %arg1, %c0_i32, %c0_i32_0 : i32, i32, i32
  }
  func.func @transform_6(%arg0: i32, %arg1: i32) -> (i32, i32, i32) {
    %c0_i32 = arith.constant 0 : i32
    %c0_i32_0 = arith.constant 0 : i32
    %c0_i32_1 = arith.constant 0 : i32
    return %arg1, %c0_i32, %c0_i32_0 : i32, i32, i32
  }
  func.func @transform_7(%arg0: i32, %arg1: i32) -> (i32, i32, i32) {
    %c0_i32 = arith.constant 0 : i32
    %c0_i32_0 = arith.constant 0 : i32
    %c0_i32_1 = arith.constant 0 : i32
    return %arg1, %c0_i32, %c0_i32_0 : i32, i32, i32
  }
  func.func @transform_8(%arg0: i32, %arg1: i32) -> (i32, i32, i32) {
    %c0_i32 = arith.constant 0 : i32
    %c0_i32_0 = arith.constant 0 : i32
    %c0_i32_1 = arith.constant 0 : i32
    return %arg1, %c0_i32, %c0_i32_0 : i32, i32, i32
  }
  func.func @transform_9(%arg0: i32, %arg1: i32) -> (i32, i32, i32) {
    %c0_i32 = arith.constant 0 : i32
    %c0_i32_0 = arith.constant 0 : i32
    %c0_i32_1 = arith.constant 0 : i32
    return %arg1, %c0_i32, %c0_i32_0 : i32, i32, i32
  }
  func.func @transform_10(%arg0: i32, %arg1: i32) -> (i32, i32, i32) {
    %c0_i32 = arith.constant 0 : i32
    %c0_i32_0 = arith.constant 0 : i32
    %c0_i32_1 = arith.constant 0 : i32
    return %arg1, %c0_i32, %c0_i32_0 : i32, i32, i32
  }
  func.func @transform_11(%arg0: i32, %arg1: i32) -> (i32, i32, i32) {
    %c0_i32 = arith.constant 0 : i32
    %c0_i32_0 = arith.constant 0 : i32
    %c0_i32_1 = arith.constant 0 : i32
    return %arg1, %c0_i32, %c0_i32_0 : i32, i32, i32
  }
  func.func @transform_12(%arg0: i32, %arg1: i32) -> (i32, i32, i32) {
    %c0_i32 = arith.constant 0 : i32
    %c0_i32_0 = arith.constant 0 : i32
    %c0_i32_1 = arith.constant 0 : i32
    return %arg1, %c0_i32, %c0_i32_0 : i32, i32, i32
  }
  func.func @transform_13(%arg0: i32, %arg1: i32) -> (i32, i32, i32) {
    %c0_i32 = arith.constant 0 : i32
    %c0_i32_0 = arith.constant 0 : i32
    %c0_i32_1 = arith.constant 0 : i32
    return %arg1, %c0_i32, %c0_i32_0 : i32, i32, i32
  }
  func.func @transform_14(%arg0: i32, %arg1: i32) -> (i32, i32, i32) {
    %c0_i32 = arith.constant 0 : i32
    %c0_i32_0 = arith.constant 0 : i32
    %c0_i32_1 = arith.constant 0 : i32
    return %arg1, %c0_i32, %c0_i32_0 : i32, i32, i32
  }
  func.func @transform_15(%arg0: i32, %arg1: i32) -> (i32, i32) {
    %c0_i32 = arith.constant 0 : i32
    %c0_i32_0 = arith.constant 0 : i32
    %c0_i32_1 = arith.constant 0 : i32
    return %c0_i32, %c0_i32_0 : i32, i32
  }
  func.func @transform_16(%arg0: i32, %arg1: i32) -> (i32, i32) {
    %c0_i32 = arith.constant 0 : i32
    %c0_i32_0 = arith.constant 0 : i32
    %c0_i32_1 = arith.constant 0 : i32
    return %c0_i32, %c0_i32_0 : i32, i32
  }
  func.func @transform_17(%arg0: i32, %arg1: i32) -> (i32, i32) {
    %c0_i32 = arith.constant 0 : i32
    %c0_i32_0 = arith.constant 0 : i32
    %c0_i32_1 = arith.constant 0 : i32
    return %c0_i32, %c0_i32_0 : i32, i32
  }
  func.func @transform_18(%arg0: i32, %arg1: i32) -> (i32, i32) {
    %c0_i32 = arith.constant 0 : i32
    %c0_i32_0 = arith.constant 0 : i32
    return %arg0, %c0_i32 : i32, i32
  }
}

</mosaic_0001>

<llo_original>
// kernel: text_encoder_pallas.1
$region0: #{text_encoder_pallas.1}
  #allocation0 [shape = 'u32[]', space=smem, size = 0x4, offset = 0x4, fixed_abs, tag = 'smem constant byte address 0x4 - core index']
  #allocation1 [shape = 'u32[144,128]{1,0:T(1,128)}', space=vmem, size = 0x12000, scoped, tag = 'internal scratch']
  #allocation2 [shape = 'f32[2,8,128]{2,1,0:T(8,128)}', space=vmem, size = 0x2000, scoped, tag = 'scratch operand']
  #allocation3 [shape = 's32[1]{0}', space=sflag, size = 0x4, scoped, tag = 'scratch operand']
  #allocation26 [shape = 's32[]', space=sflag, size = 0x4, offset = 0, fixed_abs, tag = 'sflag constant byte address 0x0 - dummy sync flag']
  #allocation27 [shape = 's32[]', space=sflag, size = 0x4, offset = 0, fixed_abs, tag = 'sflag constant byte address 0x0 - dummy sync flag']
  #allocation28 [shape = 'u32[]', space=smem, size = 0x4, offset = 0x44, fixed_abs, tag = 'smem constant byte address 0x44 - assertion arg 0']
  #allocation29 [shape = 'u32[]', space=smem, size = 0x4, offset = 0x48, fixed_abs, tag = 'smem constant byte address 0x48 - assertion arg 1']
  %s0 = inlined_call_operand.hbm [shape: f32[2,8,128], index: 0, kind: input, shape index: {}]
  %s1 = inlined_call_operand.hbm [shape: f32[2,8,1], index: 1, kind: input, shape index: {}]
  %s2 = inlined_call_operand.hbm [shape: f32[8,8], index: 2, kind: input, shape index: {}]
  %s3 = inlined_call_operand.hbm [shape: f32[2,1,128], index: 3, kind: input, shape index: {}]
  %s4 = inlined_call_operand.hbm [shape: f32[2,1,128], index: 4, kind: input, shape index: {}]
  %s5 = inlined_call_operand.hbm [shape: bf16[2,128,384], index: 5, kind: input, shape index: {}]
  %s6 = inlined_call_operand.hbm [shape: f32[2,1,384], index: 6, kind: input, shape index: {}]
  %s7 = inlined_call_operand.hbm [shape: bf16[2,128,128], index: 7, kind: input, shape index: {}]
  %s8 = inlined_call_operand.hbm [shape: f32[2,1,128], index: 8, kind: input, shape index: {}]
  %s9 = inlined_call_operand.hbm [shape: f32[2,1,128], index: 9, kind: input, shape index: {}]
  %s10 = inlined_call_operand.hbm [shape: f32[2,1,128], index: 10, kind: input, shape index: {}]
  %s11 = inlined_call_operand.hbm [shape: bf16[2,128,512], index: 11, kind: input, shape index: {}]
  %s12 = inlined_call_operand.hbm [shape: f32[2,1,512], index: 12, kind: input, shape index: {}]
  %s13 = inlined_call_operand.hbm [shape: bf16[2,512,128], index: 13, kind: input, shape index: {}]
  %s14 = inlined_call_operand.hbm [shape: f32[2,1,128], index: 14, kind: input, shape index: {}]
  %s15 = inlined_call_operand.hbm [shape: f32[1,128], index: 15, kind: input, shape index: {}]
  %s16 = inlined_call_operand.hbm [shape: f32[1,128], index: 16, kind: input, shape index: {}]
  %s17 = inlined_call_operand.hbm [shape: bf16[128,128], index: 17, kind: input, shape index: {}]
  %s18 = inlined_call_operand.hbm [shape: f32[2,128], index: 18, kind: output, shape index: {}]
  %s19 = sld [smem:[#allocation0]]
  $region181: #{text_encoder_pallas.1} parent=0
    _
  %s21 = ssub.s32 1, %s19
  %s22 = scalar_select 0, %s21, %s19
  $region1: #{text_encoder_pallas.1} parent=0
    #allocation4 [shape = 'u8[8192]{0}', space=vmem, size = 0x2000, scoped, tag = 'input window, operand 1, single buffered']
    #allocation5 [shape = 's32[2]{0}', space=sflag, size = 0x8, scoped, tag = 'scoped memory for text_encoder_pallas.1']
    #allocation6 [shape = 's32[2]{0}', space=sflag, size = 0x8, scoped, tag = 'scoped memory for text_encoder_pallas.1']
    #allocation7 [shape = 'u8[4096]{0}', space=vmem, size = 0x1000, scoped, tag = 'input window, operand 2, single buffered']
    #allocation8 [shape = 's32[1]{0}', space=sflag, size = 0x4, scoped, tag = 'scoped memory for text_encoder_pallas.1']
    #allocation9 [shape = 'u8[1024]{0}', space=vmem, size = 0x400, scoped, tag = 'input window, operand 3']
    #allocation10 [shape = 'u8[1024]{0}', space=vmem, size = 0x400, scoped, tag = 'input window, operand 4']
    #allocation11 [shape = 'u8[196608]{0}', space=vmem, size = 0x30000, scoped, tag = 'input window, operand 5']
    #allocation12 [shape = 'u8[3072]{0}', space=vmem, size = 0xc00, scoped, tag = 'input window, operand 6']
    #allocation13 [shape = 'u8[65536]{0}', space=vmem, size = 0x10000, scoped, tag = 'input window, operand 7']
    #allocation14 [shape = 'u8[1024]{0}', space=vmem, size = 0x400, scoped, tag = 'input window, operand 8']
    #allocation15 [shape = 'u8[1024]{0}', space=vmem, size = 0x400, scoped, tag = 'input window, operand 9']
    #allocation16 [shape = 'u8[1024]{0}', space=vmem, size = 0x400, scoped, tag = 'input window, operand 10']
    #allocation17 [shape = 'u8[262144]{0}', space=vmem, size = 0x40000, scoped, tag = 'input window, operand 11']
    #allocation18 [shape = 'u8[4096]{0}', space=vmem, size = 0x1000, scoped, tag = 'input window, operand 12']
    #allocation19 [shape = 'u8[262144]{0}', space=vmem, size = 0x40000, scoped, tag = 'input window, operand 13']
    #allocation20 [shape = 'u8[1024]{0}', space=vmem, size = 0x400, scoped, tag = 'input window, operand 14']
    #allocation21 [shape = 'u8[512]{0}', space=vmem, size = 0x400, scoped, tag = 'input window, operand 15, single buffered']
    #allocation22 [shape = 'u8[512]{0}', space=vmem, size = 0x400, scoped, tag = 'input window, operand 16, single buffered']
    #allocation23 [shape = 's32[1]{0}', space=sflag, size = 0x4, scoped, tag = 'scoped memory for text_encoder_pallas.1']
    #allocation24 [shape = 'u8[32768]{0}', space=vmem, size = 0x8000, scoped, tag = 'input window, operand 17, single buffered']
    #allocation25 [shape = 'u8[1024]{0}', space=vmem, size = 0x400, scoped, tag = 'output window, operand 0, single buffered']
    %23 = vsyncpa [#allocation5], 0
    %24 = vsyncpa [#allocation8], 0
    %25 = vsyncpa [#allocation23], 0
    %26 = vsyncpa [#allocation6], 0
    loop: start=0, step=1, limit=4
    $region2: #{text_encoder_pallas.1} parent=1 // loop_pre_header
      _
    $region3: #{text_encoder_pallas.1} parent=1 // loop_header
      %s28 = sphi 0, %s32
      %p29 = scmp.ge.s32.totalorder %s28, 4
      %s35 = sphi 0, %s47
      %s36 = sphi 0, %s43
      %s37 = sphi 0, %s35
      %s38 = sphi 0, %s36
      %s39 = sphi 0, %s37
      %s40 = sphi 0, %s38
      %s50 = sphi 0, %s52
      %s53 = sphi 0, %s50
      %s54 = sphi 0, %s53
      %s70 = sphi 0, %s54
      %s74 = sphi 0, %s74
      %s76 = sphi 0, %s74
      %s77 = sphi 0, %s76
      %s91 = sphi 0, %s77
      %s97 = sphi 0, %s99
      %s100 = sphi 0, %s97
      %s101 = sphi 0, %s100
      %s117 = sphi 0, %s101
      %s123 = sphi 0, %s125
      %s126 = sphi 0, %s123
      %s127 = sphi 0, %s126
      %s143 = sphi 0, %s127
      %s149 = sphi 0, %s151
      %s152 = sphi 0, %s149
      %s153 = sphi 0, %s152
      %s169 = sphi 0, %s153
      %s175 = sphi 0, %s177
      %s178 = sphi 0, %s175
      %s179 = sphi 0, %s178
      %s195 = sphi 0, %s179
      %s201 = sphi 0, %s203
      %s204 = sphi 0, %s201
      %s205 = sphi 0, %s204
      %s221 = sphi 0, %s205
      %s227 = sphi 0, %s229
      %s230 = sphi 0, %s227
      %s231 = sphi 0, %s230
      %s247 = sphi 0, %s231
      %s253 = sphi 0, %s255
      %s256 = sphi 0, %s253
      %s257 = sphi 0, %s256
      %s273 = sphi 0, %s257
      %s279 = sphi 0, %s281
      %s282 = sphi 0, %s279
      %s283 = sphi 0, %s282
      %s299 = sphi 0, %s283
      %s305 = sphi 0, %s307
      %s308 = sphi 0, %s305
      %s309 = sphi 0, %s308
      %s325 = sphi 0, %s309
      %s331 = sphi 0, %s333
      %s334 = sphi 0, %s331
      %s335 = sphi 0, %s334
      %s351 = sphi 0, %s335
      %s357 = sphi 0, %s359
      %s360 = sphi 0, %s357
      %s361 = sphi 0, %s360
      %s377 = sphi 0, %s361
      %s383 = sphi 0, %s385
      %s386 = sphi 0, %s383
      %s387 = sphi 0, %s386
      %s403 = sphi 0, %s387
      %s407 = sphi 0, %s407
      %s409 = sphi 0, %s407
      %s410 = sphi 0, %s409
      %s424 = sphi 0, %s410
      %s428 = sphi 0, %s428
      %s430 = sphi 0, %s428
      %s431 = sphi 0, %s430
      %s445 = sphi 0, %s431
      %s449 = sphi 0, %s449
      %s451 = sphi 0, %s449
      %s452 = sphi 0, %s451
      %s466 = sphi 0, %s452
      %s472 = sphi 0, %s474
      %s475 = sphi 0, %s472
      %s476 = sphi 0, %s475
      %s492 = sphi 0, %s476
    $region4: #{text_encoder_pallas.1} parent=1 // loop_header_branch
      %31 = sbr.rel (%p29) target = $region8
    $region5: #{text_encoder_pallas.1} parent=1 // loop_body
      %s33 = ssub.s32 %s28, 1
      %s34 = ssub.s32 %s28, 2
      %s41 = sadd.s32 1, %s36
      %p42 = scmp.ge.s32.totalorder %s41, 2
      %s43 = scalar_select %p42, 0, %s41
      %s44 = sadd.s32 1, %s35
      %s45 = scalar_select %p42, %s44, %s35
      %p46 = scmp.ge.s32.totalorder %s45, 1
      %s47 = scalar_select %p46, 0, %s45
      %s48 = ssub.s32 %s35, %s47
      %p49 = scmp.eq.s32.totalorder %s48, 0
      %s51 = sadd.s32 %s50, 1
      %s52 = scalar_select %p49, %s50, %s51
      %p55 = pneg %p49
      %p56 = scmp.eq.s32.totalorder %s28, 1
      %p57 = por %p55, %p56
      %p58 = scmp.ne.s32.totalorder %s50, %s53
      %p59 = scmp.eq.s32.totalorder %s28, 0
      %p60 = por %p58, %p59
      %p61 = scmp.ne.s32.totalorder %s50, %s53
      %p62 = scmp.eq.s32.totalorder %s33, 1
      %p63 = por %p61, %p62
      %p64 = scmp.ne.s32.totalorder %s53, %s54
      %p65 = scmp.eq.s32.totalorder %s33, 0
      %p66 = por %p64, %p65
      %p67 = scmp.ne.s32.totalorder %s53, %s54
      %p68 = scmp.eq.s32.totalorder %s34, 1
      %p69 = por %p67, %p68
      %p71 = scmp.ne.s32.totalorder %s54, %s70
      %p72 = scmp.eq.s32.totalorder %s34, 0
      %p73 = por %p71, %p72
      %s75 = sadd.s32 %s74, 1
      %p78 = scmp.eq.s32.totalorder %s28, 1
      %p79 = scmp.ne.s32.totalorder %s74, %s76
      %p80 = scmp.eq.s32.totalorder %s28, 0
      %p81 = por %p79, %p80
      %p82 = scmp.ne.s32.totalorder %s74, %s76
      %p83 = scmp.eq.s32.totalorder %s33, 1
      %p84 = por %p82, %p83
      %p85 = scmp.ne.s32.totalorder %s76, %s77
      %p86 = scmp.eq.s32.totalorder %s33, 0
      %p87 = por %p85, %p86
      %p88 = scmp.ne.s32.totalorder %s76, %s77
      %p89 = scmp.eq.s32.totalorder %s34, 1
      %p90 = por %p88, %p89
      %p92 = scmp.ne.s32.totalorder %s77, %s91
      %p93 = scmp.eq.s32.totalorder %s34, 0
      %p94 = por %p92, %p93
      %s95 = ssub.s32 %s36, %s43
      %p96 = scmp.eq.s32.totalorder %s95, 0
      %s98 = sadd.s32 %s97, 1
      %s99 = scalar_select %p96, %s97, %s98
      %p102 = pneg %p96
      %p103 = scmp.eq.s32.totalorder %s28, 1
      %p104 = por %p102, %p103
      %p105 = scmp.ne.s32.totalorder %s97, %s100
      %p106 = scmp.eq.s32.totalorder %s28, 0
      %p107 = por %p105, %p106
      %p108 = scmp.ne.s32.totalorder %s97, %s100
      %p109 = scmp.eq.s32.totalorder %s33, 1
      %p110 = por %p108, %p109
      %p111 = scmp.ne.s32.totalorder %s100, %s101
      %p112 = scmp.eq.s32.totalorder %s33, 0
      %p113 = por %p111, %p112
      %p114 = scmp.ne.s32.totalorder %s100, %s101
      %p115 = scmp.eq.s32.totalorder %s34, 1
      %p116 = por %p114, %p115
      %p118 = scmp.ne.s32.totalorder %s101, %s117
      %p119 = scmp.eq.s32.totalorder %s34, 0
      %p120 = por %p118, %p119
      %s121 = ssub.s32 %s36, %s43
      %p122 = scmp.eq.s32.totalorder %s121, 0
      %s124 = sadd.s32 %s123, 1
      %s125 = scalar_select %p122, %s123, %s124
      %p128 = pneg %p122
      %p129 = scmp.eq.s32.totalorder %s28, 1
      %p130 = por %p128, %p129
      %p131 = scmp.ne.s32.totalorder %s123, %s126
      %p132 = scmp.eq.s32.totalorder %s28, 0
      %p133 = por %p131, %p132
      %p134 = scmp.ne.s32.totalorder %s123, %s126
      %p135 = scmp.eq.s32.totalorder %s33, 1
      %p136 = por %p134, %p135
      %p137 = scmp.ne.s32.totalorder %s126, %s127
      %p138 = scmp.eq.s32.totalorder %s33, 0
      %p139 = por %p137, %p138
      %p140 = scmp.ne.s32.totalorder %s126, %s127
      %p141 = scmp.eq.s32.totalorder %s34, 1
      %p142 = por %p140, %p141
      %p144 = scmp.ne.s32.totalorder %s127, %s143
      %p145 = scmp.eq.s32.totalorder %s34, 0
      %p146 = por %p144, %p145
      %s147 = ssub.s32 %s36, %s43
      %p148 = scmp.eq.s32.totalorder %s147, 0
      %s150 = sadd.s32 %s149, 1
      %s151 = scalar_select %p148, %s149, %s150
      %p154 = pneg %p148
      %p155 = scmp.eq.s32.totalorder %s28, 1
      %p156 = por %p154, %p155
      %p157 = scmp.ne.s32.totalorder %s149, %s152
      %p158 = scmp.eq.s32.totalorder %s28, 0
      %p159 = por %p157, %p158
      %p160 = scmp.ne.s32.totalorder %s149, %s152
      %p161 = scmp.eq.s32.totalorder %s33, 1
      %p162 = por %p160, %p161
      %p163 = scmp.ne.s32.totalorder %s152, %s153
      %p164 = scmp.eq.s32.totalorder %s33, 0
      %p165 = por %p163, %p164
      %p166 = scmp.ne.s32.totalorder %s152, %s153
      %p167 = scmp.eq.s32.totalorder %s34, 1
      %p168 = por %p166, %p167
      %p170 = scmp.ne.s32.totalorder %s153, %s169
      %p171 = scmp.eq.s32.totalorder %s34, 0
      %p172 = por %p170, %p171
      %s173 = ssub.s32 %s36, %s43
      %p174 = scmp.eq.s32.totalorder %s173, 0
      %s176 = sadd.s32 %s175, 1
      %s177 = scalar_select %p174, %s175, %s176
      %p180 = pneg %p174
      %p181 = scmp.eq.s32.totalorder %s28, 1
      %p182 = por %p180, %p181
      %p183 = scmp.ne.s32.totalorder %s175, %s178
      %p184 = scmp.eq.s32.totalorder %s28, 0
      %p185 = por %p183, %p184
      %p186 = scmp.ne.s32.totalorder %s175, %s178
      %p187 = scmp.eq.s32.totalorder %s33, 1
      %p188 = por %p186, %p187
      %p189 = scmp.ne.s32.totalorder %s178, %s179
      %p190 = scmp.eq.s32.totalorder %s33, 0
      %p191 = por %p189, %p190
      %p192 = scmp.ne.s32.totalorder %s178, %s179
      %p193 = scmp.eq.s32.totalorder %s34, 1
      %p194 = por %p192, %p193
      %p196 = scmp.ne.s32.totalorder %s179, %s195
      %p197 = scmp.eq.s32.totalorder %s34, 0
      %p198 = por %p196, %p197
      %s199 = ssub.s32 %s36, %s43
      %p200 = scmp.eq.s32.totalorder %s199, 0
      %s202 = sadd.s32 %s201, 1
      %s203 = scalar_select %p200, %s201, %s202
      %p206 = pneg %p200
      %p207 = scmp.eq.s32.totalorder %s28, 1
      %p208 = por %p206, %p207
      %p209 = scmp.ne.s32.totalorder %s201, %s204
      %p210 = scmp.eq.s32.totalorder %s28, 0
      %p211 = por %p209, %p210
      %p212 = scmp.ne.s32.totalorder %s201, %s204
      %p213 = scmp.eq.s32.totalorder %s33, 1
      %p214 = por %p212, %p213
      %p215 = scmp.ne.s32.totalorder %s204, %s205
      %p216 = scmp.eq.s32.totalorder %s33, 0
      %p217 = por %p215, %p216
      %p218 = scmp.ne.s32.totalorder %s204, %s205
      %p219 = scmp.eq.s32.totalorder %s34, 1
      %p220 = por %p218, %p219
      %p222 = scmp.ne.s32.totalorder %s205, %s221
      %p223 = scmp.eq.s32.totalorder %s34, 0
      %p224 = por %p222, %p223
      %s225 = ssub.s32 %s36, %s43
      %p226 = scmp.eq.s32.totalorder %s225, 0
      %s228 = sadd.s32 %s227, 1
      %s229 = scalar_select %p226, %s227, %s228
      %p232 = pneg %p226
      %p233 = scmp.eq.s32.totalorder %s28, 1
      %p234 = por %p232, %p233
      %p235 = scmp.ne.s32.totalorder %s227, %s230
      %p236 = scmp.eq.s32.totalorder %s28, 0
      %p237 = por %p235, %p236
      %p238 = scmp.ne.s32.totalorder %s227, %s230
      %p239 = scmp.eq.s32.totalorder %s33, 1
      %p240 = por %p238, %p239
      %p241 = scmp.ne.s32.totalorder %s230, %s231
      %p242 = scmp.eq.s32.totalorder %s33, 0
      %p243 = por %p241, %p242
      %p244 = scmp.ne.s32.totalorder %s230, %s231
      %p245 = scmp.eq.s32.totalorder %s34, 1
      %p246 = por %p244, %p245
      %p248 = scmp.ne.s32.totalorder %s231, %s247
      %p249 = scmp.eq.s32.totalorder %s34, 0
      %p250 = por %p248, %p249
      %s251 = ssub.s32 %s36, %s43
      %p252 = scmp.eq.s32.totalorder %s251, 0
      %s254 = sadd.s32 %s253, 1
      %s255 = scalar_select %p252, %s253, %s254
      %p258 = pneg %p252
      %p259 = scmp.eq.s32.totalorder %s28, 1
      %p260 = por %p258, %p259
      %p261 = scmp.ne.s32.totalorder %s253, %s256
      %p262 = scmp.eq.s32.totalorder %s28, 0
      %p263 = por %p261, %p262
      %p264 = scmp.ne.s32.totalorder %s253, %s256
      %p265 = scmp.eq.s32.totalorder %s33, 1
      %p266 = por %p264, %p265
      %p267 = scmp.ne.s32.totalorder %s256, %s257
      %p268 = scmp.eq.s32.totalorder %s33, 0
      %p269 = por %p267, %p268
      %p270 = scmp.ne.s32.totalorder %s256, %s257
      %p271 = scmp.eq.s32.totalorder %s34, 1
      %p272 = por %p270, %p271
      %p274 = scmp.ne.s32.totalorder %s257, %s273
      %p275 = scmp.eq.s32.totalorder %s34, 0
      %p276 = por %p274, %p275
      %s277 = ssub.s32 %s36, %s43
      %p278 = scmp.eq.s32.totalorder %s277, 0
      %s280 = sadd.s32 %s279, 1
      %s281 = scalar_select %p278, %s279, %s280
      %p284 = pneg %p278
      %p285 = scmp.eq.s32.totalorder %s28, 1
      %p286 = por %p284, %p285
      %p287 = scmp.ne.s32.totalorder %s279, %s282
      %p288 = scmp.eq.s32.totalorder %s28, 0
      %p289 = por %p287, %p288
      %p290 = scmp.ne.s32.totalorder %s279, %s282
      %p291 = scmp.eq.s32.totalorder %s33, 1
      %p292 = por %p290, %p291
      %p293 = scmp.ne.s32.totalorder %s282, %s283
      %p294 = scmp.eq.s32.totalorder %s33, 0
      %p295 = por %p293, %p294
      %p296 = scmp.ne.s32.totalorder %s282, %s283
      %p297 = scmp.eq.s32.totalorder %s34, 1
      %p298 = por %p296, %p297
      %p300 = scmp.ne.s32.totalorder %s283, %s299
      %p301 = scmp.eq.s32.totalorder %s34, 0
      %p302 = por %p300, %p301
      %s303 = ssub.s32 %s36, %s43
      %p304 = scmp.eq.s32.totalorder %s303, 0
      %s306 = sadd.s32 %s305, 1
      %s307 = scalar_select %p304, %s305, %s306
      %p310 = pneg %p304
      %p311 = scmp.eq.s32.totalorder %s28, 1
      %p312 = por %p310, %p311
      %p313 = scmp.ne.s32.totalorder %s305, %s308
      %p314 = scmp.eq.s32.totalorder %s28, 0
      %p315 = por %p313, %p314
      %p316 = scmp.ne.s32.totalorder %s305, %s308
      %p317 = scmp.eq.s32.totalorder %s33, 1
      %p318 = por %p316, %p317
      %p319 = scmp.ne.s32.totalorder %s308, %s309
      %p320 = scmp.eq.s32.totalorder %s33, 0
      %p321 = por %p319, %p320
      %p322 = scmp.ne.s32.totalorder %s308, %s309
      %p323 = scmp.eq.s32.totalorder %s34, 1
      %p324 = por %p322, %p323
      %p326 = scmp.ne.s32.totalorder %s309, %s325
      %p327 = scmp.eq.s32.totalorder %s34, 0
      %p328 = por %p326, %p327
      %s329 = ssub.s32 %s36, %s43
      %p330 = scmp.eq.s32.totalorder %s329, 0
      %s332 = sadd.s32 %s331, 1
      %s333 = scalar_select %p330, %s331, %s332
      %p336 = pneg %p330
      %p337 = scmp.eq.s32.totalorder %s28, 1
      %p338 = por %p336, %p337
      %p339 = scmp.ne.s32.totalorder %s331, %s334
      %p340 = scmp.eq.s32.totalorder %s28, 0
      %p341 = por %p339, %p340
      %p342 = scmp.ne.s32.totalorder %s331, %s334
      %p343 = scmp.eq.s32.totalorder %s33, 1
      %p344 = por %p342, %p343
      %p345 = scmp.ne.s32.totalorder %s334, %s335
      %p346 = scmp.eq.s32.totalorder %s33, 0
      %p347 = por %p345, %p346
      %p348 = scmp.ne.s32.totalorder %s334, %s335
      %p349 = scmp.eq.s32.totalorder %s34, 1
      %p350 = por %p348, %p349
      %p352 = scmp.ne.s32.totalorder %s335, %s351
      %p353 = scmp.eq.s32.totalorder %s34, 0
      %p354 = por %p352, %p353
      %s355 = ssub.s32 %s36, %s43
      %p356 = scmp.eq.s32.totalorder %s355, 0
      %s358 = sadd.s32 %s357, 1
      %s359 = scalar_select %p356, %s357, %s358
      %p362 = pneg %p356
      %p363 = scmp.eq.s32.totalorder %s28, 1
      %p364 = por %p362, %p363
      %p365 = scmp.ne.s32.totalorder %s357, %s360
      %p366 = scmp.eq.s32.totalorder %s28, 0
      %p367 = por %p365, %p366
      %p368 = scmp.ne.s32.totalorder %s357, %s360
      %p369 = scmp.eq.s32.totalorder %s33, 1
      %p370 = por %p368, %p369
      %p371 = scmp.ne.s32.totalorder %s360, %s361
      %p372 = scmp.eq.s32.totalorder %s33, 0
      %p373 = por %p371, %p372
      %p374 = scmp.ne.s32.totalorder %s360, %s361
      %p375 = scmp.eq.s32.totalorder %s34, 1
      %p376 = por %p374, %p375
      %p378 = scmp.ne.s32.totalorder %s361, %s377
      %p379 = scmp.eq.s32.totalorder %s34, 0
      %p380 = por %p378, %p379
      %s381 = ssub.s32 %s36, %s43
      %p382 = scmp.eq.s32.totalorder %s381, 0
      %s384 = sadd.s32 %s383, 1
      %s385 = scalar_select %p382, %s383, %s384
      %p388 = pneg %p382
      %p389 = scmp.eq.s32.totalorder %s28, 1
      %p390 = por %p388, %p389
      %p391 = scmp.ne.s32.totalorder %s383, %s386
      %p392 = scmp.eq.s32.totalorder %s28, 0
      %p393 = por %p391, %p392
      %p394 = scmp.ne.s32.totalorder %s383, %s386
      %p395 = scmp.eq.s32.totalorder %s33, 1
      %p396 = por %p394, %p395
      %p397 = scmp.ne.s32.totalorder %s386, %s387
      %p398 = scmp.eq.s32.totalorder %s33, 0
      %p399 = por %p397, %p398
      %p400 = scmp.ne.s32.totalorder %s386, %s387
      %p401 = scmp.eq.s32.totalorder %s34, 1
      %p402 = por %p400, %p401
      %p404 = scmp.ne.s32.totalorder %s387, %s403
      %p405 = scmp.eq.s32.totalorder %s34, 0
      %p406 = por %p404, %p405
      %s408 = sadd.s32 %s407, 1
      %p411 = scmp.eq.s32.totalorder %s28, 1
      %p412 = scmp.ne.s32.totalorder %s407, %s409
      %p413 = scmp.eq.s32.totalorder %s28, 0
      %p414 = por %p412, %p413
      %p415 = scmp.ne.s32.totalorder %s407, %s409
      %p416 = scmp.eq.s32.totalorder %s33, 1
      %p417 = por %p415, %p416
      %p418 = scmp.ne.s32.totalorder %s409, %s410
      %p419 = scmp.eq.s32.totalorder %s33, 0
      %p420 = por %p418, %p419
      %p421 = scmp.ne.s32.totalorder %s409, %s410
      %p422 = scmp.eq.s32.totalorder %s34, 1
      %p423 = por %p421, %p422
      %p425 = scmp.ne.s32.totalorder %s410, %s424
      %p426 = scmp.eq.s32.totalorder %s34, 0
      %p427 = por %p425, %p426
      %s429 = sadd.s32 %s428, 1
      %p432 = scmp.eq.s32.totalorder %s28, 1
      %p433 = scmp.ne.s32.totalorder %s428, %s430
      %p434 = scmp.eq.s32.totalorder %s28, 0
      %p435 = por %p433, %p434
      %p436 = scmp.ne.s32.totalorder %s428, %s430
      %p437 = scmp.eq.s32.totalorder %s33, 1
      %p438 = por %p436, %p437
      %p439 = scmp.ne.s32.totalorder %s430, %s431
      %p440 = scmp.eq.s32.totalorder %s33, 0
      %p441 = por %p439, %p440
      %p442 = scmp.ne.s32.totalorder %s430, %s431
      %p443 = scmp.eq.s32.totalorder %s34, 1
      %p444 = por %p442, %p443
      %p446 = scmp.ne.s32.totalorder %s431, %s445
      %p447 = scmp.eq.s32.totalorder %s34, 0
      %p448 = por %p446, %p447
      %s450 = sadd.s32 %s449, 1
      %p453 = scmp.eq.s32.totalorder %s28, 1
      %p454 = scmp.ne.s32.totalorder %s449, %s451
      %p455 = scmp.eq.s32.totalorder %s28, 0
      %p456 = por %p454, %p455
      %p457 = scmp.ne.s32.totalorder %s449, %s451
      %p458 = scmp.eq.s32.totalorder %s33, 1
      %p459 = por %p457, %p458
      %p460 = scmp.ne.s32.totalorder %s451, %s452
      %p461 = scmp.eq.s32.totalorder %s33, 0
      %p462 = por %p460, %p461
      %p463 = scmp.ne.s32.totalorder %s451, %s452
      %p464 = scmp.eq.s32.totalorder %s34, 1
      %p465 = por %p463, %p464
      %p467 = scmp.ne.s32.totalorder %s452, %s466
      %p468 = scmp.eq.s32.totalorder %s34, 0
      %p469 = por %p467, %p468
      %s470 = ssub.s32 %s35, %s47
      %p471 = scmp.eq.s32.totalorder %s470, 0
      %s473 = sadd.s32 %s472, 1
      %s474 = scalar_select %p471, %s472, %s473
      %p477 = pneg %p471
      %p478 = scmp.eq.s32.totalorder %s28, 1
      %p479 = por %p477, %p478
      %p480 = scmp.ne.s32.totalorder %s472, %s475
      %p481 = scmp.eq.s32.totalorder %s28, 0
      %p482 = por %p480, %p481
      %p483 = scmp.ne.s32.totalorder %s472, %s475
      %p484 = scmp.eq.s32.totalorder %s33, 1
      %p485 = por %p483, %p484
      %p486 = scmp.ne.s32.totalorder %s475, %s476
      %p487 = scmp.eq.s32.totalorder %s33, 0
      %p488 = por %p486, %p487
      %p489 = scmp.ne.s32.totalorder %s475, %s476
      %p490 = scmp.eq.s32.totalorder %s34, 1
      %p491 = por %p489, %p490
      %p493 = scmp.ne.s32.totalorder %s476, %s492
      %p494 = scmp.eq.s32.totalorder %s34, 0
      %p495 = por %p493, %p494
      %p496 = scmp.le.s32.totalorder 1, %s28
      %p497 = scmp.lt.s32.totalorder %s28, 3
      %p498 = pnand %p496, %p497
      %p499 = pneg %p498
      // Predicated region
      $region9: #{text_encoder_pallas.1} parent=5 // pred_check
        _
      $region10: #{text_encoder_pallas.1} parent=5 // pred_check_branch
        %501 = sbr.rel (%p498) target = $region12
      $region11: #{text_encoder_pallas.1} parent=5 // pred_region
        %s502 = ssub.s32 %s28, 1
        // Predicated region
        $region13: #{text_encoder_pallas.1} parent=11 // pred_check
          %p503 = pneg %p66
        $region14: #{text_encoder_pallas.1} parent=11 // pred_check_branch
          %505 = sbr.rel (%p503) target = $region16
        $region15: #{text_encoder_pallas.1} parent=11 // pred_region
          %s506 = smul.u32 2, %s37
          %s508 = ssub.s32 256, 256
          %509 = vsyncadd [#allocation5], %s508
          %s510 = smul.addr %s506, 128
          %s511 = scalar_lea.hbm %s1, %s510
          %s512 = sshll.u32 [#allocation4], 4
          %s513 = int_to_ptr.vmem [resolvable:$true] %s512
          %518 = dma.hbm_to_vmem [thread:$0]  %s511, 256, %s513, [#allocation5], 128, 128, 8
        $region16: #{text_encoder_pallas.1} parent=11 // pred_fallthru
          _
        // Predicated region
        $region17: #{text_encoder_pallas.1} parent=11 // pred_check
          %p519 = pneg %p87
        $region18: #{text_encoder_pallas.1} parent=11 // pred_check_branch
          %521 = sbr.rel (%p519) target = $region20
        $region19: #{text_encoder_pallas.1} parent=11 // pred_region
          %s523 = ssub.s32 128, 128
          %524 = vsyncadd [#allocation8], %s523
          %s526 = sshll.u32 [#allocation7], 4
          %s527 = int_to_ptr.vmem [resolvable:$true] %s526
          %529 = dma.hbm_to_vmem [thread:$0]  %s2, 128, %s527, [#allocation8]
        $region20: #{text_encoder_pallas.1} parent=11 // pred_fallthru
          _
        // Predicated region
        $region21: #{text_encoder_pallas.1} parent=11 // pred_check
          %p530 = pneg %p420
        $region22: #{text_encoder_pallas.1} parent=11 // pred_check_branch
          %532 = sbr.rel (%p530) target = $region24
        $region23: #{text_encoder_pallas.1} parent=11 // pred_region
          %s534 = ssub.s32 16, 16
          %535 = vsyncadd [#allocation8], %s534
          %s537 = sshll.u32 [#allocation21], 4
          %s538 = int_to_ptr.vmem [resolvable:$true] %s537
          %540 = dma.hbm_to_vmem [thread:$0]  %s15, 16, %s538, [#allocation8]
        $region24: #{text_encoder_pallas.1} parent=11 // pred_fallthru
          _
        // Predicated region
        $region25: #{text_encoder_pallas.1} parent=11 // pred_check
          %p541 = pneg %p441
        $region26: #{text_encoder_pallas.1} parent=11 // pred_check_branch
          %543 = sbr.rel (%p541) target = $region28
        $region27: #{text_encoder_pallas.1} parent=11 // pred_region
          %s545 = ssub.s32 16, 16
          %546 = vsyncadd [#allocation23], %s545
          %s548 = sshll.u32 [#allocation22], 4
          %s549 = int_to_ptr.vmem [resolvable:$true] %s548
          %551 = dma.hbm_to_vmem [thread:$0]  %s16, 16, %s549, [#allocation23]
        $region28: #{text_encoder_pallas.1} parent=11 // pred_fallthru
          _
        // Predicated region
        $region29: #{text_encoder_pallas.1} parent=11 // pred_check
          %p552 = pneg %p462
        $region30: #{text_encoder_pallas.1} parent=11 // pred_check_branch
          %554 = sbr.rel (%p552) target = $region32
        $region31: #{text_encoder_pallas.1} parent=11 // pred_region
          %s556 = ssub.s32 1024, 1024
          %557 = vsyncadd [#allocation23], %s556
          %s558 = sshll.u32 [#allocation24], 4
          %s559 = int_to_ptr.vmem [resolvable:$true] %s558
          %564 = dma.hbm_to_vmem [thread:$0]  %s17, 1024, %s559, [#allocation23], 64, 64, 4
        $region32: #{text_encoder_pallas.1} parent=11 // pred_fallthru
          _
      $region12: #{text_encoder_pallas.1} parent=5 // pred_fallthru
        _
      %p565 = scmp.lt.s32.totalorder %s28, 2
      // Predicated region
      $region33: #{text_encoder_pallas.1} parent=5 // pred_check
        %p566 = pneg %p565
      $region34: #{text_encoder_pallas.1} parent=5 // pred_check_branch
        %568 = sbr.rel (%p566) target = $region36
      $region35: #{text_encoder_pallas.1} parent=5 // pred_region
        // Predicated region
        $region37: #{text_encoder_pallas.1} parent=35 // pred_check
          %p569 = pneg %p107
        $region38: #{text_encoder_pallas.1} parent=35 // pred_check_branch
          %571 = sbr.rel (%p569) target = $region40
        $region39: #{text_encoder_pallas.1} parent=35 // pred_region
          %s572 = sand.u32 %s28, 1
          %s573 = scalar_lea.sflag [#allocation5], %s572
          %s574 = sand.u32 %s97, 1
          %s575 = scalar_lea.vmem [#allocation9], %s574
          %s577 = ssub.s32 16, 16
          %578 = vsyncadd %s573, %s577
          %s579 = smul.addr %s36, 16
          %s580 = scalar_lea.hbm %s3, %s579
          %s582 = sshll.u32 %s575, 4
          %s583 = int_to_ptr.vmem [resolvable:$true] %s582
          %585 = dma.hbm_to_vmem [thread:$0]  %s580, 16, %s583, %s573
        $region40: #{text_encoder_pallas.1} parent=35 // pred_fallthru
          _
        // Predicated region
        $region41: #{text_encoder_pallas.1} parent=35 // pred_check
          %p586 = pneg %p133
        $region42: #{text_encoder_pallas.1} parent=35 // pred_check_branch
          %588 = sbr.rel (%p586) target = $region44
        $region43: #{text_encoder_pallas.1} parent=35 // pred_region
          %s589 = sand.u32 %s28, 1
          %s590 = scalar_lea.sflag [#allocation5], %s589
          %s591 = sand.u32 %s123, 1
          %s592 = scalar_lea.vmem [#allocation10], %s591
          %s594 = ssub.s32 16, 16
          %595 = vsyncadd %s590, %s594
          %s596 = smul.addr %s36, 16
          %s597 = scalar_lea.hbm %s4, %s596
          %s599 = sshll.u32 %s592, 4
          %s600 = int_to_ptr.vmem [resolvable:$true] %s599
          %602 = dma.hbm_to_vmem [thread:$0]  %s597, 16, %s600, %s590
        $region44: #{text_encoder_pallas.1} parent=35 // pred_fallthru
          _
        // Predicated region
        $region45: #{text_encoder_pallas.1} parent=35 // pred_check
          %p603 = pneg %p159
        $region46: #{text_encoder_pallas.1} parent=35 // pred_check_branch
          %605 = sbr.rel (%p603) target = $region48
        $region47: #{text_encoder_pallas.1} parent=35 // pred_region
          %s606 = sand.u32 %s28, 1
          %s607 = scalar_lea.sflag [#allocation5], %s606
          %s608 = sand.u32 %s149, 1
          %s609 = smul.addr %s608, 192
          %s610 = scalar_lea.vmem [#allocation11], %s609
          %s612 = ssub.s32 3072, 3072
          %613 = vsyncadd %s607, %s612
          %s614 = smul.addr %s36, 48
          %s615 = smul.addr %s614, 64
          %s616 = scalar_lea.hbm %s5, %s615
          %s617 = sshll.u32 %s610, 4
          %s618 = int_to_ptr.vmem [resolvable:$true] %s617
          %623 = dma.hbm_to_vmem [thread:$0]  %s616, 3072, %s618, %s607, 192, 192, 12
        $region48: #{text_encoder_pallas.1} parent=35 // pred_fallthru
          _
        // Predicated region
        $region49: #{text_encoder_pallas.1} parent=35 // pred_check
          %p624 = pneg %p185
        $region50: #{text_encoder_pallas.1} parent=35 // pred_check_branch
          %626 = sbr.rel (%p624) target = $region52
        $region51: #{text_encoder_pallas.1} parent=35 // pred_region
          %s627 = sand.u32 %s28, 1
          %s628 = scalar_lea.sflag [#allocation5], %s627
          %s629 = sand.u32 %s175, 1
          %s630 = smul.addr %s629, 3
          %s631 = scalar_lea.vmem [#allocation12], %s630
          %s633 = ssub.s32 48, 48
          %634 = vsyncadd %s628, %s633
          %s635 = smul.addr %s36, 3
          %s636 = smul.addr %s635, 16
          %s637 = scalar_lea.hbm %s6, %s636
          %s639 = sshll.u32 %s631, 4
          %s640 = int_to_ptr.vmem [resolvable:$true] %s639
          %642 = dma.hbm_to_vmem [thread:$0]  %s637, 48, %s640, %s628
        $region52: #{text_encoder_pallas.1} parent=35 // pred_fallthru
          _
        // Predicated region
        $region53: #{text_encoder_pallas.1} parent=35 // pred_check
          %p643 = pneg %p211
        $region54: #{text_encoder_pallas.1} parent=35 // pred_check_branch
          %645 = sbr.rel (%p643) target = $region56
        $region55: #{text_encoder_pallas.1} parent=35 // pred_region
          %s646 = sand.u32 %s28, 1
          %s647 = scalar_lea.sflag [#allocation5], %s646
          %s648 = sand.u32 %s201, 1
          %s649 = smul.addr %s648, 64
          %s650 = scalar_lea.vmem [#allocation13], %s649
          %s652 = ssub.s32 1024, 1024
          %653 = vsyncadd %s647, %s652
          %s654 = smul.addr %s36, 16
          %s655 = smul.addr %s654, 64
          %s656 = scalar_lea.hbm %s7, %s655
          %s657 = sshll.u32 %s650, 4
          %s658 = int_to_ptr.vmem [resolvable:$true] %s657
          %663 = dma.hbm_to_vmem [thread:$0]  %s656, 1024, %s658, %s647, 64, 64, 4
        $region56: #{text_encoder_pallas.1} parent=35 // pred_fallthru
          _
        // Predicated region
        $region57: #{text_encoder_pallas.1} parent=35 // pred_check
          %p664 = pneg %p237
        $region58: #{text_encoder_pallas.1} parent=35 // pred_check_branch
          %666 = sbr.rel (%p664) target = $region60
        $region59: #{text_encoder_pallas.1} parent=35 // pred_region
          %s667 = sand.u32 %s28, 1
          %s668 = scalar_lea.sflag [#allocation5], %s667
          %s669 = sand.u32 %s227, 1
          %s670 = scalar_lea.vmem [#allocation14], %s669
          %s672 = ssub.s32 16, 16
          %673 = vsyncadd %s668, %s672
          %s674 = smul.addr %s36, 16
          %s675 = scalar_lea.hbm %s8, %s674
          %s677 = sshll.u32 %s670, 4
          %s678 = int_to_ptr.vmem [resolvable:$true] %s677
          %680 = dma.hbm_to_vmem [thread:$0]  %s675, 16, %s678, %s668
        $region60: #{text_encoder_pallas.1} parent=35 // pred_fallthru
          _
        // Predicated region
        $region61: #{text_encoder_pallas.1} parent=35 // pred_check
          %p681 = pneg %p263
        $region62: #{text_encoder_pallas.1} parent=35 // pred_check_branch
          %683 = sbr.rel (%p681) target = $region64
        $region63: #{text_encoder_pallas.1} parent=35 // pred_region
          %s684 = sand.u32 %s28, 1
          %s685 = scalar_lea.sflag [#allocation5], %s684
          %s686 = sand.u32 %s253, 1
          %s687 = scalar_lea.vmem [#allocation15], %s686
          %s689 = ssub.s32 16, 16
          %690 = vsyncadd %s685, %s689
          %s691 = smul.addr %s36, 16
          %s692 = scalar_lea.hbm %s9, %s691
          %s694 = sshll.u32 %s687, 4
          %s695 = int_to_ptr.vmem [resolvable:$true] %s694
          %697 = dma.hbm_to_vmem [thread:$0]  %s692, 16, %s695, %s685
        $region64: #{text_encoder_pallas.1} parent=35 // pred_fallthru
          _
        // Predicated region
        $region65: #{text_encoder_pallas.1} parent=35 // pred_check
          %p698 = pneg %p289
        $region66: #{text_encoder_pallas.1} parent=35 // pred_check_branch
          %700 = sbr.rel (%p698) target = $region68
        $region67: #{text_encoder_pallas.1} parent=35 // pred_region
          %s701 = sand.u32 %s28, 1
          %s702 = scalar_lea.sflag [#allocation5], %s701
          %s703 = sand.u32 %s279, 1
          %s704 = scalar_lea.vmem [#allocation16], %s703
          %s706 = ssub.s32 16, 16
          %707 = vsyncadd %s702, %s706
          %s708 = smul.addr %s36, 16
          %s709 = scalar_lea.hbm %s10, %s708
          %s711 = sshll.u32 %s704, 4
          %s712 = int_to_ptr.vmem [resolvable:$true] %s711
          %714 = dma.hbm_to_vmem [thread:$0]  %s709, 16, %s712, %s702
        $region68: #{text_encoder_pallas.1} parent=35 // pred_fallthru
          _
        // Predicated region
        $region69: #{text_encoder_pallas.1} parent=35 // pred_check
          %p715 = pneg %p315
        $region70: #{text_encoder_pallas.1} parent=35 // pred_check_branch
          %717 = sbr.rel (%p715) target = $region72
        $region71: #{text_encoder_pallas.1} parent=35 // pred_region
          %s718 = sand.u32 %s28, 1
          %s719 = scalar_lea.sflag [#allocation5], %s718
          %s720 = sand.u32 %s305, 1
          %s721 = smul.addr %s720, 256
          %s722 = scalar_lea.vmem [#allocation17], %s721
          %s724 = ssub.s32 4096, 4096
          %725 = vsyncadd %s719, %s724
          %s726 = smul.addr %s36, 64
          %s727 = smul.addr %s726, 64
          %s728 = scalar_lea.hbm %s11, %s727
          %s729 = sshll.u32 %s722, 4
          %s730 = int_to_ptr.vmem [resolvable:$true] %s729
          %735 = dma.hbm_to_vmem [thread:$0]  %s728, 4096, %s730, %s719, 256, 256, 16
        $region72: #{text_encoder_pallas.1} parent=35 // pred_fallthru
          _
        // Predicated region
        $region73: #{text_encoder_pallas.1} parent=35 // pred_check
          %p736 = pneg %p341
        $region74: #{text_encoder_pallas.1} parent=35 // pred_check_branch
          %738 = sbr.rel (%p736) target = $region76
        $region75: #{text_encoder_pallas.1} parent=35 // pred_region
          %s739 = sand.u32 %s28, 1
          %s740 = scalar_lea.sflag [#allocation5], %s739
          %s741 = sand.u32 %s331, 1
          %s742 = smul.addr %s741, 4
          %s743 = scalar_lea.vmem [#allocation18], %s742
          %s745 = ssub.s32 64, 64
          %746 = vsyncadd %s740, %s745
          %s747 = smul.addr %s36, 4
          %s748 = smul.addr %s747, 16
          %s749 = scalar_lea.hbm %s12, %s748
          %s751 = sshll.u32 %s743, 4
          %s752 = int_to_ptr.vmem [resolvable:$true] %s751
          %754 = dma.hbm_to_vmem [thread:$0]  %s749, 64, %s752, %s740
        $region76: #{text_encoder_pallas.1} parent=35 // pred_fallthru
          _
        // Predicated region
        $region77: #{text_encoder_pallas.1} parent=35 // pred_check
          %p755 = pneg %p367
        $region78: #{text_encoder_pallas.1} parent=35 // pred_check_branch
          %757 = sbr.rel (%p755) target = $region80
        $region79: #{text_encoder_pallas.1} parent=35 // pred_region
          %s758 = sand.u32 %s28, 1
          %s759 = scalar_lea.sflag [#allocation5], %s758
          %s760 = sand.u32 %s357, 1
          %s761 = smul.addr %s760, 256
          %s762 = scalar_lea.vmem [#allocation19], %s761
          %s764 = ssub.s32 4096, 4096
          %765 = vsyncadd %s759, %s764
          %s766 = smul.addr %s36, 64
          %s767 = smul.addr %s766, 64
          %s768 = scalar_lea.hbm %s13, %s767
          %s769 = sshll.u32 %s762, 4
          %s770 = int_to_ptr.vmem [resolvable:$true] %s769
          %775 = dma.hbm_to_vmem [thread:$0]  %s768, 4096, %s770, %s759, 64, 64, 4
        $region80: #{text_encoder_pallas.1} parent=35 // pred_fallthru
          _
        // Predicated region
        $region81: #{text_encoder_pallas.1} parent=35 // pred_check
          %p776 = pneg %p393
        $region82: #{text_encoder_pallas.1} parent=35 // pred_check_branch
          %778 = sbr.rel (%p776) target = $region84
        $region83: #{text_encoder_pallas.1} parent=35 // pred_region
          %s779 = sand.u32 %s28, 1
          %s780 = scalar_lea.sflag [#allocation5], %s779
          %s781 = sand.u32 %s383, 1
          %s782 = scalar_lea.vmem [#allocation20], %s781
          %s784 = ssub.s32 16, 16
          %785 = vsyncadd %s780, %s784
          %s786 = smul.addr %s36, 16
          %s787 = scalar_lea.hbm %s14, %s786
          %s789 = sshll.u32 %s782, 4
          %s790 = int_to_ptr.vmem [resolvable:$true] %s789
          %792 = dma.hbm_to_vmem [thread:$0]  %s787, 16, %s790, %s780
        $region84: #{text_encoder_pallas.1} parent=35 // pred_fallthru
          _
      $region36: #{text_encoder_pallas.1} parent=5 // pred_fallthru
        _
      %p793 = scmp.le.s32.totalorder 1, %s28
      %p794 = scmp.lt.s32.totalorder %s28, 3
      %p795 = pnand %p793, %p794
      %p796 = pneg %p795
      // Predicated region
      $region85: #{text_encoder_pallas.1} parent=5 // pred_check
        _
      $region86: #{text_encoder_pallas.1} parent=5 // pred_check_branch
        %798 = sbr.rel (%p795) target = $region88
      $region87: #{text_encoder_pallas.1} parent=5 // pred_region
        %s799 = ssub.s32 %s28, 1
        // Predicated region
        $region89: #{text_encoder_pallas.1} parent=87 // pred_check
          %p800 = pneg %p66
        $region90: #{text_encoder_pallas.1} parent=87 // pred_check_branch
          %802 = sbr.rel (%p800) target = $region92
        $region91: #{text_encoder_pallas.1} parent=87 // pred_region
          %803 = dma.done [#allocation5], 256
        $region92: #{text_encoder_pallas.1} parent=87 // pred_fallthru
          _
        // Predicated region
        $region93: #{text_encoder_pallas.1} parent=87 // pred_check
          %p804 = pneg %p87
        $region94: #{text_encoder_pallas.1} parent=87 // pred_check_branch
          %806 = sbr.rel (%p804) target = $region96
        $region95: #{text_encoder_pallas.1} parent=87 // pred_region
          %807 = dma.done [#allocation8], 128
        $region96: #{text_encoder_pallas.1} parent=87 // pred_fallthru
          _
        %s808 = sand.u32 %s33, 1
        %s809 = scalar_lea.sflag [#allocation5], %s808
        %s810 = sand.u32 %s100, 1
        %s811 = scalar_lea.vmem [#allocation9], %s810
        // Predicated region
        $region97: #{text_encoder_pallas.1} parent=87 // pred_check
          %p812 = pneg %p113
        $region98: #{text_encoder_pallas.1} parent=87 // pred_check_branch
          %814 = sbr.rel (%p812) target = $region100
        $region99: #{text_encoder_pallas.1} parent=87 // pred_region
          %815 = dma.done %s809, 16
        $region100: #{text_encoder_pallas.1} parent=87 // pred_fallthru
          _
        %s816 = sand.u32 %s33, 1
        %s817 = scalar_lea.sflag [#allocation5], %s816
        %s818 = sand.u32 %s126, 1
        %s819 = scalar_lea.vmem [#allocation10], %s818
        // Predicated region
        $region101: #{text_encoder_pallas.1} parent=87 // pred_check
          %p820 = pneg %p139
        $region102: #{text_encoder_pallas.1} parent=87 // pred_check_branch
          %822 = sbr.rel (%p820) target = $region104
        $region103: #{text_encoder_pallas.1} parent=87 // pred_region
          %823 = dma.done %s817, 16
        $region104: #{text_encoder_pallas.1} parent=87 // pred_fallthru
          _
        %s824 = sand.u32 %s33, 1
        %s825 = scalar_lea.sflag [#allocation5], %s824
        %s826 = sand.u32 %s152, 1
        %s827 = smul.addr %s826, 192
        %s828 = scalar_lea.vmem [#allocation11], %s827
        // Predicated region
        $region105: #{text_encoder_pallas.1} parent=87 // pred_check
          %p829 = pneg %p165
        $region106: #{text_encoder_pallas.1} parent=87 // pred_check_branch
          %831 = sbr.rel (%p829) target = $region108
        $region107: #{text_encoder_pallas.1} parent=87 // pred_region
          %832 = dma.done %s825, 3072
        $region108: #{text_encoder_pallas.1} parent=87 // pred_fallthru
          _
        %s833 = sand.u32 %s33, 1
        %s834 = scalar_lea.sflag [#allocation5], %s833
        %s835 = sand.u32 %s178, 1
        %s836 = smul.addr %s835, 3
        %s837 = scalar_lea.vmem [#allocation12], %s836
        // Predicated region
        $region109: #{text_encoder_pallas.1} parent=87 // pred_check
          %p838 = pneg %p191
        $region110: #{text_encoder_pallas.1} parent=87 // pred_check_branch
          %840 = sbr.rel (%p838) target = $region112
        $region111: #{text_encoder_pallas.1} parent=87 // pred_region
          %841 = dma.done %s834, 48
        $region112: #{text_encoder_pallas.1} parent=87 // pred_fallthru
          _
        %s842 = sand.u32 %s33, 1
        %s843 = scalar_lea.sflag [#allocation5], %s842
        %s844 = sand.u32 %s204, 1
        %s845 = smul.addr %s844, 64
        %s846 = scalar_lea.vmem [#allocation13], %s845
        // Predicated region
        $region113: #{text_encoder_pallas.1} parent=87 // pred_check
          %p847 = pneg %p217
        $region114: #{text_encoder_pallas.1} parent=87 // pred_check_branch
          %849 = sbr.rel (%p847) target = $region116
        $region115: #{text_encoder_pallas.1} parent=87 // pred_region
          %850 = dma.done %s843, 1024
        $region116: #{text_encoder_pallas.1} parent=87 // pred_fallthru
          _
        %s851 = sand.u32 %s33, 1
        %s852 = scalar_lea.sflag [#allocation5], %s851
        %s853 = sand.u32 %s230, 1
        %s854 = scalar_lea.vmem [#allocation14], %s853
        // Predicated region
        $region117: #{text_encoder_pallas.1} parent=87 // pred_check
          %p855 = pneg %p243
        $region118: #{text_encoder_pallas.1} parent=87 // pred_check_branch
          %857 = sbr.rel (%p855) target = $region120
        $region119: #{text_encoder_pallas.1} parent=87 // pred_region
          %858 = dma.done %s852, 16
        $region120: #{text_encoder_pallas.1} parent=87 // pred_fallthru
          _
        %s859 = sand.u32 %s33, 1
        %s860 = scalar_lea.sflag [#allocation5], %s859
        %s861 = sand.u32 %s256, 1
        %s862 = scalar_lea.vmem [#allocation15], %s861
        // Predicated region
        $region121: #{text_encoder_pallas.1} parent=87 // pred_check
          %p863 = pneg %p269
        $region122: #{text_encoder_pallas.1} parent=87 // pred_check_branch
          %865 = sbr.rel (%p863) target = $region124
        $region123: #{text_encoder_pallas.1} parent=87 // pred_region
          %866 = dma.done %s860, 16
        $region124: #{text_encoder_pallas.1} parent=87 // pred_fallthru
          _
        %s867 = sand.u32 %s33, 1
        %s868 = scalar_lea.sflag [#allocation5], %s867
        %s869 = sand.u32 %s282, 1
        %s870 = scalar_lea.vmem [#allocation16], %s869
        // Predicated region
        $region125: #{text_encoder_pallas.1} parent=87 // pred_check
          %p871 = pneg %p295
        $region126: #{text_encoder_pallas.1} parent=87 // pred_check_branch
          %873 = sbr.rel (%p871) target = $region128
        $region127: #{text_encoder_pallas.1} parent=87 // pred_region
          %874 = dma.done %s868, 16
        $region128: #{text_encoder_pallas.1} parent=87 // pred_fallthru
          _
        %s875 = sand.u32 %s33, 1
        %s876 = scalar_lea.sflag [#allocation5], %s875
        %s877 = sand.u32 %s308, 1
        %s878 = smul.addr %s877, 256
        %s879 = scalar_lea.vmem [#allocation17], %s878
        // Predicated region
        $region129: #{text_encoder_pallas.1} parent=87 // pred_check
          %p880 = pneg %p321
        $region130: #{text_encoder_pallas.1} parent=87 // pred_check_branch
          %882 = sbr.rel (%p880) target = $region132
        $region131: #{text_encoder_pallas.1} parent=87 // pred_region
          %883 = dma.done %s876, 4096
        $region132: #{text_encoder_pallas.1} parent=87 // pred_fallthru
          _
        %s884 = sand.u32 %s33, 1
        %s885 = scalar_lea.sflag [#allocation5], %s884
        %s886 = sand.u32 %s334, 1
        %s887 = smul.addr %s886, 4
        %s888 = scalar_lea.vmem [#allocation18], %s887
        // Predicated region
        $region133: #{text_encoder_pallas.1} parent=87 // pred_check
          %p889 = pneg %p347
        $region134: #{text_encoder_pallas.1} parent=87 // pred_check_branch
          %891 = sbr.rel (%p889) target = $region136
        $region135: #{text_encoder_pallas.1} parent=87 // pred_region
          %892 = dma.done %s885, 64
        $region136: #{text_encoder_pallas.1} parent=87 // pred_fallthru
          _
        %s893 = sand.u32 %s33, 1
        %s894 = scalar_lea.sflag [#allocation5], %s893
        %s895 = sand.u32 %s360, 1
        %s896 = smul.addr %s895, 256
        %s897 = scalar_lea.vmem [#allocation19], %s896
        // Predicated region
        $region137: #{text_encoder_pallas.1} parent=87 // pred_check
          %p898 = pneg %p373
        $region138: #{text_encoder_pallas.1} parent=87 // pred_check_branch
          %900 = sbr.rel (%p898) target = $region140
        $region139: #{text_encoder_pallas.1} parent=87 // pred_region
          %901 = dma.done %s894, 4096
        $region140: #{text_encoder_pallas.1} parent=87 // pred_fallthru
          _
        %s902 = sand.u32 %s33, 1
        %s903 = scalar_lea.sflag [#allocation5], %s902
        %s904 = sand.u32 %s386, 1
        %s905 = scalar_lea.vmem [#allocation20], %s904
        // Predicated region
        $region141: #{text_encoder_pallas.1} parent=87 // pred_check
          %p906 = pneg %p399
        $region142: #{text_encoder_pallas.1} parent=87 // pred_check_branch
          %908 = sbr.rel (%p906) target = $region144
        $region143: #{text_encoder_pallas.1} parent=87 // pred_region
          %909 = dma.done %s903, 16
        $region144: #{text_encoder_pallas.1} parent=87 // pred_fallthru
          _
        // Predicated region
        $region145: #{text_encoder_pallas.1} parent=87 // pred_check
          %p910 = pneg %p420
        $region146: #{text_encoder_pallas.1} parent=87 // pred_check_branch
          %912 = sbr.rel (%p910) target = $region148
        $region147: #{text_encoder_pallas.1} parent=87 // pred_region
          %913 = dma.done [#allocation8], 16
        $region148: #{text_encoder_pallas.1} parent=87 // pred_fallthru
          _
        // Predicated region
        $region149: #{text_encoder_pallas.1} parent=87 // pred_check
          %p914 = pneg %p441
        $region150: #{text_encoder_pallas.1} parent=87 // pred_check_branch
          %916 = sbr.rel (%p914) target = $region152
        $region151: #{text_encoder_pallas.1} parent=87 // pred_region
          %917 = dma.done [#allocation23], 16
        $region152: #{text_encoder_pallas.1} parent=87 // pred_fallthru
          _
        // Predicated region
        $region153: #{text_encoder_pallas.1} parent=87 // pred_check
          %p918 = pneg %p462
        $region154: #{text_encoder_pallas.1} parent=87 // pred_check_branch
          %920 = sbr.rel (%p918) target = $region156
        $region155: #{text_encoder_pallas.1} parent=87 // pred_region
          %921 = dma.done [#allocation23], 1024
        $region156: #{text_encoder_pallas.1} parent=87 // pred_fallthru
          _
        %p922 = pneg %p66
        %p923 = pneg %p63
        %p924 = pneg %p87
        %p925 = pneg %p84
        %s926 = sand.u32 %s33, 1
        %s927 = scalar_lea.sflag [#allocation5], %s926
        %s928 = sand.u32 %s100, 1
        %s929 = scalar_lea.vmem [#allocation9], %s928
        %p930 = pneg %p113
        %p931 = pneg %p110
        %s932 = sand.u32 %s33, 1
        %s933 = scalar_lea.sflag [#allocation5], %s932
        %s934 = sand.u32 %s126, 1
        %s935 = scalar_lea.vmem [#allocation10], %s934
        %p936 = pneg %p139
        %p937 = pneg %p136
        %s938 = sand.u32 %s33, 1
        %s939 = scalar_lea.sflag [#allocation5], %s938
        %s940 = sand.u32 %s152, 1
        %s941 = smul.addr %s940, 192
        %s942 = scalar_lea.vmem [#allocation11], %s941
        %p943 = pneg %p165
        %p944 = pneg %p162
        %s945 = sand.u32 %s33, 1
        %s946 = scalar_lea.sflag [#allocation5], %s945
        %s947 = sand.u32 %s178, 1
        %s948 = smul.addr %s947, 3
        %s949 = scalar_lea.vmem [#allocation12], %s948
        %p950 = pneg %p191
        %p951 = pneg %p188
        %s952 = sand.u32 %s33, 1
        %s953 = scalar_lea.sflag [#allocation5], %s952
        %s954 = sand.u32 %s204, 1
        %s955 = smul.addr %s954, 64
        %s956 = scalar_lea.vmem [#allocation13], %s955
        %p957 = pneg %p217
        %p958 = pneg %p214
        %s959 = sand.u32 %s33, 1
        %s960 = scalar_lea.sflag [#allocation5], %s959
        %s961 = sand.u32 %s230, 1
        %s962 = scalar_lea.vmem [#allocation14], %s961
        %p963 = pneg %p243
        %p964 = pneg %p240
        %s965 = sand.u32 %s33, 1
        %s966 = scalar_lea.sflag [#allocation5], %s965
        %s967 = sand.u32 %s256, 1
        %s968 = scalar_lea.vmem [#allocation15], %s967
        %p969 = pneg %p269
        %p970 = pneg %p266
        %s971 = sand.u32 %s33, 1
        %s972 = scalar_lea.sflag [#allocation5], %s971
        %s973 = sand.u32 %s282, 1
        %s974 = scalar_lea.vmem [#allocation16], %s973
        %p975 = pneg %p295
        %p976 = pneg %p292
        %s977 = sand.u32 %s33, 1
        %s978 = scalar_lea.sflag [#allocation5], %s977
        %s979 = sand.u32 %s308, 1
        %s980 = smul.addr %s979, 256
        %s981 = scalar_lea.vmem [#allocation17], %s980
        %p982 = pneg %p321
        %p983 = pneg %p318
        %s984 = sand.u32 %s33, 1
        %s985 = scalar_lea.sflag [#allocation5], %s984
        %s986 = sand.u32 %s334, 1
        %s987 = smul.addr %s986, 4
        %s988 = scalar_lea.vmem [#allocation18], %s987
        %p989 = pneg %p347
        %p990 = pneg %p344
        %s991 = sand.u32 %s33, 1
        %s992 = scalar_lea.sflag [#allocation5], %s991
        %s993 = sand.u32 %s360, 1
        %s994 = smul.addr %s993, 256
        %s995 = scalar_lea.vmem [#allocation19], %s994
        %p996 = pneg %p373
        %p997 = pneg %p370
        %s998 = sand.u32 %s33, 1
        %s999 = scalar_lea.sflag [#allocation5], %s998
        %s1000 = sand.u32 %s386, 1
        %s1001 = scalar_lea.vmem [#allocation20], %s1000
        %p1002 = pneg %p399
        %p1003 = pneg %p396
        %p1004 = pneg %p420
        %p1005 = pneg %p417
        %p1006 = pneg %p441
        %p1007 = pneg %p438
        %p1008 = pneg %p462
        %p1009 = pneg %p459
        %p1010 = pneg %p488
        %p1011 = pneg %p485
        %s1012 = smul.u32 2, %s37
        %p1014 = scmp.eq.s32.totalorder %s38, 0
        // Predicated region
        $region157: #{text_encoder_pallas.1} parent=87 // pred_check
          %p1015 = pneg %p1014
        $region158: #{text_encoder_pallas.1} parent=87 // pred_check_branch
          %1017 = sbr.rel (%p1015) target = $region160
        $region159: #{text_encoder_pallas.1} parent=87 // pred_region
          %s1018 = smul.u32 %s37, 2
          %s1019 = smul.u32 %s1018, 8
          %s1020 = smul.addr %s1019, 16
          %s1021 = scalar_lea.hbm %s0, %s1020
          // Predicated region
          $region161: #{text_encoder_pallas.1} parent=159 // pred_check
            _
          $region162: #{text_encoder_pallas.1} parent=159 // pred_check_branch
            %1023 = sbr.rel target = $region164
          $region163: #{text_encoder_pallas.1} parent=159 // pred_region
            %1024 = sst [smem:[#allocation28]] [#allocation27]
            %1025 = sst [smem:[#allocation29]] [#allocation26]
          $region164: #{text_encoder_pallas.1} parent=159 // pred_fallthru
            _
          %1027 = shalt.err (0)
          %s1029 = sshll.u32 [#allocation2], 4
          %s1030 = int_to_ptr.vmem [resolvable:$true] %s1029
          %1032 = dma.hbm_to_vmem [thread:$0]  %s1021, 256, %s1030, [#allocation3]
          %s1033 = smul.u32 2, 8
          %s1034 = smul.u32 %s1033, 1
          %s1035 = sshll.u32 %s1034, 4
          %1036 = dma.done [#allocation3], %s1035
        $region160: #{text_encoder_pallas.1} parent=87 // pred_fallthru
          _
        %v1037 = vld [vmem:[#allocation2] sm:$0xff]
        %v1038 = vld [vmem:[#allocation2 + $0x8] sm:$0xff]
        %v1039 = vld [vmem:[%s811] sm:$0x1]
        %v1040 = vld [vmem:[%s819] sm:$0x1]
        %1041 = vadd.xlane.f32.xlu0 %v1037
        %v1042 = vpop.xlane.xlu0 %1041
        %1043 = vadd.xlane.f32.xlu0 %v1038
        %v1044 = vpop.xlane.xlu0 %1043
        %v1045 = vrcp.pop 128.0
        %v1046 = vmul.f32 %v1042, %v1045
        %v1047 = vmul.f32 %v1044, %v1045
        %v1048 = vsub.f32 %v1037, %v1046
        %v1049 = vsub.f32 %v1038, %v1047
        %v1050 = vmul.f32 %v1048, %v1048
        %v1051 = vmul.f32 %v1049, %v1049
        %1052 = vadd.xlane.f32.xlu0 %v1050
        %v1053 = vpop.xlane.xlu0 %1052
        %1054 = vadd.xlane.f32.xlu0 %v1051
        %v1055 = vpop.xlane.xlu0 %1054
        %v1056 = vmul.f32 %v1053, %v1045
        %v1057 = vmul.f32 %v1055, %v1045
        %v1058 = vadd.f32 %v1056, 1e-05
        %v1059 = vadd.f32 %v1057, 1e-05
        %v1060 = vrsqrt.pop %v1058
        %v1061 = vrsqrt.pop %v1059
        %v1062 = vmul.f32 %v1048, %v1060
        %v1063 = vmul.f32 %v1049, %v1061
        %v1065 = vlaneseq
        %v1066 = vshrl.u32 %v1065, 7
        %v1067 = vsub.s32 0, %v1066
        %v1068 = vrot.slane %v1039, %v1067
        %v1070 = vmul.f32 %v1062, %v1068
        %v1071 = vmul.f32 %v1063, %v1068
        %v1073 = vlaneseq
        %v1074 = vshrl.u32 %v1073, 7
        %v1075 = vsub.s32 0, %v1074
        %v1076 = vrot.slane %v1040, %v1075
        %v1078 = vadd.f32 %v1070, %v1076
        %v1079 = vadd.f32 %v1071, %v1076
        %v1080 = vld [vmem:[%s828] sm:$0xff]
        %v1081 = vld [vmem:[%s828 + $0x8] sm:$0xf]
        %v1082 = vld [vmem:[%s828 + $0xc] sm:$0xff]
        %v1083 = vld [vmem:[%s828 + $0x14] sm:$0xf]
        %v1084 = vld [vmem:[%s828 + $0x18] sm:$0xff]
        %v1085 = vld [vmem:[%s828 + $0x20] sm:$0xf]
        %v1086 = vld [vmem:[%s828 + $0x24] sm:$0xff]
        %v1087 = vld [vmem:[%s828 + $0x2c] sm:$0xf]
        %v1088 = vld [vmem:[%s828 + $0x30] sm:$0xff]
        %v1089 = vld [vmem:[%s828 + $0x38] sm:$0xf]
        %v1090 = vld [vmem:[%s828 + $0x3c] sm:$0xff]
        %v1091 = vld [vmem:[%s828 + $0x44] sm:$0xf]
        %v1092 = vld [vmem:[%s828 + $0x48] sm:$0xff]
        %v1093 = vld [vmem:[%s828 + $0x50] sm:$0xf]
        %v1094 = vld [vmem:[%s828 + $0x54] sm:$0xff]
        %v1095 = vld [vmem:[%s828 + $0x5c] sm:$0xf]
        %v1096 = vld [vmem:[%s828 + $0x60] sm:$0xff]
        %v1097 = vld [vmem:[%s828 + $0x68] sm:$0xf]
        %v1098 = vld [vmem:[%s828 + $0x6c] sm:$0xff]
        %v1099 = vld [vmem:[%s828 + $0x74] sm:$0xf]
        %v1100 = vld [vmem:[%s828 + $0x78] sm:$0xff]
        %v1101 = vld [vmem:[%s828 + $0x80] sm:$0xf]
        %v1102 = vld [vmem:[%s828 + $0x84] sm:$0xff]
        %v1103 = vld [vmem:[%s828 + $0x8c] sm:$0xf]
        %v1104 = vld [vmem:[%s828 + $0x90] sm:$0xff]
        %v1105 = vld [vmem:[%s828 + $0x98] sm:$0xf]
        %v1106 = vld [vmem:[%s828 + $0x9c] sm:$0xff]
        %v1107 = vld [vmem:[%s828 + $0xa4] sm:$0xf]
        %v1108 = vld [vmem:[%s828 + $0xa8] sm:$0xff]
        %v1109 = vld [vmem:[%s828 + $0xb0] sm:$0xf]
        %v1110 = vld [vmem:[%s828 + $0xb4] sm:$0xff]
        %v1111 = vld [vmem:[%s828 + $0xbc] sm:$0xf]
        %v1112 = vld [vmem:[%s837] sm:$0x7]
        %v1113 = vpack.c.bf16 %v1079, %v1078
        %v1115 = vlaneseq
        %v1116 = vshrl.u32 %v1115, 7
        %v1117 = vsub.s32 0, %v1116
        %v1118 = vrot.slane %v1112, %v1117
        %v1119 = vlaneseq
        %v1120 = vshrl.u32 %v1119, 7
        %v1121 = vsub.s32 1, %v1120
        %v1122 = vrot.slane %v1112, %v1121
        %v1123 = vlaneseq
        %v1124 = vshrl.u32 %v1123, 7
        %v1125 = vsub.s32 2, %v1124
        %v1126 = vrot.slane %v1112, %v1125
        %v1162 = vunpack.c.l.b16 %v1080
        %v1163 = vunpack.c.h.b16 %v1080
        %v1164 = vunpack.c.l.b16 %v1081
        %v1165 = vunpack.c.l.b16 %v1082
        %v1166 = vunpack.c.h.b16 %v1082
        %v1167 = vunpack.c.l.b16 %v1083
        %v1168 = vunpack.c.l.b16 %v1084
        %v1169 = vunpack.c.h.b16 %v1084
        %v1170 = vunpack.c.l.b16 %v1085
        %v1171 = vunpack.c.l.b16 %v1086
        %v1172 = vunpack.c.h.b16 %v1086
        %v1173 = vunpack.c.l.b16 %v1087
        %v1174 = vunpack.c.l.b16 %v1088
        %v1175 = vunpack.c.h.b16 %v1088
        %v1176 = vunpack.c.l.b16 %v1089
        %v1177 = vunpack.c.l.b16 %v1090
        %v1178 = vunpack.c.h.b16 %v1090
        %v1179 = vunpack.c.l.b16 %v1091
        %v1180 = vunpack.c.l.b16 %v1092
        %v1181 = vunpack.c.h.b16 %v1092
        %v1182 = vunpack.c.l.b16 %v1093
        %v1183 = vunpack.c.l.b16 %v1094
        %v1184 = vunpack.c.h.b16 %v1094
        %v1185 = vunpack.c.l.b16 %v1095
        %v1186 = vunpack.c.l.b16 %v1096
        %v1187 = vunpack.c.h.b16 %v1096
        %v1188 = vunpack.c.l.b16 %v1097
        %v1189 = vunpack.c.l.b16 %v1098
        %v1190 = vunpack.c.h.b16 %v1098
        %v1191 = vunpack.c.l.b16 %v1099
        %v1192 = vunpack.c.l.b16 %v1100
        %v1193 = vunpack.c.h.b16 %v1100
        %v1194 = vunpack.c.l.b16 %v1101
        %v1195 = vunpack.c.l.b16 %v1102
        %v1196 = vunpack.c.h.b16 %v1102
        %v1197 = vunpack.c.l.b16 %v1103
        %v1198 = vunpack.c.l.b16 %v1104
        %v1199 = vunpack.c.h.b16 %v1104
        %v1200 = vunpack.c.l.b16 %v1105
        %v1201 = vunpack.c.l.b16 %v1106
        %v1202 = vunpack.c.h.b16 %v1106
        %v1203 = vunpack.c.l.b16 %v1107
        %v1204 = vunpack.c.l.b16 %v1108
        %v1205 = vunpack.c.h.b16 %v1108
        %v1206 = vunpack.c.l.b16 %v1109
        %v1207 = vunpack.c.l.b16 %v1110
        %v1208 = vunpack.c.h.b16 %v1110
        %v1209 = vunpack.c.l.b16 %v1111
        %v1210 = vpack.c.b16 %v1165, %v1162
        %v1211 = vpack.c.b16 %v1166, %v1163
        %v1212 = vpack.c.b16 %v1167, %v1164
        %v1213 = vpack.c.b16 %v1171, %v1168
        %v1214 = vpack.c.b16 %v1172, %v1169
        %v1215 = vpack.c.b16 %v1173, %v1170
        %v1216 = vpack.c.b16 %v1177, %v1174
        %v1217 = vpack.c.b16 %v1178, %v1175
        %v1218 = vpack.c.b16 %v1179, %v1176
        %v1219 = vpack.c.b16 %v1183, %v1180
        %v1220 = vpack.c.b16 %v1184, %v1181
        %v1221 = vpack.c.b16 %v1185, %v1182
        %v1222 = vpack.c.b16 %v1189, %v1186
        %v1223 = vpack.c.b16 %v1190, %v1187
        %v1224 = vpack.c.b16 %v1191, %v1188
        %v1225 = vpack.c.b16 %v1195, %v1192
        %v1226 = vpack.c.b16 %v1196, %v1193
        %v1227 = vpack.c.b16 %v1197, %v1194
        %v1228 = vpack.c.b16 %v1201, %v1198
        %v1229 = vpack.c.b16 %v1202, %v1199
        %v1230 = vpack.c.b16 %v1203, %v1200
        %v1231 = vpack.c.b16 %v1207, %v1204
        %v1232 = vpack.c.b16 %v1208, %v1205
        %v1233 = vpack.c.b16 %v1209, %v1206
        %1258 = vmatprep.subr.bf16.mxu0 %v1211
        %1259 = vmatpush1.bf16.msra.mxu0 %v1210
        %1260 = vmatprep.subr.bf16.mxu0 %v1214
        %1261 = vmatpush1.bf16.msra.mxu0 %v1213
        %1262 = vmatprep.subr.bf16.mxu0 %v1217
        %1263 = vmatpush1.bf16.msra.mxu0 %v1216
        %1264 = vmatprep.subr.bf16.mxu0 %v1220
        %1265 = vmatpush1.bf16.msra.mxu0 %v1219
        %1266 = vmatprep.subr.bf16.mxu0 %v1223
        %1267 = vmatpush1.bf16.msra.mxu0 %v1222
        %1268 = vmatprep.subr.bf16.mxu0 %v1226
        %1269 = vmatpush1.bf16.msra.mxu0 %v1225
        %1270 = vmatprep.subr.bf16.mxu0 %v1229
        %1271 = vmatpush1.bf16.msra.mxu0 %v1228
        %1272 = vmatprep.subr.bf16.mxu0 %v1232
        %1273 = vmatpush1.bf16.msra.mxu0 %v1231
        %1274 = vmatprep.subr.bf16.mxu0 0
        %1275 = vmatpush1.bf16.msra.mxu0 0
        %1276 = vmatprep.subr.bf16.mxu0 0
        %1277 = vmatpush1.bf16.msra.mxu0 0
        %1278 = vmatprep.subr.bf16.mxu0 0
        %1279 = vmatpush1.bf16.msra.mxu0 0
        %1280 = vmatprep.subr.bf16.mxu0 0
        %1281 = vmatpush1.bf16.msra.mxu0 0
        %1282 = vmatprep.subr.bf16.mxu0 0
        %1283 = vmatpush1.bf16.msra.mxu0 0
        %1284 = vmatprep.subr.bf16.mxu0 0
        %1285 = vmatpush1.bf16.msra.mxu0 0
        %1286 = vmatprep.subr.bf16.mxu0 0
        %1287 = vmatpush1.bf16.msra.mxu0 0
        %1288 = vmatprep.subr.bf16.mxu0 0
        %1289 = vmatpush1.bf16.msra.mxu0 0
        %1290 = vmatprep.mubr.bf16.mxu0 0
        %1291 = vmatmul.mubr.bf16.gmra.mrb[0].mxu0 %v1113
        %v1292 = vpop.f32.mrb[0].mxu0
        %v1293 = vadd.f32 %v1118, %v1292
        %v1294 = vpop.f32.mrb[0].mxu0
        %v1295 = vadd.f32 %v1122, %v1294
        %v1296 = vpop.f32.mrb[0].mxu0
        %v1297 = vadd.f32 %v1118, %v1296
        %v1298 = vpop.f32.mrb[0].mxu0
        %v1299 = vadd.f32 %v1122, %v1298
        %1300 = vdwg.mxu0
        %1301 = vmatprep.subr.bf16.mxu0 0
        %1302 = vmatpush1.bf16.msra.mxu0 %v1212
        %1303 = vmatprep.subr.bf16.mxu0 0
        %1304 = vmatpush1.bf16.msra.mxu0 %v1215
        %1305 = vmatprep.subr.bf16.mxu0 0
        %1306 = vmatpush1.bf16.msra.mxu0 %v1218
        %1307 = vmatprep.subr.bf16.mxu0 0
        %1308 = vmatpush1.bf16.msra.mxu0 %v1221
        %1309 = vmatprep.subr.bf16.mxu0 0
        %1310 = vmatpush1.bf16.msra.mxu0 %v1224
        %1311 = vmatprep.subr.bf16.mxu0 0
        %1312 = vmatpush1.bf16.msra.mxu0 %v1227
        %1313 = vmatprep.subr.bf16.mxu0 0
        %1314 = vmatpush1.bf16.msra.mxu0 %v1230
        %1315 = vmatprep.subr.bf16.mxu0 0
        %1316 = vmatpush1.bf16.msra.mxu0 %v1233
        %1317 = vmatprep.subr.bf16.mxu0 0
        %1318 = vmatpush1.bf16.msra.mxu0 0
        %1319 = vmatprep.subr.bf16.mxu0 0
        %1320 = vmatpush1.bf16.msra.mxu0 0
        %1321 = vmatprep.subr.bf16.mxu0 0
        %1322 = vmatpush1.bf16.msra.mxu0 0
        %1323 = vmatprep.subr.bf16.mxu0 0
        %1324 = vmatpush1.bf16.msra.mxu0 0
        %1325 = vmatprep.subr.bf16.mxu0 0
        %1326 = vmatpush1.bf16.msra.mxu0 0
        %1327 = vmatprep.subr.bf16.mxu0 0
        %1328 = vmatpush1.bf16.msra.mxu0 0
        %1329 = vmatprep.subr.bf16.mxu0 0
        %1330 = vmatpush1.bf16.msra.mxu0 0
        %1331 = vmatprep.subr.bf16.mxu0 0
        %1332 = vmatpush1.bf16.msra.mxu0 0
        %1333 = vmatprep.mubr.bf16.mxu0 0
        %1334 = vmatmul.mubr.bf16.gmra.mrb[0].mxu0 %v1113
        %v1335 = vpop.f32.mrb[0].mxu0
        %v1336 = vadd.f32 %v1126, %v1335
        %v1337 = vpop.f32.mrb[0].mxu0
        %v1338 = vpop.f32.mrb[0].mxu0
        %v1339 = vadd.f32 %v1126, %v1338
        %v1340 = vpop.f32.mrb[0].mxu0
        %1341 = vdwg.mxu0
        %v1342 = vpack.c.bf16 %v1295, %v1295
        %v1343 = vpack.c.bf16 %v1299, %v1299
        %v1344 = vpack.c.bf16 %v1336, %v1336
        %v1345 = vpack.c.bf16 %v1339, %v1339
        %v1346 = vld [vmem:[#allocation7] sm:$0xff]
        %v1347 = vlaneseq
        %v1348 = vand.u32 %v1347, 127
        %vm1349 = vcmp.ge.s32.totalorder %v1348, 0
        %vm1350 = vcmp.lt.s32.totalorder %v1348, 32
        %vm1351 = vmand %vm1349, %vm1350
        %v1352 = vsel %vm1351, 1, 0
        %v1353 = vcvt.s32.f32 %v1352
        %v1354 = vmul.f32 %v1293, %v1353
        %v1355 = vmul.f32 %v1297, %v1353
        %v1356 = vpack.c.bf16 %v1354, %v1354
        %v1357 = vpack.c.bf16 %v1355, %v1355
        %1358 = vmatprep.subr.bf16.mxu0 0
        %1359 = vmatpush1.bf16.xpose.msra.mxu0 %v1342
        %1360 = vmatprep.subr.bf16.mxu0 0
        %1361 = vmatpush1.bf16.xpose.msra.mxu0 0
        %1362 = vmatprep.subr.bf16.mxu0 0
        %1363 = vmatpush1.bf16.xpose.msra.mxu0 0
        %1364 = vmatprep.subr.bf16.mxu0 0
        %1365 = vmatpush1.bf16.xpose.msra.mxu0 0
        %1366 = vmatprep.subr.bf16.mxu0 0
        %1367 = vmatpush1.bf16.xpose.msra.mxu0 0
        %1368 = vmatprep.subr.bf16.mxu0 0
        %1369 = vmatpush1.bf16.xpose.msra.mxu0 0
        %1370 = vmatprep.subr.bf16.mxu0 0
        %1371 = vmatpush1.bf16.xpose.msra.mxu0 0
        %1372 = vmatprep.subr.bf16.mxu0 0
        %1373 = vmatpush1.bf16.xpose.msra.mxu0 0
        %1374 = vmatprep.subr.bf16.mxu0 0
        %1375 = vmatpush1.bf16.xpose.msra.mxu0 0
        %1376 = vmatprep.subr.bf16.mxu0 0
        %1377 = vmatpush1.bf16.xpose.msra.mxu0 0
        %1378 = vmatprep.subr.bf16.mxu0 0
        %1379 = vmatpush1.bf16.xpose.msra.mxu0 0
        %1380 = vmatprep.subr.bf16.mxu0 0
        %1381 = vmatpush1.bf16.xpose.msra.mxu0 0
        %1382 = vmatprep.subr.bf16.mxu0 0
        %1383 = vmatpush1.bf16.xpose.msra.mxu0 0
        %1384 = vmatprep.subr.bf16.mxu0 0
        %1385 = vmatpush1.bf16.xpose.msra.mxu0 0
        %1386 = vmatprep.subr.bf16.mxu0 0
        %1387 = vmatpush1.bf16.xpose.msra.mxu0 0
        %1388 = vmatprep.subr.bf16.mxu0 0
        %1389 = vmatpush1.bf16.xpose.msra.mxu0 0
        %1390 = vmatprep.mubr.bf16.mxu0 0
        %1391 = vmatmul.mubr.bf16.gmra.mrb[0].mxu0 %v1356
        %v1392 = vpop.f32.mrb[0].mxu0
        %v1393 = vadd.f32 %v1346, %v1392
        %v1394 = vpop.f32.mrb[0].mxu0
        %v1395 = vpop.f32.mrb[0].mxu0
        %v1396 = vpop.f32.mrb[0].mxu0
        %1397 = vdwg.mxu0
        %1398 = vmatprep.subr.bf16.mxu0 0
        %1399 = vmatpush1.bf16.xpose.msra.mxu0 %v1343
        %1400 = vmatprep.subr.bf16.mxu0 0
        %1401 = vmatpush1.bf16.xpose.msra.mxu0 0
        %1402 = vmatprep.subr.bf16.mxu0 0
        %1403 = vmatpush1.bf16.xpose.msra.mxu0 0
        %1404 = vmatprep.subr.bf16.mxu0 0
        %1405 = vmatpush1.bf16.xpose.msra.mxu0 0
        %1406 = vmatprep.subr.bf16.mxu0 0
        %1407 = vmatpush1.bf16.xpose.msra.mxu0 0
        %1408 = vmatprep.subr.bf16.mxu0 0
        %1409 = vmatpush1.bf16.xpose.msra.mxu0 0
        %1410 = vmatprep.subr.bf16.mxu0 0
        %1411 = vmatpush1.bf16.xpose.msra.mxu0 0
        %1412 = vmatprep.subr.bf16.mxu0 0
        %1413 = vmatpush1.bf16.xpose.msra.mxu0 0
        %1414 = vmatprep.subr.bf16.mxu0 0
        %1415 = vmatpush1.bf16.xpose.msra.mxu0 0
        %1416 = vmatprep.subr.bf16.mxu0 0
        %1417 = vmatpush1.bf16.xpose.msra.mxu0 0
        %1418 = vmatprep.subr.bf16.mxu0 0
        %1419 = vmatpush1.bf16.xpose.msra.mxu0 0
        %1420 = vmatprep.subr.bf16.mxu0 0
        %1421 = vmatpush1.bf16.xpose.msra.mxu0 0
        %1422 = vmatprep.subr.bf16.mxu0 0
        %1423 = vmatpush1.bf16.xpose.msra.mxu0 0
        %1424 = vmatprep.subr.bf16.mxu0 0
        %1425 = vmatpush1.bf16.xpose.msra.mxu0 0
        %1426 = vmatprep.subr.bf16.mxu0 0
        %1427 = vmatpush1.bf16.xpose.msra.mxu0 0
        %1428 = vmatprep.subr.bf16.mxu0 0
        %1429 = vmatpush1.bf16.xpose.msra.mxu0 0
        %1430 = vmatprep.mubr.bf16.mxu0 0
        %1431 = vmatmul.mubr.bf16.gmra.mrb[0].mxu0 %v1357
        %v1432 = vpop.f32.mrb[0].mxu0
        %v1433 = vadd.f32 %v1346, %v1432
        %v1434 = vpop.f32.mrb[0].mxu0
        %v1435 = vpop.f32.mrb[0].mxu0
        %v1436 = vpop.f32.mrb[0].mxu0
        %1437 = vdwg.mxu0
        %vm1438 = vcmask 64512
        %v1439 = vsel %vm1438, %v1393, -inf
        %1440 = vmax.xlane.f32.xlu0 %v1439
        %v1441 = vpop.xlane.xlu0 %1440
        %v1442 = vsel %vm1438, %v1433, -inf
        %1443 = vmax.xlane.f32.xlu0 %v1442
        %v1444 = vpop.xlane.xlu0 %1443
        %v1445 = vsub.f32 %v1393, %v1441
        %v1446 = vsub.f32 %v1433, %v1444
        %v1447 = vmul.f32 %v1445, 1.442695
        %v1448 = vpow.pop %v1447
        %v1449 = vmul.f32 %v1446, 1.442695
        %v1450 = vpow.pop %v1449
        %v1451 = vsel %vm1438, %v1448, 0.0
        %1452 = vadd.xlane.f32.xlu0 %v1451
        %v1453 = vpop.xlane.xlu0 %1452
        %v1454 = vsel %vm1438, %v1450, 0.0
        %1455 = vadd.xlane.f32.xlu0 %v1454
        %v1456 = vpop.xlane.xlu0 %1455
        %v1457 = vrcp.pop %v1453
        %v1458 = vrcp.pop %v1456
        %v1459 = vmul.f32 %v1448, %v1457
        %v1460 = vmul.f32 %v1450, %v1458
        %v1461 = vpack.c.bf16 %v1459, %v1459
        %v1462 = vpack.c.bf16 %v1460, %v1460
        %v1464 = vsel %vm1438, %v1461, 0
        %vm1466 = vcmask 1043456
        %v1468 = vsel %vm1466, %v1344, 0
        %1470 = vmatprep.subr.bf16.mxu0 0
        %1471 = vmatpush1.bf16.msra.mxu0 %v1468
        %1472 = vmatprep.subr.bf16.mxu0 0
        %1473 = vmatpush1.bf16.msra.mxu0 0
        %1474 = vmatprep.subr.bf16.mxu0 0
        %1475 = vmatpush1.bf16.msra.mxu0 0
        %1476 = vmatprep.subr.bf16.mxu0 0
        %1477 = vmatpush1.bf16.msra.mxu0 0
        %1478 = vmatprep.subr.bf16.mxu0 0
        %1479 = vmatpush1.bf16.msra.mxu0 0
        %1480 = vmatprep.subr.bf16.mxu0 0
        %1481 = vmatpush1.bf16.msra.mxu0 0
        %1482 = vmatprep.subr.bf16.mxu0 0
        %1483 = vmatpush1.bf16.msra.mxu0 0
        %1484 = vmatprep.subr.bf16.mxu0 0
        %1485 = vmatpush1.bf16.msra.mxu0 0
        %1486 = vmatprep.subr.bf16.mxu0 0
        %1487 = vmatpush1.bf16.msra.mxu0 0
        %1488 = vmatprep.subr.bf16.mxu0 0
        %1489 = vmatpush1.bf16.msra.mxu0 0
        %1490 = vmatprep.subr.bf16.mxu0 0
        %1491 = vmatpush1.bf16.msra.mxu0 0
        %1492 = vmatprep.subr.bf16.mxu0 0
        %1493 = vmatpush1.bf16.msra.mxu0 0
        %1494 = vmatprep.subr.bf16.mxu0 0
        %1495 = vmatpush1.bf16.msra.mxu0 0
        %1496 = vmatprep.subr.bf16.mxu0 0
        %1497 = vmatpush1.bf16.msra.mxu0 0
        %1498 = vmatprep.subr.bf16.mxu0 0
        %1499 = vmatpush1.bf16.msra.mxu0 0
        %1500 = vmatprep.subr.bf16.mxu0 0
        %1501 = vmatpush1.bf16.msra.mxu0 0
        %1502 = vmatprep.mubr.bf16.mxu0 0
        %1503 = vmatmul.mubr.bf16.gmra.mrb[0].mxu0 %v1464
        %v1504 = vpop.f32.mrb[0].mxu0
        %v1505 = vadd.f32 0.0, %v1504
        %v1506 = vpop.f32.mrb[0].mxu0
        %v1507 = vpop.f32.mrb[0].mxu0
        %v1508 = vpop.f32.mrb[0].mxu0
        %1509 = vdwg.mxu0
        %v1511 = vsel %vm1438, %v1462, 0
        %v1514 = vsel %vm1466, %v1345, 0
        %1516 = vmatprep.subr.bf16.mxu0 0
        %1517 = vmatpush1.bf16.msra.mxu0 %v1514
        %1518 = vmatprep.subr.bf16.mxu0 0
        %1519 = vmatpush1.bf16.msra.mxu0 0
        %1520 = vmatprep.subr.bf16.mxu0 0
        %1521 = vmatpush1.bf16.msra.mxu0 0
        %1522 = vmatprep.subr.bf16.mxu0 0
        %1523 = vmatpush1.bf16.msra.mxu0 0
        %1524 = vmatprep.subr.bf16.mxu0 0
        %1525 = vmatpush1.bf16.msra.mxu0 0
        %1526 = vmatprep.subr.bf16.mxu0 0
        %1527 = vmatpush1.bf16.msra.mxu0 0
        %1528 = vmatprep.subr.bf16.mxu0 0
        %1529 = vmatpush1.bf16.msra.mxu0 0
        %1530 = vmatprep.subr.bf16.mxu0 0
        %1531 = vmatpush1.bf16.msra.mxu0 0
        %1532 = vmatprep.subr.bf16.mxu0 0
        %1533 = vmatpush1.bf16.msra.mxu0 0
        %1534 = vmatprep.subr.bf16.mxu0 0
        %1535 = vmatpush1.bf16.msra.mxu0 0
        %1536 = vmatprep.subr.bf16.mxu0 0
        %1537 = vmatpush1.bf16.msra.mxu0 0
        %1538 = vmatprep.subr.bf16.mxu0 0
        %1539 = vmatpush1.bf16.msra.mxu0 0
        %1540 = vmatprep.subr.bf16.mxu0 0
        %1541 = vmatpush1.bf16.msra.mxu0 0
        %1542 = vmatprep.subr.bf16.mxu0 0
        %1543 = vmatpush1.bf16.msra.mxu0 0
        %1544 = vmatprep.subr.bf16.mxu0 0
        %1545 = vmatpush1.bf16.msra.mxu0 0
        %1546 = vmatprep.subr.bf16.mxu0 0
        %1547 = vmatpush1.bf16.msra.mxu0 0
        %1548 = vmatprep.mubr.bf16.mxu0 0
        %1549 = vmatmul.mubr.bf16.gmra.mrb[0].mxu0 %v1511
        %v1550 = vpop.f32.mrb[0].mxu0
        %v1551 = vadd.f32 0.0, %v1550
        %v1552 = vpop.f32.mrb[0].mxu0
        %v1553 = vpop.f32.mrb[0].mxu0
        %v1554 = vpop.f32.mrb[0].mxu0
        %1555 = vdwg.mxu0
        %v1556 = vmul.f32 %v1505, %v1353
        %v1557 = vmul.f32 %v1551, %v1353
        %v1558 = vadd.f32 %v1556, 0.0
        %v1559 = vadd.f32 %v1557, 0.0
        %vm1560 = vcmp.ge.s32.totalorder %v1348, 32
        %vm1561 = vcmp.lt.s32.totalorder %v1348, 64
        %vm1562 = vmand %vm1560, %vm1561
        %v1563 = vsel %vm1562, 1, 0
        %v1564 = vcvt.s32.f32 %v1563
        %v1565 = vmul.f32 %v1293, %v1564
        %v1566 = vmul.f32 %v1297, %v1564
        %v1567 = vpack.c.bf16 %v1565, %v1565
        %v1568 = vpack.c.bf16 %v1566, %v1566
        %1569 = vmatprep.subr.bf16.mxu0 0
        %1570 = vmatpush1.bf16.xpose.msra.mxu0 %v1342
        %1571 = vmatprep.subr.bf16.mxu0 0
        %1572 = vmatpush1.bf16.xpose.msra.mxu0 0
        %1573 = vmatprep.subr.bf16.mxu0 0
        %1574 = vmatpush1.bf16.xpose.msra.mxu0 0
        %1575 = vmatprep.subr.bf16.mxu0 0
        %1576 = vmatpush1.bf16.xpose.msra.mxu0 0
        %1577 = vmatprep.subr.bf16.mxu0 0
        %1578 = vmatpush1.bf16.xpose.msra.mxu0 0
        %1579 = vmatprep.subr.bf16.mxu0 0
        %1580 = vmatpush1.bf16.xpose.msra.mxu0 0
        %1581 = vmatprep.subr.bf16.mxu0 0
        %1582 = vmatpush1.bf16.xpose.msra.mxu0 0
        %1583 = vmatprep.subr.bf16.mxu0 0
        %1584 = vmatpush1.bf16.xpose.msra.mxu0 0
        %1585 = vmatprep.subr.bf16.mxu0 0
        %1586 = vmatpush1.bf16.xpose.msra.mxu0 0
        %1587 = vmatprep.subr.bf16.mxu0 0
        %1588 = vmatpush1.bf16.xpose.msra.mxu0 0
        %1589 = vmatprep.subr.bf16.mxu0 0
        %1590 = vmatpush1.bf16.xpose.msra.mxu0 0
        %1591 = vmatprep.subr.bf16.mxu0 0
        %1592 = vmatpush1.bf16.xpose.msra.mxu0 0
        %1593 = vmatprep.subr.bf16.mxu0 0
        %1594 = vmatpush1.bf16.xpose.msra.mxu0 0
        %1595 = vmatprep.subr.bf16.mxu0 0
        %1596 = vmatpush1.bf16.xpose.msra.mxu0 0
        %1597 = vmatprep.subr.bf16.mxu0 0
        %1598 = vmatpush1.bf16.xpose.msra.mxu0 0
        %1599 = vmatprep.subr.bf16.mxu0 0
        %1600 = vmatpush1.bf16.xpose.msra.mxu0 0
        %1601 = vmatprep.mubr.bf16.mxu0 0
        %1602 = vmatmul.mubr.bf16.gmra.mrb[0].mxu0 %v1567
        %v1603 = vpop.f32.mrb[0].mxu0
        %v1604 = vadd.f32 %v1346, %v1603
        %v1605 = vpop.f32.mrb[0].mxu0
        %v1606 = vpop.f32.mrb[0].mxu0
        %v1607 = vpop.f32.mrb[0].mxu0
        %1608 = vdwg.mxu0
        %1609 = vmatprep.subr.bf16.mxu0 0
        %1610 = vmatpush1.bf16.xpose.msra.mxu0 %v1343
        %1611 = vmatprep.subr.bf16.mxu0 0
        %1612 = vmatpush1.bf16.xpose.msra.mxu0 0
        %1613 = vmatprep.subr.bf16.mxu0 0
        %1614 = vmatpush1.bf16.xpose.msra.mxu0 0
        %1615 = vmatprep.subr.bf16.mxu0 0
        %1616 = vmatpush1.bf16.xpose.msra.mxu0 0
        %1617 = vmatprep.subr.bf16.mxu0 0
        %1618 = vmatpush1.bf16.xpose.msra.mxu0 0
        %1619 = vmatprep.subr.bf16.mxu0 0
        %1620 = vmatpush1.bf16.xpose.msra.mxu0 0
        %1621 = vmatprep.subr.bf16.mxu0 0
        %1622 = vmatpush1.bf16.xpose.msra.mxu0 0
        %1623 = vmatprep.subr.bf16.mxu0 0
        %1624 = vmatpush1.bf16.xpose.msra.mxu0 0
        %1625 = vmatprep.subr.bf16.mxu0 0
        %1626 = vmatpush1.bf16.xpose.msra.mxu0 0
        %1627 = vmatprep.subr.bf16.mxu0 0
        %1628 = vmatpush1.bf16.xpose.msra.mxu0 0
        %1629 = vmatprep.subr.bf16.mxu0 0
        %1630 = vmatpush1.bf16.xpose.msra.mxu0 0
        %1631 = vmatprep.subr.bf16.mxu0 0
        %1632 = vmatpush1.bf16.xpose.msra.mxu0 0
        %1633 = vmatprep.subr.bf16.mxu0 0
        %1634 = vmatpush1.bf16.xpose.msra.mxu0 0
        %1635 = vmatprep.subr.bf16.mxu0 0
        %1636 = vmatpush1.bf16.xpose.msra.mxu0 0
        %1637 = vmatprep.subr.bf16.mxu0 0
        %1638 = vmatpush1.bf16.xpose.msra.mxu0 0
        %1639 = vmatprep.subr.bf16.mxu0 0
        %1640 = vmatpush1.bf16.xpose.msra.mxu0 0
        %1641 = vmatprep.mubr.bf16.mxu0 0
        %1642 = vmatmul.mubr.bf16.gmra.mrb[0].mxu0 %v1568
        %v1643 = vpop.f32.mrb[0].mxu0
        %v1644 = vadd.f32 %v1346, %v1643
        %v1645 = vpop.f32.mrb[0].mxu0
        %v1646 = vpop.f32.mrb[0].mxu0
        %v1647 = vpop.f32.mrb[0].mxu0
        %1648 = vdwg.mxu0
        %v1649 = vsel %vm1438, %v1604, -inf
        %1650 = vmax.xlane.f32.xlu0 %v1649
        %v1651 = vpop.xlane.xlu0 %1650
        %v1652 = vsel %vm1438, %v1644, -inf
        %1653 = vmax.xlane.f32.xlu0 %v1652
        %v1654 = vpop.xlane.xlu0 %1653
        %v1655 = vsub.f32 %v1604, %v1651
        %v1656 = vsub.f32 %v1644, %v1654
        %v1657 = vmul.f32 %v1655, 1.442695
        %v1658 = vpow.pop %v1657
        %v1659 = vmul.f32 %v1656, 1.442695
        %v1660 = vpow.pop %v1659
        %v1661 = vsel %vm1438, %v1658, 0.0
        %1662 = vadd.xlane.f32.xlu0 %v1661
        %v1663 = vpop.xlane.xlu0 %1662
        %v1664 = vsel %vm1438, %v1660, 0.0
        %1665 = vadd.xlane.f32.xlu0 %v1664
        %v1666 = vpop.xlane.xlu0 %1665
        %v1667 = vrcp.pop %v1663
        %v1668 = vrcp.pop %v1666
        %v1669 = vmul.f32 %v1658, %v1667
        %v1670 = vmul.f32 %v1660, %v1668
        %v1671 = vpack.c.bf16 %v1669, %v1669
        %v1672 = vpack.c.bf16 %v1670, %v1670
        %v1674 = vsel %vm1438, %v1671, 0
        %1676 = vmatprep.subr.bf16.mxu0 0
        %1677 = vmatpush1.bf16.msra.mxu0 %v1468
        %1678 = vmatprep.subr.bf16.mxu0 0
        %1679 = vmatpush1.bf16.msra.mxu0 0
        %1680 = vmatprep.subr.bf16.mxu0 0
        %1681 = vmatpush1.bf16.msra.mxu0 0
        %1682 = vmatprep.subr.bf16.mxu0 0
        %1683 = vmatpush1.bf16.msra.mxu0 0
        %1684 = vmatprep.subr.bf16.mxu0 0
        %1685 = vmatpush1.bf16.msra.mxu0 0
        %1686 = vmatprep.subr.bf16.mxu0 0
        %1687 = vmatpush1.bf16.msra.mxu0 0
        %1688 = vmatprep.subr.bf16.mxu0 0
        %1689 = vmatpush1.bf16.msra.mxu0 0
        %1690 = vmatprep.subr.bf16.mxu0 0
        %1691 = vmatpush1.bf16.msra.mxu0 0
        %1692 = vmatprep.subr.bf16.mxu0 0
        %1693 = vmatpush1.bf16.msra.mxu0 0
        %1694 = vmatprep.subr.bf16.mxu0 0
        %1695 = vmatpush1.bf16.msra.mxu0 0
        %1696 = vmatprep.subr.bf16.mxu0 0
        %1697 = vmatpush1.bf16.msra.mxu0 0
        %1698 = vmatprep.subr.bf16.mxu0 0
        %1699 = vmatpush1.bf16.msra.mxu0 0
        %1700 = vmatprep.subr.bf16.mxu0 0
        %1701 = vmatpush1.bf16.msra.mxu0 0
        %1702 = vmatprep.subr.bf16.mxu0 0
        %1703 = vmatpush1.bf16.msra.mxu0 0
        %1704 = vmatprep.subr.bf16.mxu0 0
        %1705 = vmatpush1.bf16.msra.mxu0 0
        %1706 = vmatprep.subr.bf16.mxu0 0
        %1707 = vmatpush1.bf16.msra.mxu0 0
        %1708 = vmatprep.mubr.bf16.mxu0 0
        %1709 = vmatmul.mubr.bf16.gmra.mrb[0].mxu0 %v1674
        %v1710 = vpop.f32.mrb[0].mxu0
        %v1711 = vadd.f32 0.0, %v1710
        %v1712 = vpop.f32.mrb[0].mxu0
        %v1713 = vpop.f32.mrb[0].mxu0
        %v1714 = vpop.f32.mrb[0].mxu0
        %1715 = vdwg.mxu0
        %v1717 = vsel %vm1438, %v1672, 0
        %1719 = vmatprep.subr.bf16.mxu0 0
        %1720 = vmatpush1.bf16.msra.mxu0 %v1514
        %1721 = vmatprep.subr.bf16.mxu0 0
        %1722 = vmatpush1.bf16.msra.mxu0 0
        %1723 = vmatprep.subr.bf16.mxu0 0
        %1724 = vmatpush1.bf16.msra.mxu0 0
        %1725 = vmatprep.subr.bf16.mxu0 0
        %1726 = vmatpush1.bf16.msra.mxu0 0
        %1727 = vmatprep.subr.bf16.mxu0 0
        %1728 = vmatpush1.bf16.msra.mxu0 0
        %1729 = vmatprep.subr.bf16.mxu0 0
        %1730 = vmatpush1.bf16.msra.mxu0 0
        %1731 = vmatprep.subr.bf16.mxu0 0
        %1732 = vmatpush1.bf16.msra.mxu0 0
        %1733 = vmatprep.subr.bf16.mxu0 0
        %1734 = vmatpush1.bf16.msra.mxu0 0
        %1735 = vmatprep.subr.bf16.mxu0 0
        %1736 = vmatpush1.bf16.msra.mxu0 0
        %1737 = vmatprep.subr.bf16.mxu0 0
        %1738 = vmatpush1.bf16.msra.mxu0 0
        %1739 = vmatprep.subr.bf16.mxu0 0
        %1740 = vmatpush1.bf16.msra.mxu0 0
        %1741 = vmatprep.subr.bf16.mxu0 0
        %1742 = vmatpush1.bf16.msra.mxu0 0
        %1743 = vmatprep.subr.bf16.mxu0 0
        %1744 = vmatpush1.bf16.msra.mxu0 0
        %1745 = vmatprep.subr.bf16.mxu0 0
        %1746 = vmatpush1.bf16.msra.mxu0 0
        %1747 = vmatprep.subr.bf16.mxu0 0
        %1748 = vmatpush1.bf16.msra.mxu0 0
        %1749 = vmatprep.subr.bf16.mxu0 0
        %1750 = vmatpush1.bf16.msra.mxu0 0
        %1751 = vmatprep.mubr.bf16.mxu0 0
        %1752 = vmatmul.mubr.bf16.gmra.mrb[0].mxu0 %v1717
        %v1753 = vpop.f32.mrb[0].mxu0
        %v1754 = vadd.f32 0.0, %v1753
        %v1755 = vpop.f32.mrb[0].mxu0
        %v1756 = vpop.f32.mrb[0].mxu0
        %v1757 = vpop.f32.mrb[0].mxu0
        %1758 = vdwg.mxu0
        %v1759 = vmul.f32 %v1711, %v1564
        %v1760 = vmul.f32 %v1754, %v1564
        %v1761 = vadd.f32 %v1558, %v1759
        %v1762 = vadd.f32 %v1559, %v1760
        %vm1763 = vcmp.ge.s32.totalorder %v1348, 64
        %vm1764 = vcmp.lt.s32.totalorder %v1348, 96
        %vm1765 = vmand %vm1763, %vm1764
        %v1766 = vsel %vm1765, 1, 0
        %v1767 = vcvt.s32.f32 %v1766
        %v1768 = vmul.f32 %v1293, %v1767
        %v1769 = vmul.f32 %v1297, %v1767
        %v1770 = vpack.c.bf16 %v1768, %v1768
        %v1771 = vpack.c.bf16 %v1769, %v1769
        %1772 = vmatprep.subr.bf16.mxu0 0
        %1773 = vmatpush1.bf16.xpose.msra.mxu0 %v1342
        %1774 = vmatprep.subr.bf16.mxu0 0
        %1775 = vmatpush1.bf16.xpose.msra.mxu0 0
        %1776 = vmatprep.subr.bf16.mxu0 0
        %1777 = vmatpush1.bf16.xpose.msra.mxu0 0
        %1778 = vmatprep.subr.bf16.mxu0 0
        %1779 = vmatpush1.bf16.xpose.msra.mxu0 0
        %1780 = vmatprep.subr.bf16.mxu0 0
        %1781 = vmatpush1.bf16.xpose.msra.mxu0 0
        %1782 = vmatprep.subr.bf16.mxu0 0
        %1783 = vmatpush1.bf16.xpose.msra.mxu0 0
        %1784 = vmatprep.subr.bf16.mxu0 0
        %1785 = vmatpush1.bf16.xpose.msra.mxu0 0
        %1786 = vmatprep.subr.bf16.mxu0 0
        %1787 = vmatpush1.bf16.xpose.msra.mxu0 0
        %1788 = vmatprep.subr.bf16.mxu0 0
        %1789 = vmatpush1.bf16.xpose.msra.mxu0 0
        %1790 = vmatprep.subr.bf16.mxu0 0
        %1791 = vmatpush1.bf16.xpose.msra.mxu0 0
        %1792 = vmatprep.subr.bf16.mxu0 0
        %1793 = vmatpush1.bf16.xpose.msra.mxu0 0
        %1794 = vmatprep.subr.bf16.mxu0 0
        %1795 = vmatpush1.bf16.xpose.msra.mxu0 0
        %1796 = vmatprep.subr.bf16.mxu0 0
        %1797 = vmatpush1.bf16.xpose.msra.mxu0 0
        %1798 = vmatprep.subr.bf16.mxu0 0
        %1799 = vmatpush1.bf16.xpose.msra.mxu0 0
        %1800 = vmatprep.subr.bf16.mxu0 0
        %1801 = vmatpush1.bf16.xpose.msra.mxu0 0
        %1802 = vmatprep.subr.bf16.mxu0 0
        %1803 = vmatpush1.bf16.xpose.msra.mxu0 0
        %1804 = vmatprep.mubr.bf16.mxu0 0
        %1805 = vmatmul.mubr.bf16.gmra.mrb[0].mxu0 %v1770
        %v1806 = vpop.f32.mrb[0].mxu0
        %v1807 = vadd.f32 %v1346, %v1806
        %v1808 = vpop.f32.mrb[0].mxu0
        %v1809 = vpop.f32.mrb[0].mxu0
        %v1810 = vpop.f32.mrb[0].mxu0
        %1811 = vdwg.mxu0
        %1812 = vmatprep.subr.bf16.mxu0 0
        %1813 = vmatpush1.bf16.xpose.msra.mxu0 %v1343
        %1814 = vmatprep.subr.bf16.mxu0 0
        %1815 = vmatpush1.bf16.xpose.msra.mxu0 0
        %1816 = vmatprep.subr.bf16.mxu0 0
        %1817 = vmatpush1.bf16.xpose.msra.mxu0 0
        %1818 = vmatprep.subr.bf16.mxu0 0
        %1819 = vmatpush1.bf16.xpose.msra.mxu0 0
        %1820 = vmatprep.subr.bf16.mxu0 0
        %1821 = vmatpush1.bf16.xpose.msra.mxu0 0
        %1822 = vmatprep.subr.bf16.mxu0 0
        %1823 = vmatpush1.bf16.xpose.msra.mxu0 0
        %1824 = vmatprep.subr.bf16.mxu0 0
        %1825 = vmatpush1.bf16.xpose.msra.mxu0 0
        %1826 = vmatprep.subr.bf16.mxu0 0
        %1827 = vmatpush1.bf16.xpose.msra.mxu0 0
        %1828 = vmatprep.subr.bf16.mxu0 0
        %1829 = vmatpush1.bf16.xpose.msra.mxu0 0
        %1830 = vmatprep.subr.bf16.mxu0 0
        %1831 = vmatpush1.bf16.xpose.msra.mxu0 0
        %1832 = vmatprep.subr.bf16.mxu0 0
        %1833 = vmatpush1.bf16.xpose.msra.mxu0 0
        %1834 = vmatprep.subr.bf16.mxu0 0
        %1835 = vmatpush1.bf16.xpose.msra.mxu0 0
        %1836 = vmatprep.subr.bf16.mxu0 0
        %1837 = vmatpush1.bf16.xpose.msra.mxu0 0
        %1838 = vmatprep.subr.bf16.mxu0 0
        %1839 = vmatpush1.bf16.xpose.msra.mxu0 0
        %1840 = vmatprep.subr.bf16.mxu0 0
        %1841 = vmatpush1.bf16.xpose.msra.mxu0 0
        %1842 = vmatprep.subr.bf16.mxu0 0
        %1843 = vmatpush1.bf16.xpose.msra.mxu0 0
        %1844 = vmatprep.mubr.bf16.mxu0 0
        %1845 = vmatmul.mubr.bf16.gmra.mrb[0].mxu0 %v1771
        %v1846 = vpop.f32.mrb[0].mxu0
        %v1847 = vadd.f32 %v1346, %v1846
        %v1848 = vpop.f32.mrb[0].mxu0
        %v1849 = vpop.f32.mrb[0].mxu0
        %v1850 = vpop.f32.mrb[0].mxu0
        %1851 = vdwg.mxu0
        %v1852 = vsel %vm1438, %v1807, -inf
        %1853 = vmax.xlane.f32.xlu0 %v1852
        %v1854 = vpop.xlane.xlu0 %1853
        %v1855 = vsel %vm1438, %v1847, -inf
        %1856 = vmax.xlane.f32.xlu0 %v1855
        %v1857 = vpop.xlane.xlu0 %1856
        %v1858 = vsub.f32 %v1807, %v1854
        %v1859 = vsub.f32 %v1847, %v1857
        %v1860 = vmul.f32 %v1858, 1.442695
        %v1861 = vpow.pop %v1860
        %v1862 = vmul.f32 %v1859, 1.442695
        %v1863 = vpow.pop %v1862
        %v1864 = vsel %vm1438, %v1861, 0.0
        %1865 = vadd.xlane.f32.xlu0 %v1864
        %v1866 = vpop.xlane.xlu0 %1865
        %v1867 = vsel %vm1438, %v1863, 0.0
        %1868 = vadd.xlane.f32.xlu0 %v1867
        %v1869 = vpop.xlane.xlu0 %1868
        %v1870 = vrcp.pop %v1866
        %v1871 = vrcp.pop %v1869
        %v1872 = vmul.f32 %v1861, %v1870
        %v1873 = vmul.f32 %v1863, %v1871
        %v1874 = vpack.c.bf16 %v1872, %v1872
        %v1875 = vpack.c.bf16 %v1873, %v1873
        %v1877 = vsel %vm1438, %v1874, 0
        %1879 = vmatprep.subr.bf16.mxu0 0
        %1880 = vmatpush1.bf16.msra.mxu0 %v1468
        %1881 = vmatprep.subr.bf16.mxu0 0
        %1882 = vmatpush1.bf16.msra.mxu0 0
        %1883 = vmatprep.subr.bf16.mxu0 0
        %1884 = vmatpush1.bf16.msra.mxu0 0
        %1885 = vmatprep.subr.bf16.mxu0 0
        %1886 = vmatpush1.bf16.msra.mxu0 0
        %1887 = vmatprep.subr.bf16.mxu0 0
        %1888 = vmatpush1.bf16.msra.mxu0 0
        %1889 = vmatprep.subr.bf16.mxu0 0
        %1890 = vmatpush1.bf16.msra.mxu0 0
        %1891 = vmatprep.subr.bf16.mxu0 0
        %1892 = vmatpush1.bf16.msra.mxu0 0
        %1893 = vmatprep.subr.bf16.mxu0 0
        %1894 = vmatpush1.bf16.msra.mxu0 0
        %1895 = vmatprep.subr.bf16.mxu0 0
        %1896 = vmatpush1.bf16.msra.mxu0 0
        %1897 = vmatprep.subr.bf16.mxu0 0
        %1898 = vmatpush1.bf16.msra.mxu0 0
        %1899 = vmatprep.subr.bf16.mxu0 0
        %1900 = vmatpush1.bf16.msra.mxu0 0
        %1901 = vmatprep.subr.bf16.mxu0 0
        %1902 = vmatpush1.bf16.msra.mxu0 0
        %1903 = vmatprep.subr.bf16.mxu0 0
        %1904 = vmatpush1.bf16.msra.mxu0 0
        %1905 = vmatprep.subr.bf16.mxu0 0
        %1906 = vmatpush1.bf16.msra.mxu0 0
        %1907 = vmatprep.subr.bf16.mxu0 0
        %1908 = vmatpush1.bf16.msra.mxu0 0
        %1909 = vmatprep.subr.bf16.mxu0 0
        %1910 = vmatpush1.bf16.msra.mxu0 0
        %1911 = vmatprep.mubr.bf16.mxu0 0
        %1912 = vmatmul.mubr.bf16.gmra.mrb[0].mxu0 %v1877
        %v1913 = vpop.f32.mrb[0].mxu0
        %v1914 = vadd.f32 0.0, %v1913
        %v1915 = vpop.f32.mrb[0].mxu0
        %v1916 = vpop.f32.mrb[0].mxu0
        %v1917 = vpop.f32.mrb[0].mxu0
        %1918 = vdwg.mxu0
        %v1920 = vsel %vm1438, %v1875, 0
        %1922 = vmatprep.subr.bf16.mxu0 0
        %1923 = vmatpush1.bf16.msra.mxu0 %v1514
        %1924 = vmatprep.subr.bf16.mxu0 0
        %1925 = vmatpush1.bf16.msra.mxu0 0
        %1926 = vmatprep.subr.bf16.mxu0 0
        %1927 = vmatpush1.bf16.msra.mxu0 0
        %1928 = vmatprep.subr.bf16.mxu0 0
        %1929 = vmatpush1.bf16.msra.mxu0 0
        %1930 = vmatprep.subr.bf16.mxu0 0
        %1931 = vmatpush1.bf16.msra.mxu0 0
        %1932 = vmatprep.subr.bf16.mxu0 0
        %1933 = vmatpush1.bf16.msra.mxu0 0
        %1934 = vmatprep.subr.bf16.mxu0 0
        %1935 = vmatpush1.bf16.msra.mxu0 0
        %1936 = vmatprep.subr.bf16.mxu0 0
        %1937 = vmatpush1.bf16.msra.mxu0 0
        %1938 = vmatprep.subr.bf16.mxu0 0
        %1939 = vmatpush1.bf16.msra.mxu0 0
        %1940 = vmatprep.subr.bf16.mxu0 0
        %1941 = vmatpush1.bf16.msra.mxu0 0
        %1942 = vmatprep.subr.bf16.mxu0 0
        %1943 = vmatpush1.bf16.msra.mxu0 0
        %1944 = vmatprep.subr.bf16.mxu0 0
        %1945 = vmatpush1.bf16.msra.mxu0 0
        %1946 = vmatprep.subr.bf16.mxu0 0
        %1947 = vmatpush1.bf16.msra.mxu0 0
        %1948 = vmatprep.subr.bf16.mxu0 0
        %1949 = vmatpush1.bf16.msra.mxu0 0
        %1950 = vmatprep.subr.bf16.mxu0 0
        %1951 = vmatpush1.bf16.msra.mxu0 0
        %1952 = vmatprep.subr.bf16.mxu0 0
        %1953 = vmatpush1.bf16.msra.mxu0 0
        %1954 = vmatprep.mubr.bf16.mxu0 0
        %1955 = vmatmul.mubr.bf16.gmra.mrb[0].mxu0 %v1920
        %v1956 = vpop.f32.mrb[0].mxu0
        %v1957 = vadd.f32 0.0, %v1956
        %v1958 = vpop.f32.mrb[0].mxu0
        %v1959 = vpop.f32.mrb[0].mxu0
        %v1960 = vpop.f32.mrb[0].mxu0
        %1961 = vdwg.mxu0
        %v1962 = vmul.f32 %v1914, %v1767
        %v1963 = vmul.f32 %v1957, %v1767
        %v1964 = vadd.f32 %v1761, %v1962
        %v1965 = vadd.f32 %v1762, %v1963
        %vm1966 = vcmp.ge.s32.totalorder %v1348, 96
        %vm1967 = vcmp.lt.s32.totalorder %v1348, 128
        %vm1968 = vmand %vm1966, %vm1967
        %v1969 = vsel %vm1968, 1, 0
        %v1970 = vcvt.s32.f32 %v1969
        %v1971 = vmul.f32 %v1293, %v1970
        %v1972 = vmul.f32 %v1297, %v1970
        %v1973 = vpack.c.bf16 %v1971, %v1971
        %v1974 = vpack.c.bf16 %v1972, %v1972
        %1975 = vmatprep.subr.bf16.mxu0 0
        %1976 = vmatpush1.bf16.xpose.msra.mxu0 %v1342
        %1977 = vmatprep.subr.bf16.mxu0 0
        %1978 = vmatpush1.bf16.xpose.msra.mxu0 0
        %1979 = vmatprep.subr.bf16.mxu0 0
        %1980 = vmatpush1.bf16.xpose.msra.mxu0 0
        %1981 = vmatprep.subr.bf16.mxu0 0
        %1982 = vmatpush1.bf16.xpose.msra.mxu0 0
        %1983 = vmatprep.subr.bf16.mxu0 0
        %1984 = vmatpush1.bf16.xpose.msra.mxu0 0
        %1985 = vmatprep.subr.bf16.mxu0 0
        %1986 = vmatpush1.bf16.xpose.msra.mxu0 0
        %1987 = vmatprep.subr.bf16.mxu0 0
        %1988 = vmatpush1.bf16.xpose.msra.mxu0 0
        %1989 = vmatprep.subr.bf16.mxu0 0
        %1990 = vmatpush1.bf16.xpose.msra.mxu0 0
        %1991 = vmatprep.subr.bf16.mxu0 0
        %1992 = vmatpush1.bf16.xpose.msra.mxu0 0
        %1993 = vmatprep.subr.bf16.mxu0 0
        %1994 = vmatpush1.bf16.xpose.msra.mxu0 0
        %1995 = vmatprep.subr.bf16.mxu0 0
        %1996 = vmatpush1.bf16.xpose.msra.mxu0 0
        %1997 = vmatprep.subr.bf16.mxu0 0
        %1998 = vmatpush1.bf16.xpose.msra.mxu0 0
        %1999 = vmatprep.subr.bf16.mxu0 0
        %2000 = vmatpush1.bf16.xpose.msra.mxu0 0
        %2001 = vmatprep.subr.bf16.mxu0 0
        %2002 = vmatpush1.bf16.xpose.msra.mxu0 0
        %2003 = vmatprep.subr.bf16.mxu0 0
        %2004 = vmatpush1.bf16.xpose.msra.mxu0 0
        %2005 = vmatprep.subr.bf16.mxu0 0
        %2006 = vmatpush1.bf16.xpose.msra.mxu0 0
        %2007 = vmatprep.mubr.bf16.mxu0 0
        %2008 = vmatmul.mubr.bf16.gmra.mrb[0].mxu0 %v1973
        %v2009 = vpop.f32.mrb[0].mxu0
        %v2010 = vadd.f32 %v1346, %v2009
        %v2011 = vpop.f32.mrb[0].mxu0
        %v2012 = vpop.f32.mrb[0].mxu0
        %v2013 = vpop.f32.mrb[0].mxu0
        %2014 = vdwg.mxu0
        %2015 = vmatprep.subr.bf16.mxu0 0
        %2016 = vmatpush1.bf16.xpose.msra.mxu0 %v1343
        %2017 = vmatprep.subr.bf16.mxu0 0
        %2018 = vmatpush1.bf16.xpose.msra.mxu0 0
        %2019 = vmatprep.subr.bf16.mxu0 0
        %2020 = vmatpush1.bf16.xpose.msra.mxu0 0
        %2021 = vmatprep.subr.bf16.mxu0 0
        %2022 = vmatpush1.bf16.xpose.msra.mxu0 0
        %2023 = vmatprep.subr.bf16.mxu0 0
        %2024 = vmatpush1.bf16.xpose.msra.mxu0 0
        %2025 = vmatprep.subr.bf16.mxu0 0
        %2026 = vmatpush1.bf16.xpose.msra.mxu0 0
        %2027 = vmatprep.subr.bf16.mxu0 0
        %2028 = vmatpush1.bf16.xpose.msra.mxu0 0
        %2029 = vmatprep.subr.bf16.mxu0 0
        %2030 = vmatpush1.bf16.xpose.msra.mxu0 0
        %2031 = vmatprep.subr.bf16.mxu0 0
        %2032 = vmatpush1.bf16.xpose.msra.mxu0 0
        %2033 = vmatprep.subr.bf16.mxu0 0
        %2034 = vmatpush1.bf16.xpose.msra.mxu0 0
        %2035 = vmatprep.subr.bf16.mxu0 0
        %2036 = vmatpush1.bf16.xpose.msra.mxu0 0
        %2037 = vmatprep.subr.bf16.mxu0 0
        %2038 = vmatpush1.bf16.xpose.msra.mxu0 0
        %2039 = vmatprep.subr.bf16.mxu0 0
        %2040 = vmatpush1.bf16.xpose.msra.mxu0 0
        %2041 = vmatprep.subr.bf16.mxu0 0
        %2042 = vmatpush1.bf16.xpose.msra.mxu0 0
        %2043 = vmatprep.subr.bf16.mxu0 0
        %2044 = vmatpush1.bf16.xpose.msra.mxu0 0
        %2045 = vmatprep.subr.bf16.mxu0 0
        %2046 = vmatpush1.bf16.xpose.msra.mxu0 0
        %2047 = vmatprep.mubr.bf16.mxu0 0
        %2048 = vmatmul.mubr.bf16.gmra.mrb[0].mxu0 %v1974
        %v2049 = vpop.f32.mrb[0].mxu0
        %v2050 = vadd.f32 %v1346, %v2049
        %v2051 = vpop.f32.mrb[0].mxu0
        %v2052 = vpop.f32.mrb[0].mxu0
        %v2053 = vpop.f32.mrb[0].mxu0
        %2054 = vdwg.mxu0
        %v2055 = vsel %vm1438, %v2010, -inf
        %2056 = vmax.xlane.f32.xlu0 %v2055
        %v2057 = vpop.xlane.xlu0 %2056
        %v2058 = vsel %vm1438, %v2050, -inf
        %2059 = vmax.xlane.f32.xlu0 %v2058
        %v2060 = vpop.xlane.xlu0 %2059
        %v2061 = vsub.f32 %v2010, %v2057
        %v2062 = vsub.f32 %v2050, %v2060
        %v2063 = vmul.f32 %v2061, 1.442695
        %v2064 = vpow.pop %v2063
        %v2065 = vmul.f32 %v2062, 1.442695
        %v2066 = vpow.pop %v2065
        %v2067 = vsel %vm1438, %v2064, 0.0
        %2068 = vadd.xlane.f32.xlu0 %v2067
        %v2069 = vpop.xlane.xlu0 %2068
        %v2070 = vsel %vm1438, %v2066, 0.0
        %2071 = vadd.xlane.f32.xlu0 %v2070
        %v2072 = vpop.xlane.xlu0 %2071
        %v2073 = vrcp.pop %v2069
        %v2074 = vrcp.pop %v2072
        %v2075 = vmul.f32 %v2064, %v2073
        %v2076 = vmul.f32 %v2066, %v2074
        %v2077 = vpack.c.bf16 %v2075, %v2075
        %v2078 = vpack.c.bf16 %v2076, %v2076
        %v2080 = vsel %vm1438, %v2077, 0
        %2082 = vmatprep.subr.bf16.mxu0 0
        %2083 = vmatpush1.bf16.msra.mxu0 %v1468
        %2084 = vmatprep.subr.bf16.mxu0 0
        %2085 = vmatpush1.bf16.msra.mxu0 0
        %2086 = vmatprep.subr.bf16.mxu0 0
        %2087 = vmatpush1.bf16.msra.mxu0 0
        %2088 = vmatprep.subr.bf16.mxu0 0
        %2089 = vmatpush1.bf16.msra.mxu0 0
        %2090 = vmatprep.subr.bf16.mxu0 0
        %2091 = vmatpush1.bf16.msra.mxu0 0
        %2092 = vmatprep.subr.bf16.mxu0 0
        %2093 = vmatpush1.bf16.msra.mxu0 0
        %2094 = vmatprep.subr.bf16.mxu0 0
        %2095 = vmatpush1.bf16.msra.mxu0 0
        %2096 = vmatprep.subr.bf16.mxu0 0
        %2097 = vmatpush1.bf16.msra.mxu0 0
        %2098 = vmatprep.subr.bf16.mxu0 0
        %2099 = vmatpush1.bf16.msra.mxu0 0
        %2100 = vmatprep.subr.bf16.mxu0 0
        %2101 = vmatpush1.bf16.msra.mxu0 0
        %2102 = vmatprep.subr.bf16.mxu0 0
        %2103 = vmatpush1.bf16.msra.mxu0 0
        %2104 = vmatprep.subr.bf16.mxu0 0
        %2105 = vmatpush1.bf16.msra.mxu0 0
        %2106 = vmatprep.subr.bf16.mxu0 0
        %2107 = vmatpush1.bf16.msra.mxu0 0
        %2108 = vmatprep.subr.bf16.mxu0 0
        %2109 = vmatpush1.bf16.msra.mxu0 0
        %2110 = vmatprep.subr.bf16.mxu0 0
        %2111 = vmatpush1.bf16.msra.mxu0 0
        %2112 = vmatprep.subr.bf16.mxu0 0
        %2113 = vmatpush1.bf16.msra.mxu0 0
        %2114 = vmatprep.mubr.bf16.mxu0 0
        %2115 = vmatmul.mubr.bf16.gmra.mrb[0].mxu0 %v2080
        %v2116 = vpop.f32.mrb[0].mxu0
        %v2117 = vadd.f32 0.0, %v2116
        %v2118 = vpop.f32.mrb[0].mxu0
        %v2119 = vpop.f32.mrb[0].mxu0
        %v2120 = vpop.f32.mrb[0].mxu0
        %2121 = vdwg.mxu0
        %v2123 = vsel %vm1438, %v2078, 0
        %2125 = vmatprep.subr.bf16.mxu0 0
        %2126 = vmatpush1.bf16.msra.mxu0 %v1514
        %2127 = vmatprep.subr.bf16.mxu0 0
        %2128 = vmatpush1.bf16.msra.mxu0 0
        %2129 = vmatprep.subr.bf16.mxu0 0
        %2130 = vmatpush1.bf16.msra.mxu0 0
        %2131 = vmatprep.subr.bf16.mxu0 0
        %2132 = vmatpush1.bf16.msra.mxu0 0
        %2133 = vmatprep.subr.bf16.mxu0 0
        %2134 = vmatpush1.bf16.msra.mxu0 0
        %2135 = vmatprep.subr.bf16.mxu0 0
        %2136 = vmatpush1.bf16.msra.mxu0 0
        %2137 = vmatprep.subr.bf16.mxu0 0
        %2138 = vmatpush1.bf16.msra.mxu0 0
        %2139 = vmatprep.subr.bf16.mxu0 0
        %2140 = vmatpush1.bf16.msra.mxu0 0
        %2141 = vmatprep.subr.bf16.mxu0 0
        %2142 = vmatpush1.bf16.msra.mxu0 0
        %2143 = vmatprep.subr.bf16.mxu0 0
        %2144 = vmatpush1.bf16.msra.mxu0 0
        %2145 = vmatprep.subr.bf16.mxu0 0
        %2146 = vmatpush1.bf16.msra.mxu0 0
        %2147 = vmatprep.subr.bf16.mxu0 0
        %2148 = vmatpush1.bf16.msra.mxu0 0
        %2149 = vmatprep.subr.bf16.mxu0 0
        %2150 = vmatpush1.bf16.msra.mxu0 0
        %2151 = vmatprep.subr.bf16.mxu0 0
        %2152 = vmatpush1.bf16.msra.mxu0 0
        %2153 = vmatprep.subr.bf16.mxu0 0
        %2154 = vmatpush1.bf16.msra.mxu0 0
        %2155 = vmatprep.subr.bf16.mxu0 0
        %2156 = vmatpush1.bf16.msra.mxu0 0
        %2157 = vmatprep.mubr.bf16.mxu0 0
        %2158 = vmatmul.mubr.bf16.gmra.mrb[0].mxu0 %v2123
        %v2159 = vpop.f32.mrb[0].mxu0
        %v2160 = vadd.f32 0.0, %v2159
        %v2161 = vpop.f32.mrb[0].mxu0
        %v2162 = vpop.f32.mrb[0].mxu0
        %v2163 = vpop.f32.mrb[0].mxu0
        %2164 = vdwg.mxu0
        %v2165 = vmul.f32 %v2117, %v1970
        %v2166 = vmul.f32 %v2160, %v1970
        %v2167 = vadd.f32 %v1964, %v2165
        %v2168 = vadd.f32 %v1965, %v2166
        %v2169 = vld [vmem:[%s846] sm:$0xf]
        %v2170 = vld [vmem:[%s846 + $0x4] sm:$0xf]
        %v2171 = vld [vmem:[%s846 + $0x8] sm:$0xf]
        %v2172 = vld [vmem:[%s846 + $0xc] sm:$0xf]
        %v2173 = vld [vmem:[%s846 + $0x10] sm:$0xf]
        %v2174 = vld [vmem:[%s846 + $0x14] sm:$0xf]
        %v2175 = vld [vmem:[%s846 + $0x18] sm:$0xf]
        %v2176 = vld [vmem:[%s846 + $0x1c] sm:$0xf]
        %v2177 = vld [vmem:[%s846 + $0x20] sm:$0xf]
        %v2178 = vld [vmem:[%s846 + $0x24] sm:$0xf]
        %v2179 = vld [vmem:[%s846 + $0x28] sm:$0xf]
        %v2180 = vld [vmem:[%s846 + $0x2c] sm:$0xf]
        %v2181 = vld [vmem:[%s846 + $0x30] sm:$0xf]
        %v2182 = vld [vmem:[%s846 + $0x34] sm:$0xf]
        %v2183 = vld [vmem:[%s846 + $0x38] sm:$0xf]
        %v2184 = vld [vmem:[%s846 + $0x3c] sm:$0xf]
        %v2185 = vld [vmem:[%s854] sm:$0x1]
        %v2186 = vpack.c.bf16 %v2168, %v2167
        %v2188 = vlaneseq
        %v2189 = vshrl.u32 %v2188, 7
        %v2190 = vsub.s32 0, %v2189
        %v2191 = vrot.slane %v2185, %v2190
        %v2209 = vunpack.c.l.b16 %v2169
        %v2210 = vunpack.c.l.b16 %v2170
        %v2211 = vunpack.c.l.b16 %v2171
        %v2212 = vunpack.c.l.b16 %v2172
        %v2213 = vunpack.c.l.b16 %v2173
        %v2214 = vunpack.c.l.b16 %v2174
        %v2215 = vunpack.c.l.b16 %v2175
        %v2216 = vunpack.c.l.b16 %v2176
        %v2217 = vunpack.c.l.b16 %v2177
        %v2218 = vunpack.c.l.b16 %v2178
        %v2219 = vunpack.c.l.b16 %v2179
        %v2220 = vunpack.c.l.b16 %v2180
        %v2221 = vunpack.c.l.b16 %v2181
        %v2222 = vunpack.c.l.b16 %v2182
        %v2223 = vunpack.c.l.b16 %v2183
        %v2224 = vunpack.c.l.b16 %v2184
        %v2225 = vpack.c.b16 %v2210, %v2209
        %v2226 = vpack.c.b16 %v2212, %v2211
        %v2227 = vpack.c.b16 %v2214, %v2213
        %v2228 = vpack.c.b16 %v2216, %v2215
        %v2229 = vpack.c.b16 %v2218, %v2217
        %v2230 = vpack.c.b16 %v2220, %v2219
        %v2231 = vpack.c.b16 %v2222, %v2221
        %v2232 = vpack.c.b16 %v2224, %v2223
        %2241 = vmatprep.subr.bf16.mxu0 0
        %2242 = vmatpush1.bf16.msra.mxu0 %v2225
        %2243 = vmatprep.subr.bf16.mxu0 0
        %2244 = vmatpush1.bf16.msra.mxu0 %v2226
        %2245 = vmatprep.subr.bf16.mxu0 0
        %2246 = vmatpush1.bf16.msra.mxu0 %v2227
        %2247 = vmatprep.subr.bf16.mxu0 0
        %2248 = vmatpush1.bf16.msra.mxu0 %v2228
        %2249 = vmatprep.subr.bf16.mxu0 0
        %2250 = vmatpush1.bf16.msra.mxu0 %v2229
        %2251 = vmatprep.subr.bf16.mxu0 0
        %2252 = vmatpush1.bf16.msra.mxu0 %v2230
        %2253 = vmatprep.subr.bf16.mxu0 0
        %2254 = vmatpush1.bf16.msra.mxu0 %v2231
        %2255 = vmatprep.subr.bf16.mxu0 0
        %2256 = vmatpush1.bf16.msra.mxu0 %v2232
        %2257 = vmatprep.subr.bf16.mxu0 0
        %2258 = vmatpush1.bf16.msra.mxu0 0
        %2259 = vmatprep.subr.bf16.mxu0 0
        %2260 = vmatpush1.bf16.msra.mxu0 0
        %2261 = vmatprep.subr.bf16.mxu0 0
        %2262 = vmatpush1.bf16.msra.mxu0 0
        %2263 = vmatprep.subr.bf16.mxu0 0
        %2264 = vmatpush1.bf16.msra.mxu0 0
        %2265 = vmatprep.subr.bf16.mxu0 0
        %2266 = vmatpush1.bf16.msra.mxu0 0
        %2267 = vmatprep.subr.bf16.mxu0 0
        %2268 = vmatpush1.bf16.msra.mxu0 0
        %2269 = vmatprep.subr.bf16.mxu0 0
        %2270 = vmatpush1.bf16.msra.mxu0 0
        %2271 = vmatprep.subr.bf16.mxu0 0
        %2272 = vmatpush1.bf16.msra.mxu0 0
        %2273 = vmatprep.mubr.bf16.mxu0 0
        %2274 = vmatmul.mubr.bf16.gmra.mrb[0].mxu0 %v2186
        %v2275 = vpop.f32.mrb[0].mxu0
        %v2276 = vadd.f32 %v2191, %v2275
        %v2277 = vpop.f32.mrb[0].mxu0
        %v2278 = vpop.f32.mrb[0].mxu0
        %v2279 = vadd.f32 %v2191, %v2278
        %v2280 = vpop.f32.mrb[0].mxu0
        %2281 = vdwg.mxu0
        %v2282 = vadd.f32 %v1037, %v2276
        %v2283 = vadd.f32 %v1038, %v2279
        %v2284 = vld [vmem:[%s862] sm:$0x1]
        %v2285 = vld [vmem:[%s870] sm:$0x1]
        %2286 = vadd.xlane.f32.xlu0 %v2282
        %v2287 = vpop.xlane.xlu0 %2286
        %2288 = vadd.xlane.f32.xlu0 %v2283
        %v2289 = vpop.xlane.xlu0 %2288
        %v2290 = vmul.f32 %v2287, %v1045
        %v2291 = vmul.f32 %v2289, %v1045
        %v2292 = vsub.f32 %v2282, %v2290
        %v2293 = vsub.f32 %v2283, %v2291
        %v2294 = vmul.f32 %v2292, %v2292
        %v2295 = vmul.f32 %v2293, %v2293
        %2296 = vadd.xlane.f32.xlu0 %v2294
        %v2297 = vpop.xlane.xlu0 %2296
        %2298 = vadd.xlane.f32.xlu0 %v2295
        %v2299 = vpop.xlane.xlu0 %2298
        %v2300 = vmul.f32 %v2297, %v1045
        %v2301 = vmul.f32 %v2299, %v1045
        %v2302 = vadd.f32 %v2300, 1e-05
        %v2303 = vadd.f32 %v2301, 1e-05
        %v2304 = vrsqrt.pop %v2302
        %v2305 = vrsqrt.pop %v2303
        %v2306 = vmul.f32 %v2292, %v2304
        %v2307 = vmul.f32 %v2293, %v2305
        %v2309 = vlaneseq
        %v2310 = vshrl.u32 %v2309, 7
        %v2311 = vsub.s32 0, %v2310
        %v2312 = vrot.slane %v2284, %v2311
        %v2314 = vmul.f32 %v2306, %v2312
        %v2315 = vmul.f32 %v2307, %v2312
        %v2317 = vlaneseq
        %v2318 = vshrl.u32 %v2317, 7
        %v2319 = vsub.s32 0, %v2318
        %v2320 = vrot.slane %v2285, %v2319
        %v2322 = vadd.f32 %v2314, %v2320
        %v2323 = vadd.f32 %v2315, %v2320
        %v2324 = vld [vmem:[%s879] sm:$0xff]
        %v2325 = vld [vmem:[%s879 + $0x8] sm:$0xff]
        %v2326 = vld [vmem:[%s879 + $0x10] sm:$0xff]
        %v2327 = vld [vmem:[%s879 + $0x18] sm:$0xff]
        %v2328 = vld [vmem:[%s879 + $0x20] sm:$0xff]
        %v2329 = vld [vmem:[%s879 + $0x28] sm:$0xff]
        %v2330 = vld [vmem:[%s879 + $0x30] sm:$0xff]
        %v2331 = vld [vmem:[%s879 + $0x38] sm:$0xff]
        %v2332 = vld [vmem:[%s879 + $0x40] sm:$0xff]
        %v2333 = vld [vmem:[%s879 + $0x48] sm:$0xff]
        %v2334 = vld [vmem:[%s879 + $0x50] sm:$0xff]
        %v2335 = vld [vmem:[%s879 + $0x58] sm:$0xff]
        %v2336 = vld [vmem:[%s879 + $0x60] sm:$0xff]
        %v2337 = vld [vmem:[%s879 + $0x68] sm:$0xff]
        %v2338 = vld [vmem:[%s879 + $0x70] sm:$0xff]
        %v2339 = vld [vmem:[%s879 + $0x78] sm:$0xff]
        %v2340 = vld [vmem:[%s879 + $0x80] sm:$0xff]
        %v2341 = vld [vmem:[%s879 + $0x88] sm:$0xff]
        %v2342 = vld [vmem:[%s879 + $0x90] sm:$0xff]
        %v2343 = vld [vmem:[%s879 + $0x98] sm:$0xff]
        %v2344 = vld [vmem:[%s879 + $0xa0] sm:$0xff]
        %v2345 = vld [vmem:[%s879 + $0xa8] sm:$0xff]
        %v2346 = vld [vmem:[%s879 + $0xb0] sm:$0xff]
        %v2347 = vld [vmem:[%s879 + $0xb8] sm:$0xff]
        %v2348 = vld [vmem:[%s879 + $0xc0] sm:$0xff]
        %v2349 = vld [vmem:[%s879 + $0xc8] sm:$0xff]
        %v2350 = vld [vmem:[%s879 + $0xd0] sm:$0xff]
        %v2351 = vld [vmem:[%s879 + $0xd8] sm:$0xff]
        %v2352 = vld [vmem:[%s879 + $0xe0] sm:$0xff]
        %v2353 = vld [vmem:[%s879 + $0xe8] sm:$0xff]
        %v2354 = vld [vmem:[%s879 + $0xf0] sm:$0xff]
        %v2355 = vld [vmem:[%s879 + $0xf8] sm:$0xff]
        %v2356 = vld [vmem:[%s888] sm:$0xf]
        %v2357 = vpack.c.bf16 %v2323, %v2322
        %v2359 = vlaneseq
        %v2360 = vshrl.u32 %v2359, 7
        %v2361 = vsub.s32 0, %v2360
        %v2362 = vrot.slane %v2356, %v2361
        %v2363 = vlaneseq
        %v2364 = vshrl.u32 %v2363, 7
        %v2365 = vsub.s32 1, %v2364
        %v2366 = vrot.slane %v2356, %v2365
        %v2367 = vlaneseq
        %v2368 = vshrl.u32 %v2367, 7
        %v2369 = vsub.s32 2, %v2368
        %v2370 = vrot.slane %v2356, %v2369
        %v2371 = vlaneseq
        %v2372 = vshrl.u32 %v2371, 7
        %v2373 = vsub.s32 3, %v2372
        %v2374 = vrot.slane %v2356, %v2373
        %v2411 = vunpack.c.l.b16 %v2324
        %v2412 = vunpack.c.h.b16 %v2324
        %v2413 = vunpack.c.l.b16 %v2325
        %v2414 = vunpack.c.h.b16 %v2325
        %v2415 = vunpack.c.l.b16 %v2326
        %v2416 = vunpack.c.h.b16 %v2326
        %v2417 = vunpack.c.l.b16 %v2327
        %v2418 = vunpack.c.h.b16 %v2327
        %v2419 = vunpack.c.l.b16 %v2328
        %v2420 = vunpack.c.h.b16 %v2328
        %v2421 = vunpack.c.l.b16 %v2329
        %v2422 = vunpack.c.h.b16 %v2329
        %v2423 = vunpack.c.l.b16 %v2330
        %v2424 = vunpack.c.h.b16 %v2330
        %v2425 = vunpack.c.l.b16 %v2331
        %v2426 = vunpack.c.h.b16 %v2331
        %v2427 = vunpack.c.l.b16 %v2332
        %v2428 = vunpack.c.h.b16 %v2332
        %v2429 = vunpack.c.l.b16 %v2333
        %v2430 = vunpack.c.h.b16 %v2333
        %v2431 = vunpack.c.l.b16 %v2334
        %v2432 = vunpack.c.h.b16 %v2334
        %v2433 = vunpack.c.l.b16 %v2335
        %v2434 = vunpack.c.h.b16 %v2335
        %v2435 = vunpack.c.l.b16 %v2336
        %v2436 = vunpack.c.h.b16 %v2336
        %v2437 = vunpack.c.l.b16 %v2337
        %v2438 = vunpack.c.h.b16 %v2337
        %v2439 = vunpack.c.l.b16 %v2338
        %v2440 = vunpack.c.h.b16 %v2338
        %v2441 = vunpack.c.l.b16 %v2339
        %v2442 = vunpack.c.h.b16 %v2339
        %v2443 = vunpack.c.l.b16 %v2340
        %v2444 = vunpack.c.h.b16 %v2340
        %v2445 = vunpack.c.l.b16 %v2341
        %v2446 = vunpack.c.h.b16 %v2341
        %v2447 = vunpack.c.l.b16 %v2342
        %v2448 = vunpack.c.h.b16 %v2342
        %v2449 = vunpack.c.l.b16 %v2343
        %v2450 = vunpack.c.h.b16 %v2343
        %v2451 = vunpack.c.l.b16 %v2344
        %v2452 = vunpack.c.h.b16 %v2344
        %v2453 = vunpack.c.l.b16 %v2345
        %v2454 = vunpack.c.h.b16 %v2345
        %v2455 = vunpack.c.l.b16 %v2346
        %v2456 = vunpack.c.h.b16 %v2346
        %v2457 = vunpack.c.l.b16 %v2347
        %v2458 = vunpack.c.h.b16 %v2347
        %v2459 = vunpack.c.l.b16 %v2348
        %v2460 = vunpack.c.h.b16 %v2348
        %v2461 = vunpack.c.l.b16 %v2349
        %v2462 = vunpack.c.h.b16 %v2349
        %v2463 = vunpack.c.l.b16 %v2350
        %v2464 = vunpack.c.h.b16 %v2350
        %v2465 = vunpack.c.l.b16 %v2351
        %v2466 = vunpack.c.h.b16 %v2351
        %v2467 = vunpack.c.l.b16 %v2352
        %v2468 = vunpack.c.h.b16 %v2352
        %v2469 = vunpack.c.l.b16 %v2353
        %v2470 = vunpack.c.h.b16 %v2353
        %v2471 = vunpack.c.l.b16 %v2354
        %v2472 = vunpack.c.h.b16 %v2354
        %v2473 = vunpack.c.l.b16 %v2355
        %v2474 = vunpack.c.h.b16 %v2355
        %v2475 = vpack.c.b16 %v2415, %v2411
        %v2476 = vpack.c.b16 %v2416, %v2412
        %v2477 = vpack.c.b16 %v2417, %v2413
        %v2478 = vpack.c.b16 %v2418, %v2414
        %v2479 = vpack.c.b16 %v2423, %v2419
        %v2480 = vpack.c.b16 %v2424, %v2420
        %v2481 = vpack.c.b16 %v2425, %v2421
        %v2482 = vpack.c.b16 %v2426, %v2422
        %v2483 = vpack.c.b16 %v2431, %v2427
        %v2484 = vpack.c.b16 %v2432, %v2428
        %v2485 = vpack.c.b16 %v2433, %v2429
        %v2486 = vpack.c.b16 %v2434, %v2430
        %v2487 = vpack.c.b16 %v2439, %v2435
        %v2488 = vpack.c.b16 %v2440, %v2436
        %v2489 = vpack.c.b16 %v2441, %v2437
        %v2490 = vpack.c.b16 %v2442, %v2438
        %v2491 = vpack.c.b16 %v2447, %v2443
        %v2492 = vpack.c.b16 %v2448, %v2444
        %v2493 = vpack.c.b16 %v2449, %v2445
        %v2494 = vpack.c.b16 %v2450, %v2446
        %v2495 = vpack.c.b16 %v2455, %v2451
        %v2496 = vpack.c.b16 %v2456, %v2452
        %v2497 = vpack.c.b16 %v2457, %v2453
        %v2498 = vpack.c.b16 %v2458, %v2454
        %v2499 = vpack.c.b16 %v2463, %v2459
        %v2500 = vpack.c.b16 %v2464, %v2460
        %v2501 = vpack.c.b16 %v2465, %v2461
        %v2502 = vpack.c.b16 %v2466, %v2462
        %v2503 = vpack.c.b16 %v2471, %v2467
        %v2504 = vpack.c.b16 %v2472, %v2468
        %v2505 = vpack.c.b16 %v2473, %v2469
        %v2506 = vpack.c.b16 %v2474, %v2470
        %2539 = vmatprep.subr.bf16.mxu0 %v2476
        %2540 = vmatpush1.bf16.msra.mxu0 %v2475
        %2541 = vmatprep.subr.bf16.mxu0 %v2480
        %2542 = vmatpush1.bf16.msra.mxu0 %v2479
        %2543 = vmatprep.subr.bf16.mxu0 %v2484
        %2544 = vmatpush1.bf16.msra.mxu0 %v2483
        %2545 = vmatprep.subr.bf16.mxu0 %v2488
        %2546 = vmatpush1.bf16.msra.mxu0 %v2487
        %2547 = vmatprep.subr.bf16.mxu0 %v2492
        %2548 = vmatpush1.bf16.msra.mxu0 %v2491
        %2549 = vmatprep.subr.bf16.mxu0 %v2496
        %2550 = vmatpush1.bf16.msra.mxu0 %v2495
        %2551 = vmatprep.subr.bf16.mxu0 %v2500
        %2552 = vmatpush1.bf16.msra.mxu0 %v2499
        %2553 = vmatprep.subr.bf16.mxu0 %v2504
        %2554 = vmatpush1.bf16.msra.mxu0 %v2503
        %2555 = vmatprep.subr.bf16.mxu0 0
        %2556 = vmatpush1.bf16.msra.mxu0 0
        %2557 = vmatprep.subr.bf16.mxu0 0
        %2558 = vmatpush1.bf16.msra.mxu0 0
        %2559 = vmatprep.subr.bf16.mxu0 0
        %2560 = vmatpush1.bf16.msra.mxu0 0
        %2561 = vmatprep.subr.bf16.mxu0 0
        %2562 = vmatpush1.bf16.msra.mxu0 0
        %2563 = vmatprep.subr.bf16.mxu0 0
        %2564 = vmatpush1.bf16.msra.mxu0 0
        %2565 = vmatprep.subr.bf16.mxu0 0
        %2566 = vmatpush1.bf16.msra.mxu0 0
        %2567 = vmatprep.subr.bf16.mxu0 0
        %2568 = vmatpush1.bf16.msra.mxu0 0
        %2569 = vmatprep.subr.bf16.mxu0 0
        %2570 = vmatpush1.bf16.msra.mxu0 0
        %2571 = vmatprep.mubr.bf16.mxu0 0
        %2572 = vmatmul.mubr.bf16.gmra.mrb[0].mxu0 %v2357
        %v2573 = vpop.f32.mrb[0].mxu0
        %v2574 = vadd.f32 %v2362, %v2573
        %v2575 = vpop.f32.mrb[0].mxu0
        %v2576 = vadd.f32 %v2366, %v2575
        %v2577 = vpop.f32.mrb[0].mxu0
        %v2578 = vadd.f32 %v2362, %v2577
        %v2579 = vpop.f32.mrb[0].mxu0
        %v2580 = vadd.f32 %v2366, %v2579
        %2581 = vdwg.mxu0
        %2582 = vmatprep.subr.bf16.mxu0 %v2478
        %2583 = vmatpush1.bf16.msra.mxu0 %v2477
        %2584 = vmatprep.subr.bf16.mxu0 %v2482
        %2585 = vmatpush1.bf16.msra.mxu0 %v2481
        %2586 = vmatprep.subr.bf16.mxu0 %v2486
        %2587 = vmatpush1.bf16.msra.mxu0 %v2485
        %2588 = vmatprep.subr.bf16.mxu0 %v2490
        %2589 = vmatpush1.bf16.msra.mxu0 %v2489
        %2590 = vmatprep.subr.bf16.mxu0 %v2494
        %2591 = vmatpush1.bf16.msra.mxu0 %v2493
        %2592 = vmatprep.subr.bf16.mxu0 %v2498
        %2593 = vmatpush1.bf16.msra.mxu0 %v2497
        %2594 = vmatprep.subr.bf16.mxu0 %v2502
        %2595 = vmatpush1.bf16.msra.mxu0 %v2501
        %2596 = vmatprep.subr.bf16.mxu0 %v2506
        %2597 = vmatpush1.bf16.msra.mxu0 %v2505
        %2598 = vmatprep.subr.bf16.mxu0 0
        %2599 = vmatpush1.bf16.msra.mxu0 0
        %2600 = vmatprep.subr.bf16.mxu0 0
        %2601 = vmatpush1.bf16.msra.mxu0 0
        %2602 = vmatprep.subr.bf16.mxu0 0
        %2603 = vmatpush1.bf16.msra.mxu0 0
        %2604 = vmatprep.subr.bf16.mxu0 0
        %2605 = vmatpush1.bf16.msra.mxu0 0
        %2606 = vmatprep.subr.bf16.mxu0 0
        %2607 = vmatpush1.bf16.msra.mxu0 0
        %2608 = vmatprep.subr.bf16.mxu0 0
        %2609 = vmatpush1.bf16.msra.mxu0 0
        %2610 = vmatprep.subr.bf16.mxu0 0
        %2611 = vmatpush1.bf16.msra.mxu0 0
        %2612 = vmatprep.subr.bf16.mxu0 0
        %2613 = vmatpush1.bf16.msra.mxu0 0
        %2614 = vmatprep.mubr.bf16.mxu0 0
        %2615 = vmatmul.mubr.bf16.gmra.mrb[0].mxu0 %v2357
        %v2616 = vpop.f32.mrb[0].mxu0
        %v2617 = vadd.f32 %v2370, %v2616
        %v2618 = vpop.f32.mrb[0].mxu0
        %v2619 = vadd.f32 %v2374, %v2618
        %v2620 = vpop.f32.mrb[0].mxu0
        %v2621 = vadd.f32 %v2370, %v2620
        %v2622 = vpop.f32.mrb[0].mxu0
        %v2623 = vadd.f32 %v2374, %v2622
        %2624 = vdwg.mxu0
        %v2625 = vmul.f32 %v2574, 1.702
        %v2626 = vmul.f32 %v2576, 1.702
        %v2627 = vmul.f32 %v2617, 1.702
        %v2628 = vmul.f32 %v2619, 1.702
        %v2629 = vmul.f32 %v2578, 1.702
        %v2630 = vmul.f32 %v2580, 1.702
        %v2631 = vmul.f32 %v2621, 1.702
        %v2632 = vmul.f32 %v2623, 1.702
        %v2633 = vxor.u32 %v2625, 2147483648
        %v2634 = vxor.u32 %v2626, 2147483648
        %v2635 = vxor.u32 %v2627, 2147483648
        %v2636 = vxor.u32 %v2628, 2147483648
        %v2637 = vxor.u32 %v2629, 2147483648
        %v2638 = vxor.u32 %v2630, 2147483648
        %v2639 = vxor.u32 %v2631, 2147483648
        %v2640 = vxor.u32 %v2632, 2147483648
        %v2641 = vmul.f32 %v2633, 1.442695
        %v2642 = vpow.pop %v2641
        %v2643 = vmul.f32 %v2634, 1.442695
        %v2644 = vpow.pop %v2643
        %v2645 = vmul.f32 %v2635, 1.442695
        %v2646 = vpow.pop %v2645
        %v2647 = vmul.f32 %v2636, 1.442695
        %v2648 = vpow.pop %v2647
        %v2649 = vmul.f32 %v2637, 1.442695
        %v2650 = vpow.pop %v2649
        %v2651 = vmul.f32 %v2638, 1.442695
        %v2652 = vpow.pop %v2651
        %v2653 = vmul.f32 %v2639, 1.442695
        %v2654 = vpow.pop %v2653
        %v2655 = vmul.f32 %v2640, 1.442695
        %v2656 = vpow.pop %v2655
        %v2657 = vadd.f32 %v2642, 1.0
        %v2658 = vadd.f32 %v2644, 1.0
        %v2659 = vadd.f32 %v2646, 1.0
        %v2660 = vadd.f32 %v2648, 1.0
        %v2661 = vadd.f32 %v2650, 1.0
        %v2662 = vadd.f32 %v2652, 1.0
        %v2663 = vadd.f32 %v2654, 1.0
        %v2664 = vadd.f32 %v2656, 1.0
        %v2665 = vrcp.pop %v2657
        %v2666 = vmul.f32 1.0, %v2665
        %v2667 = vrcp.pop %v2658
        %v2668 = vmul.f32 1.0, %v2667
        %v2669 = vrcp.pop %v2659
        %v2670 = vmul.f32 1.0, %v2669
        %v2671 = vrcp.pop %v2660
        %v2672 = vmul.f32 1.0, %v2671
        %v2673 = vrcp.pop %v2661
        %v2674 = vmul.f32 1.0, %v2673
        %v2675 = vrcp.pop %v2662
        %v2676 = vmul.f32 1.0, %v2675
        %v2677 = vrcp.pop %v2663
        %v2678 = vmul.f32 1.0, %v2677
        %v2679 = vrcp.pop %v2664
        %v2680 = vmul.f32 1.0, %v2679
        %v2681 = vmul.f32 %v2574, %v2666
        %v2682 = vmul.f32 %v2576, %v2668
        %v2683 = vmul.f32 %v2617, %v2670
        %v2684 = vmul.f32 %v2619, %v2672
        %v2685 = vmul.f32 %v2578, %v2674
        %v2686 = vmul.f32 %v2580, %v2676
        %v2687 = vmul.f32 %v2621, %v2678
        %v2688 = vmul.f32 %v2623, %v2680
        %v2689 = vld [vmem:[%s897] sm:$0xf]
        %v2690 = vld [vmem:[%s897 + $0x4] sm:$0xf]
        %v2691 = vld [vmem:[%s897 + $0x8] sm:$0xf]
        %v2692 = vld [vmem:[%s897 + $0xc] sm:$0xf]
        %v2693 = vld [vmem:[%s897 + $0x10] sm:$0xf]
        %v2694 = vld [vmem:[%s897 + $0x14] sm:$0xf]
        %v2695 = vld [vmem:[%s897 + $0x18] sm:$0xf]
        %v2696 = vld [vmem:[%s897 + $0x1c] sm:$0xf]
        %v2697 = vld [vmem:[%s897 + $0x20] sm:$0xf]
        %v2698 = vld [vmem:[%s897 + $0x24] sm:$0xf]
        %v2699 = vld [vmem:[%s897 + $0x28] sm:$0xf]
        %v2700 = vld [vmem:[%s897 + $0x2c] sm:$0xf]
        %v2701 = vld [vmem:[%s897 + $0x30] sm:$0xf]
        %v2702 = vld [vmem:[%s897 + $0x34] sm:$0xf]
        %v2703 = vld [vmem:[%s897 + $0x38] sm:$0xf]
        %v2704 = vld [vmem:[%s897 + $0x3c] sm:$0xf]
        %v2705 = vld [vmem:[%s897 + $0x40] sm:$0xf]
        %v2706 = vld [vmem:[%s897 + $0x44] sm:$0xf]
        %v2707 = vld [vmem:[%s897 + $0x48] sm:$0xf]
        %v2708 = vld [vmem:[%s897 + $0x4c] sm:$0xf]
        %v2709 = vld [vmem:[%s897 + $0x50] sm:$0xf]
        %v2710 = vld [vmem:[%s897 + $0x54] sm:$0xf]
        %v2711 = vld [vmem:[%s897 + $0x58] sm:$0xf]
        %v2712 = vld [vmem:[%s897 + $0x5c] sm:$0xf]
        %v2713 = vld [vmem:[%s897 + $0x60] sm:$0xf]
        %v2714 = vld [vmem:[%s897 + $0x64] sm:$0xf]
        %v2715 = vld [vmem:[%s897 + $0x68] sm:$0xf]
        %v2716 = vld [vmem:[%s897 + $0x6c] sm:$0xf]
        %v2717 = vld [vmem:[%s897 + $0x70] sm:$0xf]
        %v2718 = vld [vmem:[%s897 + $0x74] sm:$0xf]
        %v2719 = vld [vmem:[%s897 + $0x78] sm:$0xf]
        %v2720 = vld [vmem:[%s897 + $0x7c] sm:$0xf]
        %v2721 = vld [vmem:[%s897 + $0x80] sm:$0xf]
        %v2722 = vld [vmem:[%s897 + $0x84] sm:$0xf]
        %v2723 = vld [vmem:[%s897 + $0x88] sm:$0xf]
        %v2724 = vld [vmem:[%s897 + $0x8c] sm:$0xf]
        %v2725 = vld [vmem:[%s897 + $0x90] sm:$0xf]
        %v2726 = vld [vmem:[%s897 + $0x94] sm:$0xf]
        %v2727 = vld [vmem:[%s897 + $0x98] sm:$0xf]
        %v2728 = vld [vmem:[%s897 + $0x9c] sm:$0xf]
        %v2729 = vld [vmem:[%s897 + $0xa0] sm:$0xf]
        %v2730 = vld [vmem:[%s897 + $0xa4] sm:$0xf]
        %v2731 = vld [vmem:[%s897 + $0xa8] sm:$0xf]
        %v2732 = vld [vmem:[%s897 + $0xac] sm:$0xf]
        %v2733 = vld [vmem:[%s897 + $0xb0] sm:$0xf]
        %v2734 = vld [vmem:[%s897 + $0xb4] sm:$0xf]
        %v2735 = vld [vmem:[%s897 + $0xb8] sm:$0xf]
        %v2736 = vld [vmem:[%s897 + $0xbc] sm:$0xf]
        %v2737 = vld [vmem:[%s897 + $0xc0] sm:$0xf]
        %v2738 = vld [vmem:[%s897 + $0xc4] sm:$0xf]
        %v2739 = vld [vmem:[%s897 + $0xc8] sm:$0xf]
        %v2740 = vld [vmem:[%s897 + $0xcc] sm:$0xf]
        %v2741 = vld [vmem:[%s897 + $0xd0] sm:$0xf]
        %v2742 = vld [vmem:[%s897 + $0xd4] sm:$0xf]
        %v2743 = vld [vmem:[%s897 + $0xd8] sm:$0xf]
        %v2744 = vld [vmem:[%s897 + $0xdc] sm:$0xf]
        %v2745 = vld [vmem:[%s897 + $0xe0] sm:$0xf]
        %v2746 = vld [vmem:[%s897 + $0xe4] sm:$0xf]
        %v2747 = vld [vmem:[%s897 + $0xe8] sm:$0xf]
        %v2748 = vld [vmem:[%s897 + $0xec] sm:$0xf]
        %v2749 = vld [vmem:[%s897 + $0xf0] sm:$0xf]
        %v2750 = vld [vmem:[%s897 + $0xf4] sm:$0xf]
        %v2751 = vld [vmem:[%s897 + $0xf8] sm:$0xf]
        %v2752 = vld [vmem:[%s897 + $0xfc] sm:$0xf]
        %v2753 = vld [vmem:[%s905] sm:$0x1]
        %v2754 = vpack.c.bf16 %v2685, %v2681
        %v2755 = vpack.c.bf16 %v2686, %v2682
        %v2756 = vpack.c.bf16 %v2687, %v2683
        %v2757 = vpack.c.bf16 %v2688, %v2684
        %v2759 = vlaneseq
        %v2760 = vshrl.u32 %v2759, 7
        %v2761 = vsub.s32 0, %v2760
        %v2762 = vrot.slane %v2753, %v2761
        %v2828 = vunpack.c.l.b16 %v2689
        %v2829 = vunpack.c.l.b16 %v2690
        %v2830 = vunpack.c.l.b16 %v2691
        %v2831 = vunpack.c.l.b16 %v2692
        %v2832 = vunpack.c.l.b16 %v2693
        %v2833 = vunpack.c.l.b16 %v2694
        %v2834 = vunpack.c.l.b16 %v2695
        %v2835 = vunpack.c.l.b16 %v2696
        %v2836 = vunpack.c.l.b16 %v2697
        %v2837 = vunpack.c.l.b16 %v2698
        %v2838 = vunpack.c.l.b16 %v2699
        %v2839 = vunpack.c.l.b16 %v2700
        %v2840 = vunpack.c.l.b16 %v2701
        %v2841 = vunpack.c.l.b16 %v2702
        %v2842 = vunpack.c.l.b16 %v2703
        %v2843 = vunpack.c.l.b16 %v2704
        %v2844 = vunpack.c.l.b16 %v2705
        %v2845 = vunpack.c.l.b16 %v2706
        %v2846 = vunpack.c.l.b16 %v2707
        %v2847 = vunpack.c.l.b16 %v2708
        %v2848 = vunpack.c.l.b16 %v2709
        %v2849 = vunpack.c.l.b16 %v2710
        %v2850 = vunpack.c.l.b16 %v2711
        %v2851 = vunpack.c.l.b16 %v2712
        %v2852 = vunpack.c.l.b16 %v2713
        %v2853 = vunpack.c.l.b16 %v2714
        %v2854 = vunpack.c.l.b16 %v2715
        %v2855 = vunpack.c.l.b16 %v2716
        %v2856 = vunpack.c.l.b16 %v2717
        %v2857 = vunpack.c.l.b16 %v2718
        %v2858 = vunpack.c.l.b16 %v2719
        %v2859 = vunpack.c.l.b16 %v2720
        %v2860 = vunpack.c.l.b16 %v2721
        %v2861 = vunpack.c.l.b16 %v2722
        %v2862 = vunpack.c.l.b16 %v2723
        %v2863 = vunpack.c.l.b16 %v2724
        %v2864 = vunpack.c.l.b16 %v2725
        %v2865 = vunpack.c.l.b16 %v2726
        %v2866 = vunpack.c.l.b16 %v2727
        %v2867 = vunpack.c.l.b16 %v2728
        %v2868 = vunpack.c.l.b16 %v2729
        %v2869 = vunpack.c.l.b16 %v2730
        %v2870 = vunpack.c.l.b16 %v2731
        %v2871 = vunpack.c.l.b16 %v2732
        %v2872 = vunpack.c.l.b16 %v2733
        %v2873 = vunpack.c.l.b16 %v2734
        %v2874 = vunpack.c.l.b16 %v2735
        %v2875 = vunpack.c.l.b16 %v2736
        %v2876 = vunpack.c.l.b16 %v2737
        %v2877 = vunpack.c.l.b16 %v2738
        %v2878 = vunpack.c.l.b16 %v2739
        %v2879 = vunpack.c.l.b16 %v2740
        %v2880 = vunpack.c.l.b16 %v2741
        %v2881 = vunpack.c.l.b16 %v2742
        %v2882 = vunpack.c.l.b16 %v2743
        %v2883 = vunpack.c.l.b16 %v2744
        %v2884 = vunpack.c.l.b16 %v2745
        %v2885 = vunpack.c.l.b16 %v2746
        %v2886 = vunpack.c.l.b16 %v2747
        %v2887 = vunpack.c.l.b16 %v2748
        %v2888 = vunpack.c.l.b16 %v2749
        %v2889 = vunpack.c.l.b16 %v2750
        %v2890 = vunpack.c.l.b16 %v2751
        %v2891 = vunpack.c.l.b16 %v2752
        %v2892 = vpack.c.b16 %v2829, %v2828
        %v2893 = vpack.c.b16 %v2831, %v2830
        %v2894 = vpack.c.b16 %v2833, %v2832
        %v2895 = vpack.c.b16 %v2835, %v2834
        %v2896 = vpack.c.b16 %v2837, %v2836
        %v2897 = vpack.c.b16 %v2839, %v2838
        %v2898 = vpack.c.b16 %v2841, %v2840
        %v2899 = vpack.c.b16 %v2843, %v2842
        %v2900 = vpack.c.b16 %v2845, %v2844
        %v2901 = vpack.c.b16 %v2847, %v2846
        %v2902 = vpack.c.b16 %v2849, %v2848
        %v2903 = vpack.c.b16 %v2851, %v2850
        %v2904 = vpack.c.b16 %v2853, %v2852
        %v2905 = vpack.c.b16 %v2855, %v2854
        %v2906 = vpack.c.b16 %v2857, %v2856
        %v2907 = vpack.c.b16 %v2859, %v2858
        %v2908 = vpack.c.b16 %v2861, %v2860
        %v2909 = vpack.c.b16 %v2863, %v2862
        %v2910 = vpack.c.b16 %v2865, %v2864
        %v2911 = vpack.c.b16 %v2867, %v2866
        %v2912 = vpack.c.b16 %v2869, %v2868
        %v2913 = vpack.c.b16 %v2871, %v2870
        %v2914 = vpack.c.b16 %v2873, %v2872
        %v2915 = vpack.c.b16 %v2875, %v2874
        %v2916 = vpack.c.b16 %v2877, %v2876
        %v2917 = vpack.c.b16 %v2879, %v2878
        %v2918 = vpack.c.b16 %v2881, %v2880
        %v2919 = vpack.c.b16 %v2883, %v2882
        %v2920 = vpack.c.b16 %v2885, %v2884
        %v2921 = vpack.c.b16 %v2887, %v2886
        %v2922 = vpack.c.b16 %v2889, %v2888
        %v2923 = vpack.c.b16 %v2891, %v2890
        %2956 = vmatprep.subr.bf16.mxu0 0
        %2957 = vmatpush1.bf16.msra.mxu0 %v2892
        %2958 = vmatprep.subr.bf16.mxu0 0
        %2959 = vmatpush1.bf16.msra.mxu0 %v2893
        %2960 = vmatprep.subr.bf16.mxu0 0
        %2961 = vmatpush1.bf16.msra.mxu0 %v2894
        %2962 = vmatprep.subr.bf16.mxu0 0
        %2963 = vmatpush1.bf16.msra.mxu0 %v2895
        %2964 = vmatprep.subr.bf16.mxu0 0
        %2965 = vmatpush1.bf16.msra.mxu0 %v2896
        %2966 = vmatprep.subr.bf16.mxu0 0
        %2967 = vmatpush1.bf16.msra.mxu0 %v2897
        %2968 = vmatprep.subr.bf16.mxu0 0
        %2969 = vmatpush1.bf16.msra.mxu0 %v2898
        %2970 = vmatprep.subr.bf16.mxu0 0
        %2971 = vmatpush1.bf16.msra.mxu0 %v2899
        %2972 = vmatprep.subr.bf16.mxu0 0
        %2973 = vmatpush1.bf16.msra.mxu0 %v2900
        %2974 = vmatprep.subr.bf16.mxu0 0
        %2975 = vmatpush1.bf16.msra.mxu0 %v2901
        %2976 = vmatprep.subr.bf16.mxu0 0
        %2977 = vmatpush1.bf16.msra.mxu0 %v2902
        %2978 = vmatprep.subr.bf16.mxu0 0
        %2979 = vmatpush1.bf16.msra.mxu0 %v2903
        %2980 = vmatprep.subr.bf16.mxu0 0
        %2981 = vmatpush1.bf16.msra.mxu0 %v2904
        %2982 = vmatprep.subr.bf16.mxu0 0
        %2983 = vmatpush1.bf16.msra.mxu0 %v2905
        %2984 = vmatprep.subr.bf16.mxu0 0
        %2985 = vmatpush1.bf16.msra.mxu0 %v2906
        %2986 = vmatprep.subr.bf16.mxu0 0
        %2987 = vmatpush1.bf16.msra.mxu0 %v2907
        %2988 = vmatprep.mubr.bf16.mxu0 %v2755
        %2989 = vmatmul.mubr.bf16.gmra.mrb[0].mxu0 %v2754
        %v2990 = vpop.f32.mrb[0].mxu0
        %v2991 = vadd.f32 %v2762, %v2990
        %v2992 = vpop.f32.mrb[0].mxu0
        %v2993 = vpop.f32.mrb[0].mxu0
        %v2994 = vadd.f32 %v2762, %v2993
        %v2995 = vpop.f32.mrb[0].mxu0
        %2996 = vdwg.mxu0
        %2997 = vmatprep.subr.bf16.mxu0 0
        %2998 = vmatpush1.bf16.msra.mxu0 %v2908
        %2999 = vmatprep.subr.bf16.mxu0 0
        %3000 = vmatpush1.bf16.msra.mxu0 %v2909
        %3001 = vmatprep.subr.bf16.mxu0 0
        %3002 = vmatpush1.bf16.msra.mxu0 %v2910
        %3003 = vmatprep.subr.bf16.mxu0 0
        %3004 = vmatpush1.bf16.msra.mxu0 %v2911
        %3005 = vmatprep.subr.bf16.mxu0 0
        %3006 = vmatpush1.bf16.msra.mxu0 %v2912
        %3007 = vmatprep.subr.bf16.mxu0 0
        %3008 = vmatpush1.bf16.msra.mxu0 %v2913
        %3009 = vmatprep.subr.bf16.mxu0 0
        %3010 = vmatpush1.bf16.msra.mxu0 %v2914
        %3011 = vmatprep.subr.bf16.mxu0 0
        %3012 = vmatpush1.bf16.msra.mxu0 %v2915
        %3013 = vmatprep.subr.bf16.mxu0 0
        %3014 = vmatpush1.bf16.msra.mxu0 %v2916
        %3015 = vmatprep.subr.bf16.mxu0 0
        %3016 = vmatpush1.bf16.msra.mxu0 %v2917
        %3017 = vmatprep.subr.bf16.mxu0 0
        %3018 = vmatpush1.bf16.msra.mxu0 %v2918
        %3019 = vmatprep.subr.bf16.mxu0 0
        %3020 = vmatpush1.bf16.msra.mxu0 %v2919
        %3021 = vmatprep.subr.bf16.mxu0 0
        %3022 = vmatpush1.bf16.msra.mxu0 %v2920
        %3023 = vmatprep.subr.bf16.mxu0 0
        %3024 = vmatpush1.bf16.msra.mxu0 %v2921
        %3025 = vmatprep.subr.bf16.mxu0 0
        %3026 = vmatpush1.bf16.msra.mxu0 %v2922
        %3027 = vmatprep.subr.bf16.mxu0 0
        %3028 = vmatpush1.bf16.msra.mxu0 %v2923
        %3029 = vmatprep.mubr.bf16.mxu0 %v2757
        %3030 = vmatmul.mubr.bf16.gmra.mrb[0].mxu0 %v2756
        %v3031 = vpop.f32.mrb[0].mxu0
        %v3032 = vadd.f32 %v2991, %v3031
        %v3033 = vpop.f32.mrb[0].mxu0
        %v3034 = vpop.f32.mrb[0].mxu0
        %v3035 = vadd.f32 %v2994, %v3034
        %v3036 = vpop.f32.mrb[0].mxu0
        %3037 = vdwg.mxu0
        %v3038 = vadd.f32 %v2282, %v3032
        %v3039 = vadd.f32 %v2283, %v3035
        %3040 = vst [vmem:[#allocation2] sm:$0xff] %v3038
        %3041 = vst [vmem:[#allocation2 + $0x8] sm:$0xff] %v3039
        %p3042 = scmp.eq.s32.totalorder %s38, 1
        // Predicated region
        $region165: #{text_encoder_pallas.1} parent=87 // pred_check
          %p3043 = pneg %p3042
        $region166: #{text_encoder_pallas.1} parent=87 // pred_check_branch
          %3045 = sbr.rel (%p3043) target = $region168
        $region167: #{text_encoder_pallas.1} parent=87 // pred_region
          %v3046 = vld [vmem:[#allocation4] sm:$0xff]
          %v3047 = vld [vmem:[#allocation4 + $0x8] sm:$0xff]
          %3049 = vset.pattern.permute.xlu0 0
          %3050 = vperm.xlu0 %3049, %v3046
          %v3051 = vpop.permute.xlu0 %3050
          %3054 = vset.pattern.permute.xlu0 0
          %3055 = vperm.xlu0 %3054, %v3047
          %v3056 = vpop.permute.xlu0 %3055
          %v3058 = vmul.f32 %v3051, %v3038
          %v3059 = vmul.f32 %v3056, %v3039
          %v3060 = vrot.slane %v3058, 4
          %v3061 = vadd.f32 %v3058, %v3060
          %v3062 = vrot.slane %v3061, 2
          %v3063 = vadd.f32 %v3061, %v3062
          %v3064 = vrot.slane %v3063, 1
          %v3065 = vadd.f32 %v3063, %v3064
          %v3066 = vrot.slane %v3059, 4
          %v3067 = vadd.f32 %v3059, %v3066
          %v3068 = vrot.slane %v3067, 2
          %v3069 = vadd.f32 %v3067, %v3068
          %v3070 = vrot.slane %v3069, 1
          %v3071 = vadd.f32 %v3069, %v3070
          %v3072 = vld [vmem:[#allocation21] sm:$0x1]
          %v3073 = vld [vmem:[#allocation22] sm:$0x1]
          %vm3076 = vcmask 1041409
          %v3077 = vsel %vm3076, %v3071, %v3065
          %vm3079 = vcmask 1041408
          %v3080 = vsel %vm3079, %v3077, 0.0
          %3081 = vadd.xlane.f32.xlu0 %v3080
          %v3082 = vpop.xlane.xlu0 %3081
          %v3083 = vmul.f32 %v3082, %v1045
          %v3085 = vrot.slane %v3083, 1
          %v3088 = vsub.f32 %v3065, %v3083
          %v3089 = vsub.f32 %v3071, %v3085
          %v3090 = vmul.f32 %v3088, %v3088
          %v3091 = vmul.f32 %v3089, %v3089
          %v3094 = vrot.slane %v3091, 7
          %v3095 = vsel %vm3076, %v3094, %v3090
          %v3097 = vsel %vm3079, %v3095, 0.0
          %3098 = vadd.xlane.f32.xlu0 %v3097
          %v3099 = vpop.xlane.xlu0 %3098
          %v3100 = vmul.f32 %v3099, %v1045
          %v3101 = vadd.f32 %v3100, 1e-05
          %v3102 = vrsqrt.pop %v3101
          %v3104 = vrot.slane %v3102, 1
          %v3107 = vmul.f32 %v3088, %v3102
          %v3108 = vmul.f32 %v3089, %v3104
          %v3110 = vlaneseq
          %v3111 = vshrl.u32 %v3110, 7
          %v3112 = vsub.s32 0, %v3111
          %v3113 = vrot.slane %v3072, %v3112
          %v3115 = vmul.f32 %v3107, %v3113
          %v3116 = vmul.f32 %v3108, %v3113
          %v3118 = vlaneseq
          %v3119 = vshrl.u32 %v3118, 7
          %v3120 = vsub.s32 0, %v3119
          %v3121 = vrot.slane %v3073, %v3120
          %v3123 = vadd.f32 %v3115, %v3121
          %v3124 = vadd.f32 %v3116, %v3121
          %v3125 = vpack.c.bf16 %v3123, %v3123
          %v3126 = vpack.c.bf16 %v3124, %v3124
          %v3127 = vld [vmem:[#allocation24] sm:$0xf]
          %v3128 = vld [vmem:[#allocation24 + $0x4] sm:$0xf]
          %v3129 = vld [vmem:[#allocation24 + $0x8] sm:$0xf]
          %v3130 = vld [vmem:[#allocation24 + $0xc] sm:$0xf]
          %v3131 = vld [vmem:[#allocation24 + $0x10] sm:$0xf]
          %v3132 = vld [vmem:[#allocation24 + $0x14] sm:$0xf]
          %v3133 = vld [vmem:[#allocation24 + $0x18] sm:$0xf]
          %v3134 = vld [vmem:[#allocation24 + $0x1c] sm:$0xf]
          %v3135 = vld [vmem:[#allocation24 + $0x20] sm:$0xf]
          %v3136 = vld [vmem:[#allocation24 + $0x24] sm:$0xf]
          %v3137 = vld [vmem:[#allocation24 + $0x28] sm:$0xf]
          %v3138 = vld [vmem:[#allocation24 + $0x2c] sm:$0xf]
          %v3139 = vld [vmem:[#allocation24 + $0x30] sm:$0xf]
          %v3140 = vld [vmem:[#allocation24 + $0x34] sm:$0xf]
          %v3141 = vld [vmem:[#allocation24 + $0x38] sm:$0xf]
          %v3142 = vld [vmem:[#allocation24 + $0x3c] sm:$0xf]
          %v3145 = vunpack.c.l.b16 %v3125
          %v3146 = vunpack.c.l.b16 %v3126
          %v3147 = vrot.slane %v3146, 7
          %v3148 = vsel %vm3076, %v3147, %v3145
          %v3149 = vpack.c.b16 %v3148, %v3148
          %v3167 = vunpack.c.l.b16 %v3127
          %v3168 = vunpack.c.l.b16 %v3128
          %v3169 = vunpack.c.l.b16 %v3129
          %v3170 = vunpack.c.l.b16 %v3130
          %v3171 = vunpack.c.l.b16 %v3131
          %v3172 = vunpack.c.l.b16 %v3132
          %v3173 = vunpack.c.l.b16 %v3133
          %v3174 = vunpack.c.l.b16 %v3134
          %v3175 = vunpack.c.l.b16 %v3135
          %v3176 = vunpack.c.l.b16 %v3136
          %v3177 = vunpack.c.l.b16 %v3137
          %v3178 = vunpack.c.l.b16 %v3138
          %v3179 = vunpack.c.l.b16 %v3139
          %v3180 = vunpack.c.l.b16 %v3140
          %v3181 = vunpack.c.l.b16 %v3141
          %v3182 = vunpack.c.l.b16 %v3142
          %v3183 = vpack.c.b16 %v3168, %v3167
          %v3184 = vpack.c.b16 %v3170, %v3169
          %v3185 = vpack.c.b16 %v3172, %v3171
          %v3186 = vpack.c.b16 %v3174, %v3173
          %v3187 = vpack.c.b16 %v3176, %v3175
          %v3188 = vpack.c.b16 %v3178, %v3177
          %v3189 = vpack.c.b16 %v3180, %v3179
          %v3190 = vpack.c.b16 %v3182, %v3181
          %3199 = vmatprep.subr.bf16.mxu0 0
          %3200 = vmatpush1.bf16.msra.mxu0 %v3183
          %3201 = vmatprep.subr.bf16.mxu0 0
          %3202 = vmatpush1.bf16.msra.mxu0 %v3184
          %3203 = vmatprep.subr.bf16.mxu0 0
          %3204 = vmatpush1.bf16.msra.mxu0 %v3185
          %3205 = vmatprep.subr.bf16.mxu0 0
          %3206 = vmatpush1.bf16.msra.mxu0 %v3186
          %3207 = vmatprep.subr.bf16.mxu0 0
          %3208 = vmatpush1.bf16.msra.mxu0 %v3187
          %3209 = vmatprep.subr.bf16.mxu0 0
          %3210 = vmatpush1.bf16.msra.mxu0 %v3188
          %3211 = vmatprep.subr.bf16.mxu0 0
          %3212 = vmatpush1.bf16.msra.mxu0 %v3189
          %3213 = vmatprep.subr.bf16.mxu0 0
          %3214 = vmatpush1.bf16.msra.mxu0 %v3190
          %3215 = vmatprep.subr.bf16.mxu0 0
          %3216 = vmatpush1.bf16.msra.mxu0 0
          %3217 = vmatprep.subr.bf16.mxu0 0
          %3218 = vmatpush1.bf16.msra.mxu0 0
          %3219 = vmatprep.subr.bf16.mxu0 0
          %3220 = vmatpush1.bf16.msra.mxu0 0
          %3221 = vmatprep.subr.bf16.mxu0 0
          %3222 = vmatpush1.bf16.msra.mxu0 0
          %3223 = vmatprep.subr.bf16.mxu0 0
          %3224 = vmatpush1.bf16.msra.mxu0 0
          %3225 = vmatprep.subr.bf16.mxu0 0
          %3226 = vmatpush1.bf16.msra.mxu0 0
          %3227 = vmatprep.subr.bf16.mxu0 0
          %3228 = vmatpush1.bf16.msra.mxu0 0
          %3229 = vmatprep.subr.bf16.mxu0 0
          %3230 = vmatpush1.bf16.msra.mxu0 0
          %3231 = vmatprep.mubr.bf16.mxu0 0
          %3232 = vmatmul.mubr.bf16.gmra.mrb[0].mxu0 %v3149
          %v3233 = vpop.f32.mrb[0].mxu0
          %v3234 = vadd.f32 0.0, %v3233
          %v3235 = vpop.f32.mrb[0].mxu0
          %v3236 = vpop.f32.mrb[0].mxu0
          %v3237 = vpop.f32.mrb[0].mxu0
          %3238 = vdwg.mxu0
          %3239 = vst [vmem:[#allocation25] sm:$0x3] %v3234
        $region168: #{text_encoder_pallas.1} parent=87 // pred_fallthru
          _
        // Predicated region
        $region169: #{text_encoder_pallas.1} parent=87 // pred_check
          %p3240 = pneg %p485
        $region170: #{text_encoder_pallas.1} parent=87 // pred_check_branch
          %3242 = sbr.rel (%p3240) target = $region172
        $region171: #{text_encoder_pallas.1} parent=87 // pred_region
          %s3244 = ssub.s32 32, 32
          %3245 = vsyncadd [#allocation6], %s3244
          %s3246 = smul.addr %s37, 32
          %s3247 = scalar_lea.hbm %s18, %s3246
          %s3249 = sshll.u32 [#allocation25], 4
          %s3250 = int_to_ptr.vmem [resolvable:$true] %s3249
          %3252 = dma.vmem_to_hbm [thread:$0]  %s3250, 32, %s3247, [#allocation6]
        $region172: #{text_encoder_pallas.1} parent=87 // pred_fallthru
          _
        // Predicated region
        $region173: #{text_encoder_pallas.1} parent=87 // pred_check
          %p3253 = pneg %p485
        $region174: #{text_encoder_pallas.1} parent=87 // pred_check_branch
          %3255 = sbr.rel (%p3253) target = $region176
        $region175: #{text_encoder_pallas.1} parent=87 // pred_region
          %3256 = dma.done [#allocation6], 32
        $region176: #{text_encoder_pallas.1} parent=87 // pred_fallthru
          _
      $region88: #{text_encoder_pallas.1} parent=5 // pred_fallthru
        _
      %p3257 = scmp.le.s32.totalorder 2, %s28
      // Predicated region
      $region177: #{text_encoder_pallas.1} parent=5 // pred_check
        %p3258 = pneg %p3257
      $region178: #{text_encoder_pallas.1} parent=5 // pred_check_branch
        %3260 = sbr.rel (%p3258) target = $region180
      $region179: #{text_encoder_pallas.1} parent=5 // pred_region
        %s3261 = ssub.s32 %s28, 2
      $region180: #{text_encoder_pallas.1} parent=5 // pred_fallthru
        _
    $region6: #{text_encoder_pallas.1} parent=1 // loop_footer
      %s32 = sadd.s32 1, %s28
    $region7: #{text_encoder_pallas.1} parent=1 // loop_footer_branch
      %27 = sbr.rel target = $region3
    $region8: #{text_encoder_pallas.1} parent=1 // loop_exit
      _
    %3262 = vsyncpa [#allocation5], 1
    %s3263 = scalar_lea.sflag [#allocation5], 1
    %3264 = vsyncpa %s3263, 1
    %3265 = vsyncpa [#allocation8], 1
    %3266 = vsyncpa [#allocation23], 1
    %3267 = vsyncpa [#allocation6], 1
    %s3268 = scalar_lea.sflag [#allocation6], 1
    %3269 = vsyncpa %s3268, 1
  %3270 = vsyncmov [#allocation3]
  %s3271 = vpop.sfrf %3270
  %p3272 = scmp.eq.s32.totalorder %s3271, 0
  %p3273 = pneg %p3272
  %3275 = shalt.err (%p3273)

</llo_original>
